<compile_context>
chip_gen: v7x
topology: tpu7x:2x2x1
jax: 0.10.0
libtpu: 0.0.40
codegen_flags: <defaults>
</compile_context>

<pallas_src>
import jax
import jax.numpy as jnp
from jax.experimental import pallas as pl
from jax.experimental.pallas import tpu as pltpu

# ---------------- config (small, consistent with the module) ----------------
CIN = 3            # input image channels
H = W = 16         # spatial
HW = H * W
NF = 32            # encoder feature dim ("nf")
L = 256            # attention hidden dim (Linear_Classifier default L=256)
HID = 512          # hidden dim of projector / ins_classifier
FEAT_DIM = 32      # projector output dim (module default 128, kept small here)
NUM_CLASSES = 1
K_RAW = 9 * CIN    # im2col contraction dim = 27
K_PAD = 32         # padded to a clean sublane multiple

TM = 8             # instances per grid step in the fused kernel (TM*HW=2048 rows/tile)
MAX_BAG = 128      # static cap on instances per bag (keeps aggregator shapes static)

# packed output slab layout (lane-dense width 128)
OUT_W = 128
COL_INS = 0                       # instance prediction (sigmoid)
COL_PROJ = 1                      # cols [1, 1+FEAT_DIM): normalized projection
COL_SCORE = COL_PROJ + FEAT_DIM   # raw gated-attention score (pre-sigmoid)
COL_SIG = COL_SCORE + 1           # sigmoid(raw attention score)

W1_N = 2 * HID + 2 * L            # 1536: fused first-layer output width
W2_K = 2 * HID + L                # 1280: fused second-layer contraction dim

VMEM_LIMIT = 32 * 1024 * 1024


# ----------------------------- Pallas kernels --------------------------------
def _fused_forward_kernel(p_ref, cw_ref, cb_ref, pm_ref,
                          w1_ref, b1_ref, w2_ref, b2_ref, o_ref):
    """Per instance-tile: encoder conv + pool + all instance-wise heads.

    p_ref : (TM*HW, K_PAD)  bf16  im2col patches for TM instances
    cw_ref: (K_PAD, NF)     bf16  conv weight (resident)
    cb_ref: (1, NF)         f32   conv bias
    pm_ref: (TM, TM*HW)     bf16  constant block-diagonal 1/HW pooling matrix
    w1_ref: (NF, 1536)      bf16  [ins_w1 | proj_w1 | att_v_w | att_u_w]
    b1_ref: (1, 1536)       f32
    w2_ref: (1280, 128)     bf16  [ins_w2 ; proj_w2 ; att_w_w] block matrix
    b2_ref: (1, 128)        f32
    o_ref : (TM, 128)       f32   packed output slab tile
    """
    # encoder stand-in: 3x3 conv as im2col matmul + ReLU
    y = jnp.dot(p_ref[...], cw_ref[...], preferred_element_type=jnp.float32)
    y = jnp.maximum(y + cb_ref[...], 0.0)                             # (TM*HW, NF)
    # AdaptiveAvgPool2d((1,1)) as one MXU dot with a tile-local constant matrix
    feat = jnp.dot(pm_ref[...], y.astype(jnp.bfloat16),
                   preferred_element_type=jnp.float32)                # (TM, NF)

    # fused first layers of all heads: one (TM,32)@(32,1536) MXU pass
    h = jnp.dot(feat.astype(jnp.bfloat16), w1_ref[...],
                preferred_element_type=jnp.float32) + b1_ref[...]     # (TM, 1536)
    hh = jnp.maximum(h[:, :2 * HID], 0.0)                             # ReLU hidden
    a_v = jnp.tanh(h[:, 2 * HID:2 * HID + L])                         # attention V
    a_u = jax.nn.sigmoid(h[:, 2 * HID + L:])                          # attention U
    g = a_v * a_u                                                     # (TM, L)

    # single fused second-layer contraction (K=1280) into the 128-wide slab
    hg = jnp.concatenate([hh, g], axis=1).astype(jnp.bfloat16)        # (TM, 1280)
    z = jnp.dot(hg, w2_ref[...],
                preferred_element_type=jnp.float32) + b2_ref[...]     # (TM, 128)

    col = jax.lax.broadcasted_iota(jnp.int32, z.shape, 1)
    is_sigm = (col == COL_INS) | (col == COL_SIG)
    is_proj = (col >= COL_PROJ) & (col < COL_PROJ + FEAT_DIM)
    # F.normalize(dim=1) over the projection columns only
    sq = jnp.sum(jnp.where(is_proj, z * z, 0.0), axis=1, keepdims=True)
    inv_norm = jax.lax.rsqrt(jnp.maximum(sq, 1e-24))
    o_ref[...] = jnp.where(is_sigm, jax.nn.sigmoid(z),
                           jnp.where(is_proj, z * inv_norm, z))


def _aggregator_kernel(offs_ref, lens_ref, slab_ref, bag_ref):
    """Gated-attention MIL pooling for one bag (masked softmax over its rows).

    offs_ref: (B,)              int32 SMEM  bag start row
    lens_ref: (B,)              int32 SMEM  instances per bag
    slab_ref: (ROWS_PAD, 128)   f32   VMEM  resident packed slab
    bag_ref : (1, 1, 128)       f32         bag prediction broadcast across lanes
    """
    b = pl.program_id(0)
    off = offs_ref[b]
    n = lens_ref[b]
    rows = slab_ref[pl.ds(off, MAX_BAG), :]                           # (MAX_BAG, 128)
    col = jax.lax.broadcasted_iota(jnp.int32, rows.shape, 1)
    s = jnp.sum(jnp.where(col == COL_SCORE, rows, 0.0),
                axis=1, keepdims=True)                                # (MAX_BAG, 1)
    y = jnp.sum(jnp.where(col == COL_INS, rows, 0.0),
                axis=1, keepdims=True)                                # (MAX_BAG, 1)
    valid = jax.lax.broadcasted_iota(jnp.int32, s.shape, 0) < n
    s_m = jnp.where(valid, s, jnp.float32(-1e30))
    m = jnp.max(s_m, axis=0, keepdims=True)
    e = jnp.where(valid, jnp.exp(s_m - m), 0.0)
    denom = jnp.maximum(jnp.sum(e, axis=0, keepdims=True), 1e-30)
    a = e / denom                                                     # exact softmax
    bag = jnp.sum(a * y, axis=0, keepdims=True)                       # (1, 1) = A @ y_hat
    bag_ref[...] = jnp.broadcast_to(bag, bag_ref.shape)


# ------------------------------ wrappers --------------------------------------
def _im2col_3x3(x_nhwc):
    """(N,H,W,C) -> (N, H*W, 9*C) with zero padding=1, stride=1."""
    n, h, w, c = x_nhwc.shape
    xp = jnp.pad(x_nhwc, ((0, 0), (1, 1), (1, 1), (0, 0)))
    cols = [xp[:, dh:dh + h, dw:dw + w, :] for dh in range(3) for dw in range(3)]
    patches = jnp.concatenate(cols, axis=-1)          # (N, H, W, 9*C)
    return patches.reshape(n, h * w, 9 * c)


def _fused_forward(images_nchw, params):
    """Encoder + all instance-wise heads, gridded over instance tiles."""
    n = images_nchw.shape[0]
    n_pad = ((n + TM - 1) // TM) * TM
    if n_pad != n:
        images_nchw = jnp.pad(images_nchw,
                              ((0, n_pad - n), (0, 0), (0, 0), (0, 0)))
    x = jnp.transpose(images_nchw, (0, 2, 3, 1))       # NCHW -> NHWC
    patches = _im2col_3x3(x).reshape(n_pad * HW, K_RAW)
    patches = jnp.pad(patches, ((0, 0), (0, K_PAD - K_RAW))).astype(jnp.bfloat16)
    # tile-local block-diagonal pooling matrix: pm[i, j] = 1/HW iff j // HW == i
    pool_m = (jnp.repeat(jnp.eye(TM, dtype=jnp.float32), HW, axis=1)
              / float(HW)).astype(jnp.bfloat16)        # (TM, TM*HW), constant

    slab = pl.pallas_call(
        _fused_forward_kernel,
        out_shape=jax.ShapeDtypeStruct((n_pad, OUT_W), jnp.float32),
        grid_spec=pltpu.PrefetchScalarGridSpec(
            num_scalar_prefetch=0,
            grid=(n_pad // TM,),
            in_specs=[
                pl.BlockSpec((TM * HW, K_PAD), lambda i: (i, 0)),   # patch stream
                pl.BlockSpec((K_PAD, NF), lambda i: (0, 0)),        # resident weights
                pl.BlockSpec((1, NF), lambda i: (0, 0)),
                pl.BlockSpec((TM, TM * HW), lambda i: (0, 0)),
                pl.BlockSpec((NF, W1_N), lambda i: (0, 0)),
                pl.BlockSpec((1, W1_N), lambda i: (0, 0)),
                pl.BlockSpec((W2_K, OUT_W), lambda i: (0, 0)),
                pl.BlockSpec((1, OUT_W), lambda i: (0, 0)),
            ],
            out_specs=pl.BlockSpec((TM, OUT_W), lambda i: (i, 0)),
        ),
        compiler_params=pltpu.CompilerParams(
            dimension_semantics=("parallel",),
            vmem_limit_bytes=VMEM_LIMIT),
    )(patches, params['conv_w'], params['conv_b'], pool_m,
      params['w1_all'], params['b1_all'], params['w2_all'], params['b2_all'])
    return slab                                          # (n_pad, 128)


def aggregate_bags(slab, split_sizes):
    """All bags in one pallas_call with SMEM-prefetched offsets/lengths."""
    num_bags = len(split_sizes)
    assert num_bags >= 1
    assert all(1 <= s <= MAX_BAG for s in split_sizes)
    # pad rows so the fixed-size MAX_BAG window never reads out of bounds
    slab_p = jnp.pad(slab, ((0, MAX_BAG), (0, 0)))
    rows_pad = slab_p.shape[0]

    offs, start = [], 0
    for s in split_sizes:
        offs.append(start)
        start += s
    offs = jnp.asarray(offs, jnp.int32)
    lens = jnp.asarray(split_sizes, jnp.int32)

    bag_slab = pl.pallas_call(
        _aggregator_kernel,
        out_shape=jax.ShapeDtypeStruct((num_bags, 1, OUT_W), jnp.float32),
        grid_spec=pltpu.PrefetchScalarGridSpec(
            num_scalar_prefetch=2,
            grid=(num_bags,),
            in_specs=[pl.BlockSpec((rows_pad, OUT_W),
                                   lambda b, offs, lens: (0, 0))],    # resident slab
            out_specs=pl.BlockSpec((1, 1, OUT_W),
                                   lambda b, offs, lens: (b, 0, 0)),
        ),
        compiler_params=pltpu.CompilerParams(
            dimension_semantics=("arbitrary",),
            vmem_limit_bytes=VMEM_LIMIT),
    )(offs, lens, slab_p)

    return bag_slab[:, 0, :NUM_CLASSES]                               # (B, C)


def embedding_model_forward(params, inp, projector_on=False, pred_on=False):
    """Mirrors Embeddingmodel.forward (eval mode)."""
    if pred_on:
        all_images = jnp.concatenate(inp, axis=0)
    else:
        all_images = inp
    n = all_images.shape[0]

    slab = _fused_forward(all_images, params)                         # (n_pad, 128)
    instance_predictions = slab[:n, COL_INS]                          # (N,) sigmoid

    bag_pred = None
    bag_instance_predictions = None
    if pred_on:
        split_sizes = [int(b.shape[0]) for b in inp]
        bag_pred = aggregate_bags(slab, split_sizes)                  # (B, C)
        bag_instance_predictions = []
        start = 0
        for s in split_sizes:
            bag_instance_predictions.append(slab[start:start + s, COL_SIG])
            start += s

    proj = slab[:n, COL_PROJ:COL_PROJ + FEAT_DIM] if projector_on else None

    return bag_pred, bag_instance_predictions, instance_predictions, proj


# ---------------------------- parameter init ----------------------------------
def init_params(key):
    ks = jax.random.split(key, 9)

    def linear(k, fin, fout):
        bound = float(1.0 / (fin ** 0.5))
        kw, kb = jax.random.split(k)
        w = jax.random.uniform(kw, (fin, fout), jnp.float32, -bound, bound)
        b = jax.random.uniform(kb, (1, fout), jnp.float32, -bound, bound)
        return w, b

    # encoder stand-in conv weight (kh, kw, Cin, NF) -> matches im2col order
    wconv = jax.random.normal(ks[0], (3, 3, CIN, NF), jnp.float32) * 0.1
    conv_w = wconv.reshape(K_RAW, NF)
    conv_w = jnp.pad(conv_w, ((0, K_PAD - K_RAW), (0, 0)))   # K padded 27 -> 32
    conv_b = jnp.zeros((1, NF), jnp.float32)

    ins_w1, ins_b1 = linear(ks[1], NF, HID)
    ins_w2, ins_b2 = linear(ks[2], HID, NUM_CLASSES)
    proj_w1, proj_b1 = linear(ks[3], NF, HID)
    proj_w2, proj_b2 = linear(ks[4], HID, FEAT_DIM)
    att_v_w, att_v_b = linear(ks[5], NF, L)
    att_u_w, att_u_b = linear(ks[6], NF, L)
    att_w_w, att_w_b = linear(ks[7], L, 1)
    # NOTE: Linear_Classifier.fc exists in __init__ but is unused in forward; omitted.

    # fuse first-layer weights of all heads: (NF, 2*HID + 2*L)
    w1_all = jnp.concatenate([ins_w1, proj_w1, att_v_w, att_u_w], axis=1)
    b1_all = jnp.concatenate([ins_b1, proj_b1, att_v_b, att_u_b], axis=1)

    # fused second-layer block matrix (2*HID + L, 128) writing the packed slab
    w2_all = jnp.zeros((W2_K, OUT_W), jnp.float32)
    w2_all = w2_all.at[:HID, COL_INS:COL_INS + NUM_CLASSES].set(ins_w2)
    w2_all = w2_all.at[HID:2 * HID, COL_PROJ:COL_PROJ + FEAT_DIM].set(proj_w2)
    w2_all = w2_all.at[2 * HID:, COL_SCORE:COL_SCORE + 1].set(att_w_w)
    w2_all = w2_all.at[2 * HID:, COL_SIG:COL_SIG + 1].set(att_w_w)   # dup -> sigmoid col
    b2_all = jnp.zeros((1, OUT_W), jnp.float32)
    b2_all = b2_all.at[:, COL_INS:COL_INS + NUM_CLASSES].set(ins_b2)
    b2_all = b2_all.at[:, COL_PROJ:COL_PROJ + FEAT_DIM].set(proj_b2)
    b2_all = b2_all.at[:, COL_SCORE:COL_SCORE + 1].set(att_w_b)
    b2_all = b2_all.at[:, COL_SIG:COL_SIG + 1].set(att_w_b)

    return {
        'conv_w': conv_w.astype(jnp.bfloat16),
        'conv_b': conv_b,
        'w1_all': w1_all.astype(jnp.bfloat16),
        'b1_all': b1_all,
        'w2_all': w2_all.astype(jnp.bfloat16),
        'b2_all': b2_all,
    }


# --------------------------------- main ---------------------------------------
if __name__ == "__main__":
    key = jax.random.PRNGKey(0)
    k1, k2, kp = jax.random.split(key, 3)
    # two bags of NCHW images (pred_on=True path), total N=8 instances
    bag_a = jax.random.normal(k1, (3, CIN, H, W), jnp.float32)
    bag_b = jax.random.normal(k2, (5, CIN, H, W), jnp.float32)
    params = init_params(kp)

    bag_pred, bag_ins_preds, inst_preds, proj = embedding_model_forward(
        params, [bag_a, bag_b], projector_on=True, pred_on=True)

    jax.block_until_ready((bag_pred, bag_ins_preds, inst_preds, proj))

    assert bag_pred.shape == (2, NUM_CLASSES)
    assert bag_ins_preds[0].shape == (3,) and bag_ins_preds[1].shape == (5,)
    assert inst_preds.shape == (8,)
    assert proj.shape == (8, FEAT_DIM)
    assert bool(jnp.all(jnp.isfinite(bag_pred)))
    assert bool(jnp.all((inst_preds >= 0.0) & (inst_preds <= 1.0)))
    assert bool(jnp.all((bag_pred >= -1e-6) & (bag_pred <= 1.0 + 1e-6)))
    print("KERNEL_OK")
</pallas_src>

<mosaic_0001>
module attributes {stable_mosaic.version = 11 : i64} {
  func.func @_fused_forward_kernel(%arg0: i32, %arg1: memref<2048x32xbf16, #tpu.memory_space<vmem>>, %arg2: memref<32x32xbf16, #tpu.memory_space<vmem>>, %arg3: memref<1x32xf32, #tpu.memory_space<vmem>>, %arg4: memref<8x2048xbf16, #tpu.memory_space<vmem>>, %arg5: memref<32x1536xbf16, #tpu.memory_space<vmem>>, %arg6: memref<1x1536xf32, #tpu.memory_space<vmem>>, %arg7: memref<1280x128xbf16, #tpu.memory_space<vmem>>, %arg8: memref<1x128xf32, #tpu.memory_space<vmem>>, %arg9: memref<8x128xf32, #tpu.memory_space<vmem>>) attributes {dimension_semantics = [#tpu.dimension_semantics<parallel>], iteration_bounds = array<i64: 1>, scalar_prefetch = 0 : i64, scratch_operands = 0 : i64, tpu.core_type = #tpu.core_type<tc>, window_params = [{transform_indices = @transform_0, window_bounds = array<i64: 2048, 32>}, {pipeline_mode = #tpu.pipeline_mode<synchronous>, transform_indices = @transform_1, window_bounds = array<i64: 32, 32>}, {pipeline_mode = #tpu.pipeline_mode<synchronous>, transform_indices = @transform_2, window_bounds = array<i64: 1, 32>}, {pipeline_mode = #tpu.pipeline_mode<synchronous>, transform_indices = @transform_3, window_bounds = array<i64: 8, 2048>}, {pipeline_mode = #tpu.pipeline_mode<synchronous>, transform_indices = @transform_4, window_bounds = array<i64: 32, 1536>}, {pipeline_mode = #tpu.pipeline_mode<synchronous>, transform_indices = @transform_5, window_bounds = array<i64: 1, 1536>}, {pipeline_mode = #tpu.pipeline_mode<synchronous>, transform_indices = @transform_6, window_bounds = array<i64: 1280, 128>}, {pipeline_mode = #tpu.pipeline_mode<synchronous>, transform_indices = @transform_7, window_bounds = array<i64: 1, 128>}, {transform_indices = @transform_8, window_bounds = array<i64: 8, 128>}]} {
    %c0 = arith.constant 0 : index
    %c0_0 = arith.constant 0 : index
    %0 = vector.load %arg1[%c0, %c0_0] : memref<2048x32xbf16, #tpu.memory_space<vmem>>, vector<2048x32xbf16>
    %c0_1 = arith.constant 0 : index
    %c0_2 = arith.constant 0 : index
    %1 = vector.load %arg2[%c0_1, %c0_2] : memref<32x32xbf16, #tpu.memory_space<vmem>>, vector<32x32xbf16>
    %cst = arith.constant dense<0.000000e+00> : vector<2048x32xf32>
    %2 = tpu.matmul %0, %1, %cst {dimension_numbers = #tpu.dot_dimension_numbers<[1], [0], [0], [1], [0, 0, 1, 1], [], []>} : vector<2048x32xbf16>, vector<32x32xbf16>, vector<2048x32xf32> -> vector<2048x32xf32>
    %c0_3 = arith.constant 0 : index
    %c0_4 = arith.constant 0 : index
    %3 = vector.load %arg3[%c0_3, %c0_4] : memref<1x32xf32, #tpu.memory_space<vmem>>, vector<1x32xf32>
    %4 = vector.broadcast %3 : vector<1x32xf32> to vector<2048x32xf32>
    %5 = arith.addf %2, %4 : vector<2048x32xf32>
    %cst_5 = arith.constant 0.000000e+00 : f32
    %6 = vector.broadcast %cst_5 : f32 to vector<2048x32xf32>
    %7 = arith.maximumf %5, %6 : vector<2048x32xf32>
    %c0_6 = arith.constant 0 : index
    %c0_7 = arith.constant 0 : index
    %8 = vector.load %arg4[%c0_6, %c0_7] : memref<8x2048xbf16, #tpu.memory_space<vmem>>, vector<8x2048xbf16>
    %9 = arith.truncf %7 : vector<2048x32xf32> to vector<2048x32xbf16>
    %cst_8 = arith.constant dense<0.000000e+00> : vector<8x32xf32>
    %10 = tpu.matmul %8, %9, %cst_8 {dimension_numbers = #tpu.dot_dimension_numbers<[1], [0], [0], [1], [0, 0, 1, 1], [], []>} : vector<8x2048xbf16>, vector<2048x32xbf16>, vector<8x32xf32> -> vector<8x32xf32>
    %11 = arith.truncf %10 : vector<8x32xf32> to vector<8x32xbf16>
    %c0_9 = arith.constant 0 : index
    %c0_10 = arith.constant 0 : index
    %12 = vector.load %arg5[%c0_9, %c0_10] : memref<32x1536xbf16, #tpu.memory_space<vmem>>, vector<32x1536xbf16>
    %cst_11 = arith.constant dense<0.000000e+00> : vector<8x1536xf32>
    %13 = tpu.matmul %11, %12, %cst_11 {dimension_numbers = #tpu.dot_dimension_numbers<[1], [0], [0], [1], [0, 0, 1, 1], [], []>} : vector<8x32xbf16>, vector<32x1536xbf16>, vector<8x1536xf32> -> vector<8x1536xf32>
    %c0_12 = arith.constant 0 : index
    %c0_13 = arith.constant 0 : index
    %14 = vector.load %arg6[%c0_12, %c0_13] : memref<1x1536xf32, #tpu.memory_space<vmem>>, vector<1x1536xf32>
    %15 = vector.broadcast %14 : vector<1x1536xf32> to vector<8x1536xf32>
    %16 = arith.addf %13, %15 : vector<8x1536xf32>
    %17 = vector.extract_strided_slice %16 {offsets = [0, 0], sizes = [8, 1024], strides = [1, 1]} : vector<8x1536xf32> to vector<8x1024xf32>
    %cst_14 = arith.constant 0.000000e+00 : f32
    %18 = vector.broadcast %cst_14 : f32 to vector<8x1024xf32>
    %19 = arith.maximumf %17, %18 : vector<8x1024xf32>
    %20 = vector.extract_strided_slice %16 {offsets = [0, 1024], sizes = [8, 256], strides = [1, 1]} : vector<8x1536xf32> to vector<8x256xf32>
    %21 = math.tanh %20 : vector<8x256xf32>
    %22 = vector.extract_strided_slice %16 {offsets = [0, 1280], sizes = [8, 256], strides = [1, 1]} : vector<8x1536xf32> to vector<8x256xf32>
    %23 = arith.negf %22 : vector<8x256xf32>
    %24 = math.exp %23 : vector<8x256xf32>
    %cst_15 = arith.constant 1.000000e+00 : f32
    %25 = vector.broadcast %cst_15 : f32 to vector<8x256xf32>
    %26 = arith.addf %25, %24 : vector<8x256xf32>
    %27 = arith.divf %25, %26 : vector<8x256xf32>
    %28 = arith.mulf %21, %27 : vector<8x256xf32>
    %29 = tpu.concatenate %19, %28 in 1 : vector<8x1024xf32>, vector<8x256xf32> -> vector<8x1280xf32>
    %30 = arith.truncf %29 : vector<8x1280xf32> to vector<8x1280xbf16>
    %c0_16 = arith.constant 0 : index
    %c0_17 = arith.constant 0 : index
    %31 = vector.load %arg7[%c0_16, %c0_17] : memref<1280x128xbf16, #tpu.memory_space<vmem>>, vector<1280x128xbf16>
    %cst_18 = arith.constant dense<0.000000e+00> : vector<8x128xf32>
    %32 = tpu.matmul %30, %31, %cst_18 {dimension_numbers = #tpu.dot_dimension_numbers<[1], [0], [0], [1], [0, 0, 1, 1], [], []>} : vector<8x1280xbf16>, vector<1280x128xbf16>, vector<8x128xf32> -> vector<8x128xf32>
    %c0_19 = arith.constant 0 : index
    %c0_20 = arith.constant 0 : index
    %33 = vector.load %arg8[%c0_19, %c0_20] : memref<1x128xf32, #tpu.memory_space<vmem>>, vector<1x128xf32>
    %34 = vector.broadcast %33 : vector<1x128xf32> to vector<8x128xf32>
    %35 = arith.addf %32, %34 : vector<8x128xf32>
    %36 = tpu.iota {dimensions = array<i32: 1>} : vector<8x128xi32>
    %c0_i32 = arith.constant 0 : i32
    %37 = vector.broadcast %c0_i32 : i32 to vector<8x128xi32>
    %38 = arith.cmpi eq, %36, %37 : vector<8x128xi32>
    %c34_i32 = arith.constant 34 : i32
    %39 = vector.broadcast %c34_i32 : i32 to vector<8x128xi32>
    %40 = arith.cmpi eq, %36, %39 : vector<8x128xi32>
    %41 = arith.ori %38, %40 : vector<8x128xi1>
    %c1_i32 = arith.constant 1 : i32
    %42 = vector.broadcast %c1_i32 : i32 to vector<8x128xi32>
    %43 = arith.cmpi sge, %36, %42 : vector<8x128xi32>
    %c33_i32 = arith.constant 33 : i32
    %44 = vector.broadcast %c33_i32 : i32 to vector<8x128xi32>
    %45 = arith.cmpi slt, %36, %44 : vector<8x128xi32>
    %46 = arith.andi %43, %45 : vector<8x128xi1>
    %47 = arith.mulf %35, %35 : vector<8x128xf32>
    %cst_21 = arith.constant 0.000000e+00 : f32
    %48 = vector.broadcast %cst_21 : f32 to vector<8x128xf32>
    %49 = arith.select %46, %47, %48 : vector<8x128xi1>, vector<8x128xf32>
    %cst_22 = arith.constant dense<0.000000e+00> : vector<8xf32>
    %50 = vector.multi_reduction <add>, %49, %cst_22 [1] : vector<8x128xf32> to vector<8xf32>
    %51 = vector.shape_cast %50 : vector<8xf32> to vector<8x1xf32>
    %cst_23 = arith.constant 1.000000e-24 : f32
    %52 = vector.broadcast %cst_23 : f32 to vector<8x1xf32>
    %53 = arith.maximumf %51, %52 : vector<8x1xf32>
    %54 = math.rsqrt %53 : vector<8x1xf32>
    %55 = arith.negf %35 : vector<8x128xf32>
    %56 = math.exp %55 : vector<8x128xf32>
    %cst_24 = arith.constant 1.000000e+00 : f32
    %57 = vector.broadcast %cst_24 : f32 to vector<8x128xf32>
    %58 = arith.addf %57, %56 : vector<8x128xf32>
    %59 = arith.divf %57, %58 : vector<8x128xf32>
    %60 = vector.broadcast %54 : vector<8x1xf32> to vector<8x128xf32>
    %61 = arith.mulf %35, %60 : vector<8x128xf32>
    %62 = arith.select %46, %61, %35 : vector<8x128xi1>, vector<8x128xf32>
    %63 = arith.select %41, %59, %62 : vector<8x128xi1>, vector<8x128xf32>
    %c0_25 = arith.constant 0 : index
    %c0_26 = arith.constant 0 : index
    %64 = vector.load %arg9[%c0_25, %c0_26] : memref<8x128xf32, #tpu.memory_space<vmem>>, vector<8x128xf32>
    tpu.vector_store %arg9[%c0_25, %c0_26], %63 {strides = array<i32>} : memref<8x128xf32, #tpu.memory_space<vmem>>, vector<8x128xf32>,
    return
  }
  func.func @transform_0(%arg0: i32) -> (i32, i32) {
    %c0_i32 = arith.constant 0 : i32
    %c0_i32_0 = arith.constant 0 : i32
    return %arg0, %c0_i32 : i32, i32
  }
  func.func @transform_1(%arg0: i32) -> (i32, i32) {
    %c0_i32 = arith.constant 0 : i32
    %c0_i32_0 = arith.constant 0 : i32
    %c0_i32_1 = arith.constant 0 : i32
    return %c0_i32, %c0_i32_0 : i32, i32
  }
  func.func @transform_2(%arg0: i32) -> (i32, i32) {
    %c0_i32 = arith.constant 0 : i32
    %c0_i32_0 = arith.constant 0 : i32
    %c0_i32_1 = arith.constant 0 : i32
    return %c0_i32, %c0_i32_0 : i32, i32
  }
  func.func @transform_3(%arg0: i32) -> (i32, i32) {
    %c0_i32 = arith.constant 0 : i32
    %c0_i32_0 = arith.constant 0 : i32
    %c0_i32_1 = arith.constant 0 : i32
    return %c0_i32, %c0_i32_0 : i32, i32
  }
  func.func @transform_4(%arg0: i32) -> (i32, i32) {
    %c0_i32 = arith.constant 0 : i32
    %c0_i32_0 = arith.constant 0 : i32
    %c0_i32_1 = arith.constant 0 : i32
    return %c0_i32, %c0_i32_0 : i32, i32
  }
  func.func @transform_5(%arg0: i32) -> (i32, i32) {
    %c0_i32 = arith.constant 0 : i32
    %c0_i32_0 = arith.constant 0 : i32
    %c0_i32_1 = arith.constant 0 : i32
    return %c0_i32, %c0_i32_0 : i32, i32
  }
  func.func @transform_6(%arg0: i32) -> (i32, i32) {
    %c0_i32 = arith.constant 0 : i32
    %c0_i32_0 = arith.constant 0 : i32
    %c0_i32_1 = arith.constant 0 : i32
    return %c0_i32, %c0_i32_0 : i32, i32
  }
  func.func @transform_7(%arg0: i32) -> (i32, i32) {
    %c0_i32 = arith.constant 0 : i32
    %c0_i32_0 = arith.constant 0 : i32
    %c0_i32_1 = arith.constant 0 : i32
    return %c0_i32, %c0_i32_0 : i32, i32
  }
  func.func @transform_8(%arg0: i32) -> (i32, i32) {
    %c0_i32 = arith.constant 0 : i32
    %c0_i32_0 = arith.constant 0 : i32
    return %arg0, %c0_i32 : i32, i32
  }
}

</mosaic_0001>

<llo_original>
// kernel: tpu_custom_call.1
$region0: #{tpu_custom_call.1}
  #allocation0 [shape = 'u32[]', space=smem, size = 0x4, offset = 0x4, fixed_abs, tag = 'smem constant byte address 0x4 - core index']
  #allocation1 [shape = 'u32[144,128]{1,0:T(1,128)}', space=vmem, size = 0x12000, scoped, tag = 'internal scratch']
  %s0 = inlined_call_operand.vmem [shape: bf16[2048,32], index: 0, kind: input, shape index: {}]
  %s1 = inlined_call_operand.vmem [shape: bf16[32,32], index: 1, kind: input, shape index: {}]
  %s2 = inlined_call_operand.vmem [shape: f32[1,32], index: 2, kind: input, shape index: {}]
  %s3 = inlined_call_operand.vmem [shape: bf16[8,2048], index: 3, kind: input, shape index: {}]
  %s4 = inlined_call_operand.vmem [shape: bf16[32,1536], index: 4, kind: input, shape index: {}]
  %s5 = inlined_call_operand.vmem [shape: f32[1,1536], index: 5, kind: input, shape index: {}]
  %s6 = inlined_call_operand.vmem [shape: bf16[1280,128], index: 6, kind: input, shape index: {}]
  %s7 = inlined_call_operand.vmem [shape: f32[1,128], index: 7, kind: input, shape index: {}]
  %s8 = inlined_call_operand.hbm [shape: f32[8,128], index: 8, kind: output, shape index: {}]
  %s9 = sld [smem:[#allocation0]]
  $region42: #{tpu_custom_call.1} parent=0
    _
  %s11 = ssub.s32 1, %s9
  %s12 = scalar_select 0, %s11, %s9
  $region1: #{tpu_custom_call.1} parent=0
    #allocation2 [shape = 'u8[4096]{0}', space=vmem, size = 0x1000, scoped, tag = 'output window, operand 0, single buffered']
    #allocation3 [shape = 's32[1]{0}', space=sflag, size = 0x4, scoped, tag = 'scoped memory for tpu_custom_call.1']
    %13 = vsyncpa [#allocation3], 0
    // Predicated region
    $region2: #{tpu_custom_call.1} parent=1 // pred_check
      _
    $region3: #{tpu_custom_call.1} parent=1 // pred_check_branch
      %15 = sbr.rel (0) target = $region5
    $region4: #{tpu_custom_call.1} parent=1 // pred_region
      _
    $region5: #{tpu_custom_call.1} parent=1 // pred_fallthru
      _
    // Predicated region
    $region6: #{tpu_custom_call.1} parent=1 // pred_check
      _
    $region7: #{tpu_custom_call.1} parent=1 // pred_check_branch
      %17 = sbr.rel (0) target = $region9
    $region8: #{tpu_custom_call.1} parent=1 // pred_region
      _
    $region9: #{tpu_custom_call.1} parent=1 // pred_fallthru
      _
    // Predicated region
    $region10: #{tpu_custom_call.1} parent=1 // pred_check
      _
    $region11: #{tpu_custom_call.1} parent=1 // pred_check_branch
      %19 = sbr.rel (0) target = $region13
    $region12: #{tpu_custom_call.1} parent=1 // pred_region
      _
    $region13: #{tpu_custom_call.1} parent=1 // pred_fallthru
      _
    // Predicated region
    $region14: #{tpu_custom_call.1} parent=1 // pred_check
      _
    $region15: #{tpu_custom_call.1} parent=1 // pred_check_branch
      %21 = sbr.rel (0) target = $region17
    $region16: #{tpu_custom_call.1} parent=1 // pred_region
      _
    $region17: #{tpu_custom_call.1} parent=1 // pred_fallthru
      _
    // Predicated region
    $region18: #{tpu_custom_call.1} parent=1 // pred_check
      _
    $region19: #{tpu_custom_call.1} parent=1 // pred_check_branch
      %23 = sbr.rel (0) target = $region21
    $region20: #{tpu_custom_call.1} parent=1 // pred_region
      _
    $region21: #{tpu_custom_call.1} parent=1 // pred_fallthru
      _
    // Predicated region
    $region22: #{tpu_custom_call.1} parent=1 // pred_check
      _
    $region23: #{tpu_custom_call.1} parent=1 // pred_check_branch
      %25 = sbr.rel (0) target = $region25
    $region24: #{tpu_custom_call.1} parent=1 // pred_region
      _
    $region25: #{tpu_custom_call.1} parent=1 // pred_fallthru
      _
    // Predicated region
    $region26: #{tpu_custom_call.1} parent=1 // pred_check
      _
    $region27: #{tpu_custom_call.1} parent=1 // pred_check_branch
      %27 = sbr.rel (0) target = $region29
    $region28: #{tpu_custom_call.1} parent=1 // pred_region
      _
    $region29: #{tpu_custom_call.1} parent=1 // pred_fallthru
      _
    // Predicated region
    $region30: #{tpu_custom_call.1} parent=1 // pred_check
      _
    $region31: #{tpu_custom_call.1} parent=1 // pred_check_branch
      %29 = sbr.rel (0) target = $region33
    $region32: #{tpu_custom_call.1} parent=1 // pred_region
      _
    $region33: #{tpu_custom_call.1} parent=1 // pred_fallthru
      _
    %v31 = vld [vmem:[%s0] sm:$0xf]
    %v32 = vld [vmem:[%s0 + $0x4] sm:$0xf]
    %v33 = vld [vmem:[%s0 + $0x8] sm:$0xf]
    %v34 = vld [vmem:[%s0 + $0xc] sm:$0xf]
    %v35 = vld [vmem:[%s0 + $0x10] sm:$0xf]
    %v36 = vld [vmem:[%s0 + $0x14] sm:$0xf]
    %v37 = vld [vmem:[%s0 + $0x18] sm:$0xf]
    %v38 = vld [vmem:[%s0 + $0x1c] sm:$0xf]
    %v39 = vld [vmem:[%s0 + $0x20] sm:$0xf]
    %v40 = vld [vmem:[%s0 + $0x24] sm:$0xf]
    %v41 = vld [vmem:[%s0 + $0x28] sm:$0xf]
    %v42 = vld [vmem:[%s0 + $0x2c] sm:$0xf]
    %v43 = vld [vmem:[%s0 + $0x30] sm:$0xf]
    %v44 = vld [vmem:[%s0 + $0x34] sm:$0xf]
    %v45 = vld [vmem:[%s0 + $0x38] sm:$0xf]
    %v46 = vld [vmem:[%s0 + $0x3c] sm:$0xf]
    %v47 = vld [vmem:[%s0 + $0x40] sm:$0xf]
    %v48 = vld [vmem:[%s0 + $0x44] sm:$0xf]
    %v49 = vld [vmem:[%s0 + $0x48] sm:$0xf]
    %v50 = vld [vmem:[%s0 + $0x4c] sm:$0xf]
    %v51 = vld [vmem:[%s0 + $0x50] sm:$0xf]
    %v52 = vld [vmem:[%s0 + $0x54] sm:$0xf]
    %v53 = vld [vmem:[%s0 + $0x58] sm:$0xf]
    %v54 = vld [vmem:[%s0 + $0x5c] sm:$0xf]
    %v55 = vld [vmem:[%s0 + $0x60] sm:$0xf]
    %v56 = vld [vmem:[%s0 + $0x64] sm:$0xf]
    %v57 = vld [vmem:[%s0 + $0x68] sm:$0xf]
    %v58 = vld [vmem:[%s0 + $0x6c] sm:$0xf]
    %v59 = vld [vmem:[%s0 + $0x70] sm:$0xf]
    %v60 = vld [vmem:[%s0 + $0x74] sm:$0xf]
    %v61 = vld [vmem:[%s0 + $0x78] sm:$0xf]
    %v62 = vld [vmem:[%s0 + $0x7c] sm:$0xf]
    %v63 = vld [vmem:[%s0 + $0x80] sm:$0xf]
    %v64 = vld [vmem:[%s0 + $0x84] sm:$0xf]
    %v65 = vld [vmem:[%s0 + $0x88] sm:$0xf]
    %v66 = vld [vmem:[%s0 + $0x8c] sm:$0xf]
    %v67 = vld [vmem:[%s0 + $0x90] sm:$0xf]
    %v68 = vld [vmem:[%s0 + $0x94] sm:$0xf]
    %v69 = vld [vmem:[%s0 + $0x98] sm:$0xf]
    %v70 = vld [vmem:[%s0 + $0x9c] sm:$0xf]
    %v71 = vld [vmem:[%s0 + $0xa0] sm:$0xf]
    %v72 = vld [vmem:[%s0 + $0xa4] sm:$0xf]
    %v73 = vld [vmem:[%s0 + $0xa8] sm:$0xf]
    %v74 = vld [vmem:[%s0 + $0xac] sm:$0xf]
    %v75 = vld [vmem:[%s0 + $0xb0] sm:$0xf]
    %v76 = vld [vmem:[%s0 + $0xb4] sm:$0xf]
    %v77 = vld [vmem:[%s0 + $0xb8] sm:$0xf]
    %v78 = vld [vmem:[%s0 + $0xbc] sm:$0xf]
    %v79 = vld [vmem:[%s0 + $0xc0] sm:$0xf]
    %v80 = vld [vmem:[%s0 + $0xc4] sm:$0xf]
    %v81 = vld [vmem:[%s0 + $0xc8] sm:$0xf]
    %v82 = vld [vmem:[%s0 + $0xcc] sm:$0xf]
    %v83 = vld [vmem:[%s0 + $0xd0] sm:$0xf]
    %v84 = vld [vmem:[%s0 + $0xd4] sm:$0xf]
    %v85 = vld [vmem:[%s0 + $0xd8] sm:$0xf]
    %v86 = vld [vmem:[%s0 + $0xdc] sm:$0xf]
    %v87 = vld [vmem:[%s0 + $0xe0] sm:$0xf]
    %v88 = vld [vmem:[%s0 + $0xe4] sm:$0xf]
    %v89 = vld [vmem:[%s0 + $0xe8] sm:$0xf]
    %v90 = vld [vmem:[%s0 + $0xec] sm:$0xf]
    %v91 = vld [vmem:[%s0 + $0xf0] sm:$0xf]
    %v92 = vld [vmem:[%s0 + $0xf4] sm:$0xf]
    %v93 = vld [vmem:[%s0 + $0xf8] sm:$0xf]
    %v94 = vld [vmem:[%s0 + $0xfc] sm:$0xf]
    %v95 = vld [vmem:[%s0 + $0x100] sm:$0xf]
    %v96 = vld [vmem:[%s0 + $0x104] sm:$0xf]
    %v97 = vld [vmem:[%s0 + $0x108] sm:$0xf]
    %v98 = vld [vmem:[%s0 + $0x10c] sm:$0xf]
    %v99 = vld [vmem:[%s0 + $0x110] sm:$0xf]
    %v100 = vld [vmem:[%s0 + $0x114] sm:$0xf]
    %v101 = vld [vmem:[%s0 + $0x118] sm:$0xf]
    %v102 = vld [vmem:[%s0 + $0x11c] sm:$0xf]
    %v103 = vld [vmem:[%s0 + $0x120] sm:$0xf]
    %v104 = vld [vmem:[%s0 + $0x124] sm:$0xf]
    %v105 = vld [vmem:[%s0 + $0x128] sm:$0xf]
    %v106 = vld [vmem:[%s0 + $0x12c] sm:$0xf]
    %v107 = vld [vmem:[%s0 + $0x130] sm:$0xf]
    %v108 = vld [vmem:[%s0 + $0x134] sm:$0xf]
    %v109 = vld [vmem:[%s0 + $0x138] sm:$0xf]
    %v110 = vld [vmem:[%s0 + $0x13c] sm:$0xf]
    %v111 = vld [vmem:[%s0 + $0x140] sm:$0xf]
    %v112 = vld [vmem:[%s0 + $0x144] sm:$0xf]
    %v113 = vld [vmem:[%s0 + $0x148] sm:$0xf]
    %v114 = vld [vmem:[%s0 + $0x14c] sm:$0xf]
    %v115 = vld [vmem:[%s0 + $0x150] sm:$0xf]
    %v116 = vld [vmem:[%s0 + $0x154] sm:$0xf]
    %v117 = vld [vmem:[%s0 + $0x158] sm:$0xf]
    %v118 = vld [vmem:[%s0 + $0x15c] sm:$0xf]
    %v119 = vld [vmem:[%s0 + $0x160] sm:$0xf]
    %v120 = vld [vmem:[%s0 + $0x164] sm:$0xf]
    %v121 = vld [vmem:[%s0 + $0x168] sm:$0xf]
    %v122 = vld [vmem:[%s0 + $0x16c] sm:$0xf]
    %v123 = vld [vmem:[%s0 + $0x170] sm:$0xf]
    %v124 = vld [vmem:[%s0 + $0x174] sm:$0xf]
    %v125 = vld [vmem:[%s0 + $0x178] sm:$0xf]
    %v126 = vld [vmem:[%s0 + $0x17c] sm:$0xf]
    %v127 = vld [vmem:[%s0 + $0x180] sm:$0xf]
    %v128 = vld [vmem:[%s0 + $0x184] sm:$0xf]
    %v129 = vld [vmem:[%s0 + $0x188] sm:$0xf]
    %v130 = vld [vmem:[%s0 + $0x18c] sm:$0xf]
    %v131 = vld [vmem:[%s0 + $0x190] sm:$0xf]
    %v132 = vld [vmem:[%s0 + $0x194] sm:$0xf]
    %v133 = vld [vmem:[%s0 + $0x198] sm:$0xf]
    %v134 = vld [vmem:[%s0 + $0x19c] sm:$0xf]
    %v135 = vld [vmem:[%s0 + $0x1a0] sm:$0xf]
    %v136 = vld [vmem:[%s0 + $0x1a4] sm:$0xf]
    %v137 = vld [vmem:[%s0 + $0x1a8] sm:$0xf]
    %v138 = vld [vmem:[%s0 + $0x1ac] sm:$0xf]
    %v139 = vld [vmem:[%s0 + $0x1b0] sm:$0xf]
    %v140 = vld [vmem:[%s0 + $0x1b4] sm:$0xf]
    %v141 = vld [vmem:[%s0 + $0x1b8] sm:$0xf]
    %v142 = vld [vmem:[%s0 + $0x1bc] sm:$0xf]
    %v143 = vld [vmem:[%s0 + $0x1c0] sm:$0xf]
    %v144 = vld [vmem:[%s0 + $0x1c4] sm:$0xf]
    %v145 = vld [vmem:[%s0 + $0x1c8] sm:$0xf]
    %v146 = vld [vmem:[%s0 + $0x1cc] sm:$0xf]
    %v147 = vld [vmem:[%s0 + $0x1d0] sm:$0xf]
    %v148 = vld [vmem:[%s0 + $0x1d4] sm:$0xf]
    %v149 = vld [vmem:[%s0 + $0x1d8] sm:$0xf]
    %v150 = vld [vmem:[%s0 + $0x1dc] sm:$0xf]
    %v151 = vld [vmem:[%s0 + $0x1e0] sm:$0xf]
    %v152 = vld [vmem:[%s0 + $0x1e4] sm:$0xf]
    %v153 = vld [vmem:[%s0 + $0x1e8] sm:$0xf]
    %v154 = vld [vmem:[%s0 + $0x1ec] sm:$0xf]
    %v155 = vld [vmem:[%s0 + $0x1f0] sm:$0xf]
    %v156 = vld [vmem:[%s0 + $0x1f4] sm:$0xf]
    %v157 = vld [vmem:[%s0 + $0x1f8] sm:$0xf]
    %v158 = vld [vmem:[%s0 + $0x1fc] sm:$0xf]
    %v159 = vld [vmem:[%s0 + $0x200] sm:$0xf]
    %v160 = vld [vmem:[%s0 + $0x204] sm:$0xf]
    %v161 = vld [vmem:[%s0 + $0x208] sm:$0xf]
    %v162 = vld [vmem:[%s0 + $0x20c] sm:$0xf]
    %v163 = vld [vmem:[%s0 + $0x210] sm:$0xf]
    %v164 = vld [vmem:[%s0 + $0x214] sm:$0xf]
    %v165 = vld [vmem:[%s0 + $0x218] sm:$0xf]
    %v166 = vld [vmem:[%s0 + $0x21c] sm:$0xf]
    %v167 = vld [vmem:[%s0 + $0x220] sm:$0xf]
    %v168 = vld [vmem:[%s0 + $0x224] sm:$0xf]
    %v169 = vld [vmem:[%s0 + $0x228] sm:$0xf]
    %v170 = vld [vmem:[%s0 + $0x22c] sm:$0xf]
    %v171 = vld [vmem:[%s0 + $0x230] sm:$0xf]
    %v172 = vld [vmem:[%s0 + $0x234] sm:$0xf]
    %v173 = vld [vmem:[%s0 + $0x238] sm:$0xf]
    %v174 = vld [vmem:[%s0 + $0x23c] sm:$0xf]
    %v175 = vld [vmem:[%s0 + $0x240] sm:$0xf]
    %v176 = vld [vmem:[%s0 + $0x244] sm:$0xf]
    %v177 = vld [vmem:[%s0 + $0x248] sm:$0xf]
    %v178 = vld [vmem:[%s0 + $0x24c] sm:$0xf]
    %v179 = vld [vmem:[%s0 + $0x250] sm:$0xf]
    %v180 = vld [vmem:[%s0 + $0x254] sm:$0xf]
    %v181 = vld [vmem:[%s0 + $0x258] sm:$0xf]
    %v182 = vld [vmem:[%s0 + $0x25c] sm:$0xf]
    %v183 = vld [vmem:[%s0 + $0x260] sm:$0xf]
    %v184 = vld [vmem:[%s0 + $0x264] sm:$0xf]
    %v185 = vld [vmem:[%s0 + $0x268] sm:$0xf]
    %v186 = vld [vmem:[%s0 + $0x26c] sm:$0xf]
    %v187 = vld [vmem:[%s0 + $0x270] sm:$0xf]
    %v188 = vld [vmem:[%s0 + $0x274] sm:$0xf]
    %v189 = vld [vmem:[%s0 + $0x278] sm:$0xf]
    %v190 = vld [vmem:[%s0 + $0x27c] sm:$0xf]
    %v191 = vld [vmem:[%s0 + $0x280] sm:$0xf]
    %v192 = vld [vmem:[%s0 + $0x284] sm:$0xf]
    %v193 = vld [vmem:[%s0 + $0x288] sm:$0xf]
    %v194 = vld [vmem:[%s0 + $0x28c] sm:$0xf]
    %v195 = vld [vmem:[%s0 + $0x290] sm:$0xf]
    %v196 = vld [vmem:[%s0 + $0x294] sm:$0xf]
    %v197 = vld [vmem:[%s0 + $0x298] sm:$0xf]
    %v198 = vld [vmem:[%s0 + $0x29c] sm:$0xf]
    %v199 = vld [vmem:[%s0 + $0x2a0] sm:$0xf]
    %v200 = vld [vmem:[%s0 + $0x2a4] sm:$0xf]
    %v201 = vld [vmem:[%s0 + $0x2a8] sm:$0xf]
    %v202 = vld [vmem:[%s0 + $0x2ac] sm:$0xf]
    %v203 = vld [vmem:[%s0 + $0x2b0] sm:$0xf]
    %v204 = vld [vmem:[%s0 + $0x2b4] sm:$0xf]
    %v205 = vld [vmem:[%s0 + $0x2b8] sm:$0xf]
    %v206 = vld [vmem:[%s0 + $0x2bc] sm:$0xf]
    %v207 = vld [vmem:[%s0 + $0x2c0] sm:$0xf]
    %v208 = vld [vmem:[%s0 + $0x2c4] sm:$0xf]
    %v209 = vld [vmem:[%s0 + $0x2c8] sm:$0xf]
    %v210 = vld [vmem:[%s0 + $0x2cc] sm:$0xf]
    %v211 = vld [vmem:[%s0 + $0x2d0] sm:$0xf]
    %v212 = vld [vmem:[%s0 + $0x2d4] sm:$0xf]
    %v213 = vld [vmem:[%s0 + $0x2d8] sm:$0xf]
    %v214 = vld [vmem:[%s0 + $0x2dc] sm:$0xf]
    %v215 = vld [vmem:[%s0 + $0x2e0] sm:$0xf]
    %v216 = vld [vmem:[%s0 + $0x2e4] sm:$0xf]
    %v217 = vld [vmem:[%s0 + $0x2e8] sm:$0xf]
    %v218 = vld [vmem:[%s0 + $0x2ec] sm:$0xf]
    %v219 = vld [vmem:[%s0 + $0x2f0] sm:$0xf]
    %v220 = vld [vmem:[%s0 + $0x2f4] sm:$0xf]
    %v221 = vld [vmem:[%s0 + $0x2f8] sm:$0xf]
    %v222 = vld [vmem:[%s0 + $0x2fc] sm:$0xf]
    %v223 = vld [vmem:[%s0 + $0x300] sm:$0xf]
    %v224 = vld [vmem:[%s0 + $0x304] sm:$0xf]
    %v225 = vld [vmem:[%s0 + $0x308] sm:$0xf]
    %v226 = vld [vmem:[%s0 + $0x30c] sm:$0xf]
    %v227 = vld [vmem:[%s0 + $0x310] sm:$0xf]
    %v228 = vld [vmem:[%s0 + $0x314] sm:$0xf]
    %v229 = vld [vmem:[%s0 + $0x318] sm:$0xf]
    %v230 = vld [vmem:[%s0 + $0x31c] sm:$0xf]
    %v231 = vld [vmem:[%s0 + $0x320] sm:$0xf]
    %v232 = vld [vmem:[%s0 + $0x324] sm:$0xf]
    %v233 = vld [vmem:[%s0 + $0x328] sm:$0xf]
    %v234 = vld [vmem:[%s0 + $0x32c] sm:$0xf]
    %v235 = vld [vmem:[%s0 + $0x330] sm:$0xf]
    %v236 = vld [vmem:[%s0 + $0x334] sm:$0xf]
    %v237 = vld [vmem:[%s0 + $0x338] sm:$0xf]
    %v238 = vld [vmem:[%s0 + $0x33c] sm:$0xf]
    %v239 = vld [vmem:[%s0 + $0x340] sm:$0xf]
    %v240 = vld [vmem:[%s0 + $0x344] sm:$0xf]
    %v241 = vld [vmem:[%s0 + $0x348] sm:$0xf]
    %v242 = vld [vmem:[%s0 + $0x34c] sm:$0xf]
    %v243 = vld [vmem:[%s0 + $0x350] sm:$0xf]
    %v244 = vld [vmem:[%s0 + $0x354] sm:$0xf]
    %v245 = vld [vmem:[%s0 + $0x358] sm:$0xf]
    %v246 = vld [vmem:[%s0 + $0x35c] sm:$0xf]
    %v247 = vld [vmem:[%s0 + $0x360] sm:$0xf]
    %v248 = vld [vmem:[%s0 + $0x364] sm:$0xf]
    %v249 = vld [vmem:[%s0 + $0x368] sm:$0xf]
    %v250 = vld [vmem:[%s0 + $0x36c] sm:$0xf]
    %v251 = vld [vmem:[%s0 + $0x370] sm:$0xf]
    %v252 = vld [vmem:[%s0 + $0x374] sm:$0xf]
    %v253 = vld [vmem:[%s0 + $0x378] sm:$0xf]
    %v254 = vld [vmem:[%s0 + $0x37c] sm:$0xf]
    %v255 = vld [vmem:[%s0 + $0x380] sm:$0xf]
    %v256 = vld [vmem:[%s0 + $0x384] sm:$0xf]
    %v257 = vld [vmem:[%s0 + $0x388] sm:$0xf]
    %v258 = vld [vmem:[%s0 + $0x38c] sm:$0xf]
    %v259 = vld [vmem:[%s0 + $0x390] sm:$0xf]
    %v260 = vld [vmem:[%s0 + $0x394] sm:$0xf]
    %v261 = vld [vmem:[%s0 + $0x398] sm:$0xf]
    %v262 = vld [vmem:[%s0 + $0x39c] sm:$0xf]
    %v263 = vld [vmem:[%s0 + $0x3a0] sm:$0xf]
    %v264 = vld [vmem:[%s0 + $0x3a4] sm:$0xf]
    %v265 = vld [vmem:[%s0 + $0x3a8] sm:$0xf]
    %v266 = vld [vmem:[%s0 + $0x3ac] sm:$0xf]
    %v267 = vld [vmem:[%s0 + $0x3b0] sm:$0xf]
    %v268 = vld [vmem:[%s0 + $0x3b4] sm:$0xf]
    %v269 = vld [vmem:[%s0 + $0x3b8] sm:$0xf]
    %v270 = vld [vmem:[%s0 + $0x3bc] sm:$0xf]
    %v271 = vld [vmem:[%s0 + $0x3c0] sm:$0xf]
    %v272 = vld [vmem:[%s0 + $0x3c4] sm:$0xf]
    %v273 = vld [vmem:[%s0 + $0x3c8] sm:$0xf]
    %v274 = vld [vmem:[%s0 + $0x3cc] sm:$0xf]
    %v275 = vld [vmem:[%s0 + $0x3d0] sm:$0xf]
    %v276 = vld [vmem:[%s0 + $0x3d4] sm:$0xf]
    %v277 = vld [vmem:[%s0 + $0x3d8] sm:$0xf]
    %v278 = vld [vmem:[%s0 + $0x3dc] sm:$0xf]
    %v279 = vld [vmem:[%s0 + $0x3e0] sm:$0xf]
    %v280 = vld [vmem:[%s0 + $0x3e4] sm:$0xf]
    %v281 = vld [vmem:[%s0 + $0x3e8] sm:$0xf]
    %v282 = vld [vmem:[%s0 + $0x3ec] sm:$0xf]
    %v283 = vld [vmem:[%s0 + $0x3f0] sm:$0xf]
    %v284 = vld [vmem:[%s0 + $0x3f4] sm:$0xf]
    %v285 = vld [vmem:[%s0 + $0x3f8] sm:$0xf]
    %v286 = vld [vmem:[%s0 + $0x3fc] sm:$0xf]
    %v287 = vld [vmem:[%s1] sm:$0xf]
    %v288 = vld [vmem:[%s1 + $0x4] sm:$0xf]
    %v289 = vld [vmem:[%s1 + $0x8] sm:$0xf]
    %v290 = vld [vmem:[%s1 + $0xc] sm:$0xf]
    %v291 = vld [vmem:[%s2] sm:$0x1]
    %v293 = vlaneseq
    %v294 = vshrl.u32 %v293, 7
    %v295 = vsub.s32 0, %v294
    %v296 = vrot.slane %v291, %v295
    %v554 = vunpack.c.l.b16 %v31
    %v555 = vunpack.c.l.b16 %v32
    %v556 = vunpack.c.l.b16 %v33
    %v557 = vunpack.c.l.b16 %v34
    %v558 = vunpack.c.l.b16 %v35
    %v559 = vunpack.c.l.b16 %v36
    %v560 = vunpack.c.l.b16 %v37
    %v561 = vunpack.c.l.b16 %v38
    %v562 = vunpack.c.l.b16 %v39
    %v563 = vunpack.c.l.b16 %v40
    %v564 = vunpack.c.l.b16 %v41
    %v565 = vunpack.c.l.b16 %v42
    %v566 = vunpack.c.l.b16 %v43
    %v567 = vunpack.c.l.b16 %v44
    %v568 = vunpack.c.l.b16 %v45
    %v569 = vunpack.c.l.b16 %v46
    %v570 = vunpack.c.l.b16 %v47
    %v571 = vunpack.c.l.b16 %v48
    %v572 = vunpack.c.l.b16 %v49
    %v573 = vunpack.c.l.b16 %v50
    %v574 = vunpack.c.l.b16 %v51
    %v575 = vunpack.c.l.b16 %v52
    %v576 = vunpack.c.l.b16 %v53
    %v577 = vunpack.c.l.b16 %v54
    %v578 = vunpack.c.l.b16 %v55
    %v579 = vunpack.c.l.b16 %v56
    %v580 = vunpack.c.l.b16 %v57
    %v581 = vunpack.c.l.b16 %v58
    %v582 = vunpack.c.l.b16 %v59
    %v583 = vunpack.c.l.b16 %v60
    %v584 = vunpack.c.l.b16 %v61
    %v585 = vunpack.c.l.b16 %v62
    %v586 = vunpack.c.l.b16 %v63
    %v587 = vunpack.c.l.b16 %v64
    %v588 = vunpack.c.l.b16 %v65
    %v589 = vunpack.c.l.b16 %v66
    %v590 = vunpack.c.l.b16 %v67
    %v591 = vunpack.c.l.b16 %v68
    %v592 = vunpack.c.l.b16 %v69
    %v593 = vunpack.c.l.b16 %v70
    %v594 = vunpack.c.l.b16 %v71
    %v595 = vunpack.c.l.b16 %v72
    %v596 = vunpack.c.l.b16 %v73
    %v597 = vunpack.c.l.b16 %v74
    %v598 = vunpack.c.l.b16 %v75
    %v599 = vunpack.c.l.b16 %v76
    %v600 = vunpack.c.l.b16 %v77
    %v601 = vunpack.c.l.b16 %v78
    %v602 = vunpack.c.l.b16 %v79
    %v603 = vunpack.c.l.b16 %v80
    %v604 = vunpack.c.l.b16 %v81
    %v605 = vunpack.c.l.b16 %v82
    %v606 = vunpack.c.l.b16 %v83
    %v607 = vunpack.c.l.b16 %v84
    %v608 = vunpack.c.l.b16 %v85
    %v609 = vunpack.c.l.b16 %v86
    %v610 = vunpack.c.l.b16 %v87
    %v611 = vunpack.c.l.b16 %v88
    %v612 = vunpack.c.l.b16 %v89
    %v613 = vunpack.c.l.b16 %v90
    %v614 = vunpack.c.l.b16 %v91
    %v615 = vunpack.c.l.b16 %v92
    %v616 = vunpack.c.l.b16 %v93
    %v617 = vunpack.c.l.b16 %v94
    %v618 = vunpack.c.l.b16 %v95
    %v619 = vunpack.c.l.b16 %v96
    %v620 = vunpack.c.l.b16 %v97
    %v621 = vunpack.c.l.b16 %v98
    %v622 = vunpack.c.l.b16 %v99
    %v623 = vunpack.c.l.b16 %v100
    %v624 = vunpack.c.l.b16 %v101
    %v625 = vunpack.c.l.b16 %v102
    %v626 = vunpack.c.l.b16 %v103
    %v627 = vunpack.c.l.b16 %v104
    %v628 = vunpack.c.l.b16 %v105
    %v629 = vunpack.c.l.b16 %v106
    %v630 = vunpack.c.l.b16 %v107
    %v631 = vunpack.c.l.b16 %v108
    %v632 = vunpack.c.l.b16 %v109
    %v633 = vunpack.c.l.b16 %v110
    %v634 = vunpack.c.l.b16 %v111
    %v635 = vunpack.c.l.b16 %v112
    %v636 = vunpack.c.l.b16 %v113
    %v637 = vunpack.c.l.b16 %v114
    %v638 = vunpack.c.l.b16 %v115
    %v639 = vunpack.c.l.b16 %v116
    %v640 = vunpack.c.l.b16 %v117
    %v641 = vunpack.c.l.b16 %v118
    %v642 = vunpack.c.l.b16 %v119
    %v643 = vunpack.c.l.b16 %v120
    %v644 = vunpack.c.l.b16 %v121
    %v645 = vunpack.c.l.b16 %v122
    %v646 = vunpack.c.l.b16 %v123
    %v647 = vunpack.c.l.b16 %v124
    %v648 = vunpack.c.l.b16 %v125
    %v649 = vunpack.c.l.b16 %v126
    %v650 = vunpack.c.l.b16 %v127
    %v651 = vunpack.c.l.b16 %v128
    %v652 = vunpack.c.l.b16 %v129
    %v653 = vunpack.c.l.b16 %v130
    %v654 = vunpack.c.l.b16 %v131
    %v655 = vunpack.c.l.b16 %v132
    %v656 = vunpack.c.l.b16 %v133
    %v657 = vunpack.c.l.b16 %v134
    %v658 = vunpack.c.l.b16 %v135
    %v659 = vunpack.c.l.b16 %v136
    %v660 = vunpack.c.l.b16 %v137
    %v661 = vunpack.c.l.b16 %v138
    %v662 = vunpack.c.l.b16 %v139
    %v663 = vunpack.c.l.b16 %v140
    %v664 = vunpack.c.l.b16 %v141
    %v665 = vunpack.c.l.b16 %v142
    %v666 = vunpack.c.l.b16 %v143
    %v667 = vunpack.c.l.b16 %v144
    %v668 = vunpack.c.l.b16 %v145
    %v669 = vunpack.c.l.b16 %v146
    %v670 = vunpack.c.l.b16 %v147
    %v671 = vunpack.c.l.b16 %v148
    %v672 = vunpack.c.l.b16 %v149
    %v673 = vunpack.c.l.b16 %v150
    %v674 = vunpack.c.l.b16 %v151
    %v675 = vunpack.c.l.b16 %v152
    %v676 = vunpack.c.l.b16 %v153
    %v677 = vunpack.c.l.b16 %v154
    %v678 = vunpack.c.l.b16 %v155
    %v679 = vunpack.c.l.b16 %v156
    %v680 = vunpack.c.l.b16 %v157
    %v681 = vunpack.c.l.b16 %v158
    %v682 = vunpack.c.l.b16 %v159
    %v683 = vunpack.c.l.b16 %v160
    %v684 = vunpack.c.l.b16 %v161
    %v685 = vunpack.c.l.b16 %v162
    %v686 = vunpack.c.l.b16 %v163
    %v687 = vunpack.c.l.b16 %v164
    %v688 = vunpack.c.l.b16 %v165
    %v689 = vunpack.c.l.b16 %v166
    %v690 = vunpack.c.l.b16 %v167
    %v691 = vunpack.c.l.b16 %v168
    %v692 = vunpack.c.l.b16 %v169
    %v693 = vunpack.c.l.b16 %v170
    %v694 = vunpack.c.l.b16 %v171
    %v695 = vunpack.c.l.b16 %v172
    %v696 = vunpack.c.l.b16 %v173
    %v697 = vunpack.c.l.b16 %v174
    %v698 = vunpack.c.l.b16 %v175
    %v699 = vunpack.c.l.b16 %v176
    %v700 = vunpack.c.l.b16 %v177
    %v701 = vunpack.c.l.b16 %v178
    %v702 = vunpack.c.l.b16 %v179
    %v703 = vunpack.c.l.b16 %v180
    %v704 = vunpack.c.l.b16 %v181
    %v705 = vunpack.c.l.b16 %v182
    %v706 = vunpack.c.l.b16 %v183
    %v707 = vunpack.c.l.b16 %v184
    %v708 = vunpack.c.l.b16 %v185
    %v709 = vunpack.c.l.b16 %v186
    %v710 = vunpack.c.l.b16 %v187
    %v711 = vunpack.c.l.b16 %v188
    %v712 = vunpack.c.l.b16 %v189
    %v713 = vunpack.c.l.b16 %v190
    %v714 = vunpack.c.l.b16 %v191
    %v715 = vunpack.c.l.b16 %v192
    %v716 = vunpack.c.l.b16 %v193
    %v717 = vunpack.c.l.b16 %v194
    %v718 = vunpack.c.l.b16 %v195
    %v719 = vunpack.c.l.b16 %v196
    %v720 = vunpack.c.l.b16 %v197
    %v721 = vunpack.c.l.b16 %v198
    %v722 = vunpack.c.l.b16 %v199
    %v723 = vunpack.c.l.b16 %v200
    %v724 = vunpack.c.l.b16 %v201
    %v725 = vunpack.c.l.b16 %v202
    %v726 = vunpack.c.l.b16 %v203
    %v727 = vunpack.c.l.b16 %v204
    %v728 = vunpack.c.l.b16 %v205
    %v729 = vunpack.c.l.b16 %v206
    %v730 = vunpack.c.l.b16 %v207
    %v731 = vunpack.c.l.b16 %v208
    %v732 = vunpack.c.l.b16 %v209
    %v733 = vunpack.c.l.b16 %v210
    %v734 = vunpack.c.l.b16 %v211
    %v735 = vunpack.c.l.b16 %v212
    %v736 = vunpack.c.l.b16 %v213
    %v737 = vunpack.c.l.b16 %v214
    %v738 = vunpack.c.l.b16 %v215
    %v739 = vunpack.c.l.b16 %v216
    %v740 = vunpack.c.l.b16 %v217
    %v741 = vunpack.c.l.b16 %v218
    %v742 = vunpack.c.l.b16 %v219
    %v743 = vunpack.c.l.b16 %v220
    %v744 = vunpack.c.l.b16 %v221
    %v745 = vunpack.c.l.b16 %v222
    %v746 = vunpack.c.l.b16 %v223
    %v747 = vunpack.c.l.b16 %v224
    %v748 = vunpack.c.l.b16 %v225
    %v749 = vunpack.c.l.b16 %v226
    %v750 = vunpack.c.l.b16 %v227
    %v751 = vunpack.c.l.b16 %v228
    %v752 = vunpack.c.l.b16 %v229
    %v753 = vunpack.c.l.b16 %v230
    %v754 = vunpack.c.l.b16 %v231
    %v755 = vunpack.c.l.b16 %v232
    %v756 = vunpack.c.l.b16 %v233
    %v757 = vunpack.c.l.b16 %v234
    %v758 = vunpack.c.l.b16 %v235
    %v759 = vunpack.c.l.b16 %v236
    %v760 = vunpack.c.l.b16 %v237
    %v761 = vunpack.c.l.b16 %v238
    %v762 = vunpack.c.l.b16 %v239
    %v763 = vunpack.c.l.b16 %v240
    %v764 = vunpack.c.l.b16 %v241
    %v765 = vunpack.c.l.b16 %v242
    %v766 = vunpack.c.l.b16 %v243
    %v767 = vunpack.c.l.b16 %v244
    %v768 = vunpack.c.l.b16 %v245
    %v769 = vunpack.c.l.b16 %v246
    %v770 = vunpack.c.l.b16 %v247
    %v771 = vunpack.c.l.b16 %v248
    %v772 = vunpack.c.l.b16 %v249
    %v773 = vunpack.c.l.b16 %v250
    %v774 = vunpack.c.l.b16 %v251
    %v775 = vunpack.c.l.b16 %v252
    %v776 = vunpack.c.l.b16 %v253
    %v777 = vunpack.c.l.b16 %v254
    %v778 = vunpack.c.l.b16 %v255
    %v779 = vunpack.c.l.b16 %v256
    %v780 = vunpack.c.l.b16 %v257
    %v781 = vunpack.c.l.b16 %v258
    %v782 = vunpack.c.l.b16 %v259
    %v783 = vunpack.c.l.b16 %v260
    %v784 = vunpack.c.l.b16 %v261
    %v785 = vunpack.c.l.b16 %v262
    %v786 = vunpack.c.l.b16 %v263
    %v787 = vunpack.c.l.b16 %v264
    %v788 = vunpack.c.l.b16 %v265
    %v789 = vunpack.c.l.b16 %v266
    %v790 = vunpack.c.l.b16 %v267
    %v791 = vunpack.c.l.b16 %v268
    %v792 = vunpack.c.l.b16 %v269
    %v793 = vunpack.c.l.b16 %v270
    %v794 = vunpack.c.l.b16 %v271
    %v795 = vunpack.c.l.b16 %v272
    %v796 = vunpack.c.l.b16 %v273
    %v797 = vunpack.c.l.b16 %v274
    %v798 = vunpack.c.l.b16 %v275
    %v799 = vunpack.c.l.b16 %v276
    %v800 = vunpack.c.l.b16 %v277
    %v801 = vunpack.c.l.b16 %v278
    %v802 = vunpack.c.l.b16 %v279
    %v803 = vunpack.c.l.b16 %v280
    %v804 = vunpack.c.l.b16 %v281
    %v805 = vunpack.c.l.b16 %v282
    %v806 = vunpack.c.l.b16 %v283
    %v807 = vunpack.c.l.b16 %v284
    %v808 = vunpack.c.l.b16 %v285
    %v809 = vunpack.c.l.b16 %v286
    %v810 = vpack.c.b16 %v555, %v554
    %v811 = vpack.c.b16 %v557, %v556
    %v812 = vpack.c.b16 %v559, %v558
    %v813 = vpack.c.b16 %v561, %v560
    %v814 = vpack.c.b16 %v563, %v562
    %v815 = vpack.c.b16 %v565, %v564
    %v816 = vpack.c.b16 %v567, %v566
    %v817 = vpack.c.b16 %v569, %v568
    %v818 = vpack.c.b16 %v571, %v570
    %v819 = vpack.c.b16 %v573, %v572
    %v820 = vpack.c.b16 %v575, %v574
    %v821 = vpack.c.b16 %v577, %v576
    %v822 = vpack.c.b16 %v579, %v578
    %v823 = vpack.c.b16 %v581, %v580
    %v824 = vpack.c.b16 %v583, %v582
    %v825 = vpack.c.b16 %v585, %v584
    %v826 = vpack.c.b16 %v587, %v586
    %v827 = vpack.c.b16 %v589, %v588
    %v828 = vpack.c.b16 %v591, %v590
    %v829 = vpack.c.b16 %v593, %v592
    %v830 = vpack.c.b16 %v595, %v594
    %v831 = vpack.c.b16 %v597, %v596
    %v832 = vpack.c.b16 %v599, %v598
    %v833 = vpack.c.b16 %v601, %v600
    %v834 = vpack.c.b16 %v603, %v602
    %v835 = vpack.c.b16 %v605, %v604
    %v836 = vpack.c.b16 %v607, %v606
    %v837 = vpack.c.b16 %v609, %v608
    %v838 = vpack.c.b16 %v611, %v610
    %v839 = vpack.c.b16 %v613, %v612
    %v840 = vpack.c.b16 %v615, %v614
    %v841 = vpack.c.b16 %v617, %v616
    %v842 = vpack.c.b16 %v619, %v618
    %v843 = vpack.c.b16 %v621, %v620
    %v844 = vpack.c.b16 %v623, %v622
    %v845 = vpack.c.b16 %v625, %v624
    %v846 = vpack.c.b16 %v627, %v626
    %v847 = vpack.c.b16 %v629, %v628
    %v848 = vpack.c.b16 %v631, %v630
    %v849 = vpack.c.b16 %v633, %v632
    %v850 = vpack.c.b16 %v635, %v634
    %v851 = vpack.c.b16 %v637, %v636
    %v852 = vpack.c.b16 %v639, %v638
    %v853 = vpack.c.b16 %v641, %v640
    %v854 = vpack.c.b16 %v643, %v642
    %v855 = vpack.c.b16 %v645, %v644
    %v856 = vpack.c.b16 %v647, %v646
    %v857 = vpack.c.b16 %v649, %v648
    %v858 = vpack.c.b16 %v651, %v650
    %v859 = vpack.c.b16 %v653, %v652
    %v860 = vpack.c.b16 %v655, %v654
    %v861 = vpack.c.b16 %v657, %v656
    %v862 = vpack.c.b16 %v659, %v658
    %v863 = vpack.c.b16 %v661, %v660
    %v864 = vpack.c.b16 %v663, %v662
    %v865 = vpack.c.b16 %v665, %v664
    %v866 = vpack.c.b16 %v667, %v666
    %v867 = vpack.c.b16 %v669, %v668
    %v868 = vpack.c.b16 %v671, %v670
    %v869 = vpack.c.b16 %v673, %v672
    %v870 = vpack.c.b16 %v675, %v674
    %v871 = vpack.c.b16 %v677, %v676
    %v872 = vpack.c.b16 %v679, %v678
    %v873 = vpack.c.b16 %v681, %v680
    %v874 = vpack.c.b16 %v683, %v682
    %v875 = vpack.c.b16 %v685, %v684
    %v876 = vpack.c.b16 %v687, %v686
    %v877 = vpack.c.b16 %v689, %v688
    %v878 = vpack.c.b16 %v691, %v690
    %v879 = vpack.c.b16 %v693, %v692
    %v880 = vpack.c.b16 %v695, %v694
    %v881 = vpack.c.b16 %v697, %v696
    %v882 = vpack.c.b16 %v699, %v698
    %v883 = vpack.c.b16 %v701, %v700
    %v884 = vpack.c.b16 %v703, %v702
    %v885 = vpack.c.b16 %v705, %v704
    %v886 = vpack.c.b16 %v707, %v706
    %v887 = vpack.c.b16 %v709, %v708
    %v888 = vpack.c.b16 %v711, %v710
    %v889 = vpack.c.b16 %v713, %v712
    %v890 = vpack.c.b16 %v715, %v714
    %v891 = vpack.c.b16 %v717, %v716
    %v892 = vpack.c.b16 %v719, %v718
    %v893 = vpack.c.b16 %v721, %v720
    %v894 = vpack.c.b16 %v723, %v722
    %v895 = vpack.c.b16 %v725, %v724
    %v896 = vpack.c.b16 %v727, %v726
    %v897 = vpack.c.b16 %v729, %v728
    %v898 = vpack.c.b16 %v731, %v730
    %v899 = vpack.c.b16 %v733, %v732
    %v900 = vpack.c.b16 %v735, %v734
    %v901 = vpack.c.b16 %v737, %v736
    %v902 = vpack.c.b16 %v739, %v738
    %v903 = vpack.c.b16 %v741, %v740
    %v904 = vpack.c.b16 %v743, %v742
    %v905 = vpack.c.b16 %v745, %v744
    %v906 = vpack.c.b16 %v747, %v746
    %v907 = vpack.c.b16 %v749, %v748
    %v908 = vpack.c.b16 %v751, %v750
    %v909 = vpack.c.b16 %v753, %v752
    %v910 = vpack.c.b16 %v755, %v754
    %v911 = vpack.c.b16 %v757, %v756
    %v912 = vpack.c.b16 %v759, %v758
    %v913 = vpack.c.b16 %v761, %v760
    %v914 = vpack.c.b16 %v763, %v762
    %v915 = vpack.c.b16 %v765, %v764
    %v916 = vpack.c.b16 %v767, %v766
    %v917 = vpack.c.b16 %v769, %v768
    %v918 = vpack.c.b16 %v771, %v770
    %v919 = vpack.c.b16 %v773, %v772
    %v920 = vpack.c.b16 %v775, %v774
    %v921 = vpack.c.b16 %v777, %v776
    %v922 = vpack.c.b16 %v779, %v778
    %v923 = vpack.c.b16 %v781, %v780
    %v924 = vpack.c.b16 %v783, %v782
    %v925 = vpack.c.b16 %v785, %v784
    %v926 = vpack.c.b16 %v787, %v786
    %v927 = vpack.c.b16 %v789, %v788
    %v928 = vpack.c.b16 %v791, %v790
    %v929 = vpack.c.b16 %v793, %v792
    %v930 = vpack.c.b16 %v795, %v794
    %v931 = vpack.c.b16 %v797, %v796
    %v932 = vpack.c.b16 %v799, %v798
    %v933 = vpack.c.b16 %v801, %v800
    %v934 = vpack.c.b16 %v803, %v802
    %v935 = vpack.c.b16 %v805, %v804
    %v936 = vpack.c.b16 %v807, %v806
    %v937 = vpack.c.b16 %v809, %v808
    %v942 = vunpack.c.l.b16 %v287
    %v943 = vunpack.c.l.b16 %v288
    %v944 = vunpack.c.l.b16 %v289
    %v945 = vunpack.c.l.b16 %v290
    %v946 = vpack.c.b16 %v943, %v942
    %v947 = vpack.c.b16 %v945, %v944
    %vm950 = vcmask 261120
    %v952 = vsel %vm950, %v810, 0
    %v955 = vsel %vm950, %v811, 0
    %v958 = vsel %vm950, %v812, 0
    %v961 = vsel %vm950, %v813, 0
    %v964 = vsel %vm950, %v814, 0
    %v967 = vsel %vm950, %v815, 0
    %v970 = vsel %vm950, %v816, 0
    %v973 = vsel %vm950, %v817, 0
    %v976 = vsel %vm950, %v818, 0
    %v979 = vsel %vm950, %v819, 0
    %v982 = vsel %vm950, %v820, 0
    %v985 = vsel %vm950, %v821, 0
    %v988 = vsel %vm950, %v822, 0
    %v991 = vsel %vm950, %v823, 0
    %v994 = vsel %vm950, %v824, 0
    %v997 = vsel %vm950, %v825, 0
    %v1000 = vsel %vm950, %v826, 0
    %v1003 = vsel %vm950, %v827, 0
    %v1006 = vsel %vm950, %v828, 0
    %v1009 = vsel %vm950, %v829, 0
    %v1012 = vsel %vm950, %v830, 0
    %v1015 = vsel %vm950, %v831, 0
    %v1018 = vsel %vm950, %v832, 0
    %v1021 = vsel %vm950, %v833, 0
    %v1024 = vsel %vm950, %v834, 0
    %v1027 = vsel %vm950, %v835, 0
    %v1030 = vsel %vm950, %v836, 0
    %v1033 = vsel %vm950, %v837, 0
    %v1036 = vsel %vm950, %v838, 0
    %v1039 = vsel %vm950, %v839, 0
    %v1042 = vsel %vm950, %v840, 0
    %v1045 = vsel %vm950, %v841, 0
    %v1048 = vsel %vm950, %v842, 0
    %v1051 = vsel %vm950, %v843, 0
    %v1054 = vsel %vm950, %v844, 0
    %v1057 = vsel %vm950, %v845, 0
    %v1060 = vsel %vm950, %v846, 0
    %v1063 = vsel %vm950, %v847, 0
    %v1066 = vsel %vm950, %v848, 0
    %v1069 = vsel %vm950, %v849, 0
    %v1072 = vsel %vm950, %v850, 0
    %v1075 = vsel %vm950, %v851, 0
    %v1078 = vsel %vm950, %v852, 0
    %v1081 = vsel %vm950, %v853, 0
    %v1084 = vsel %vm950, %v854, 0
    %v1087 = vsel %vm950, %v855, 0
    %v1090 = vsel %vm950, %v856, 0
    %v1093 = vsel %vm950, %v857, 0
    %v1096 = vsel %vm950, %v858, 0
    %v1099 = vsel %vm950, %v859, 0
    %v1102 = vsel %vm950, %v860, 0
    %v1105 = vsel %vm950, %v861, 0
    %v1108 = vsel %vm950, %v862, 0
    %v1111 = vsel %vm950, %v863, 0
    %v1114 = vsel %vm950, %v864, 0
    %v1117 = vsel %vm950, %v865, 0
    %v1120 = vsel %vm950, %v866, 0
    %v1123 = vsel %vm950, %v867, 0
    %v1126 = vsel %vm950, %v868, 0
    %v1129 = vsel %vm950, %v869, 0
    %v1132 = vsel %vm950, %v870, 0
    %v1135 = vsel %vm950, %v871, 0
    %v1138 = vsel %vm950, %v872, 0
    %v1141 = vsel %vm950, %v873, 0
    %v1144 = vsel %vm950, %v874, 0
    %v1147 = vsel %vm950, %v875, 0
    %v1150 = vsel %vm950, %v876, 0
    %v1153 = vsel %vm950, %v877, 0
    %v1156 = vsel %vm950, %v878, 0
    %v1159 = vsel %vm950, %v879, 0
    %v1162 = vsel %vm950, %v880, 0
    %v1165 = vsel %vm950, %v881, 0
    %v1168 = vsel %vm950, %v882, 0
    %v1171 = vsel %vm950, %v883, 0
    %v1174 = vsel %vm950, %v884, 0
    %v1177 = vsel %vm950, %v885, 0
    %v1180 = vsel %vm950, %v886, 0
    %v1183 = vsel %vm950, %v887, 0
    %v1186 = vsel %vm950, %v888, 0
    %v1189 = vsel %vm950, %v889, 0
    %v1192 = vsel %vm950, %v890, 0
    %v1195 = vsel %vm950, %v891, 0
    %v1198 = vsel %vm950, %v892, 0
    %v1201 = vsel %vm950, %v893, 0
    %v1204 = vsel %vm950, %v894, 0
    %v1207 = vsel %vm950, %v895, 0
    %v1210 = vsel %vm950, %v896, 0
    %v1213 = vsel %vm950, %v897, 0
    %v1216 = vsel %vm950, %v898, 0
    %v1219 = vsel %vm950, %v899, 0
    %v1222 = vsel %vm950, %v900, 0
    %v1225 = vsel %vm950, %v901, 0
    %v1228 = vsel %vm950, %v902, 0
    %v1231 = vsel %vm950, %v903, 0
    %v1234 = vsel %vm950, %v904, 0
    %v1237 = vsel %vm950, %v905, 0
    %v1240 = vsel %vm950, %v906, 0
    %v1243 = vsel %vm950, %v907, 0
    %v1246 = vsel %vm950, %v908, 0
    %v1249 = vsel %vm950, %v909, 0
    %v1252 = vsel %vm950, %v910, 0
    %v1255 = vsel %vm950, %v911, 0
    %v1258 = vsel %vm950, %v912, 0
    %v1261 = vsel %vm950, %v913, 0
    %v1264 = vsel %vm950, %v914, 0
    %v1267 = vsel %vm950, %v915, 0
    %v1270 = vsel %vm950, %v916, 0
    %v1273 = vsel %vm950, %v917, 0
    %v1276 = vsel %vm950, %v918, 0
    %v1279 = vsel %vm950, %v919, 0
    %v1282 = vsel %vm950, %v920, 0
    %v1285 = vsel %vm950, %v921, 0
    %v1288 = vsel %vm950, %v922, 0
    %v1291 = vsel %vm950, %v923, 0
    %v1294 = vsel %vm950, %v924, 0
    %v1297 = vsel %vm950, %v925, 0
    %v1300 = vsel %vm950, %v926, 0
    %v1303 = vsel %vm950, %v927, 0
    %v1306 = vsel %vm950, %v928, 0
    %v1309 = vsel %vm950, %v929, 0
    %v1312 = vsel %vm950, %v930, 0
    %v1315 = vsel %vm950, %v931, 0
    %v1318 = vsel %vm950, %v932, 0
    %v1321 = vsel %vm950, %v933, 0
    %v1324 = vsel %vm950, %v934, 0
    %v1327 = vsel %vm950, %v935, 0
    %v1330 = vsel %vm950, %v936, 0
    %v1333 = vsel %vm950, %v937, 0
    %1335 = vmatprep.subr.bf16.mxu0 0
    %1336 = vmatpush1.bf16.msra.mxu0 %v946
    %1337 = vmatprep.subr.bf16.mxu0 0
    %1338 = vmatpush1.bf16.msra.mxu0 %v947
    %1339 = vmatprep.subr.bf16.mxu0 0
    %1340 = vmatpush1.bf16.msra.mxu0 0
    %1341 = vmatprep.subr.bf16.mxu0 0
    %1342 = vmatpush1.bf16.msra.mxu0 0
    %1343 = vmatprep.subr.bf16.mxu0 0
    %1344 = vmatpush1.bf16.msra.mxu0 0
    %1345 = vmatprep.subr.bf16.mxu0 0
    %1346 = vmatpush1.bf16.msra.mxu0 0
    %1347 = vmatprep.subr.bf16.mxu0 0
    %1348 = vmatpush1.bf16.msra.mxu0 0
    %1349 = vmatprep.subr.bf16.mxu0 0
    %1350 = vmatpush1.bf16.msra.mxu0 0
    %1351 = vmatprep.subr.bf16.mxu0 0
    %1352 = vmatpush1.bf16.msra.mxu0 0
    %1353 = vmatprep.subr.bf16.mxu0 0
    %1354 = vmatpush1.bf16.msra.mxu0 0
    %1355 = vmatprep.subr.bf16.mxu0 0
    %1356 = vmatpush1.bf16.msra.mxu0 0
    %1357 = vmatprep.subr.bf16.mxu0 0
    %1358 = vmatpush1.bf16.msra.mxu0 0
    %1359 = vmatprep.subr.bf16.mxu0 0
    %1360 = vmatpush1.bf16.msra.mxu0 0
    %1361 = vmatprep.subr.bf16.mxu0 0
    %1362 = vmatpush1.bf16.msra.mxu0 0
    %1363 = vmatprep.subr.bf16.mxu0 0
    %1364 = vmatpush1.bf16.msra.mxu0 0
    %1365 = vmatprep.subr.bf16.mxu0 0
    %1366 = vmatpush1.bf16.msra.mxu0 0
    %1367 = vmatprep.mubr.bf16.mxu0 0
    %1368 = vmatmul.mubr.bf16.gmra.mrb[0].mxu0 %v952
    %v1369 = vpop.f32.mrb[0].mxu0
    %v1370 = vadd.f32 %v296, %v1369
    %v1371 = vpop.f32.mrb[0].mxu0
    %v1372 = vpop.f32.mrb[0].mxu0
    %v1373 = vadd.f32 %v296, %v1372
    %v1374 = vpop.f32.mrb[0].mxu0
    %1375 = vmatprep.mubr.bf16.mxu0 0
    %1376 = vmatmul.mubr.bf16.gmra.mrb[0].mxu0 %v955
    %v1377 = vpop.f32.mrb[0].mxu0
    %v1378 = vadd.f32 %v296, %v1377
    %v1379 = vpop.f32.mrb[0].mxu0
    %v1380 = vpop.f32.mrb[0].mxu0
    %v1381 = vadd.f32 %v296, %v1380
    %v1382 = vpop.f32.mrb[0].mxu0
    %1383 = vmatprep.mubr.bf16.mxu0 0
    %1384 = vmatmul.mubr.bf16.gmra.mrb[0].mxu0 %v958
    %v1385 = vpop.f32.mrb[0].mxu0
    %v1386 = vadd.f32 %v296, %v1385
    %v1387 = vpop.f32.mrb[0].mxu0
    %v1388 = vpop.f32.mrb[0].mxu0
    %v1389 = vadd.f32 %v296, %v1388
    %v1390 = vpop.f32.mrb[0].mxu0
    %1391 = vmatprep.mubr.bf16.mxu0 0
    %1392 = vmatmul.mubr.bf16.gmra.mrb[0].mxu0 %v961
    %v1393 = vpop.f32.mrb[0].mxu0
    %v1394 = vadd.f32 %v296, %v1393
    %v1395 = vpop.f32.mrb[0].mxu0
    %v1396 = vpop.f32.mrb[0].mxu0
    %v1397 = vadd.f32 %v296, %v1396
    %v1398 = vpop.f32.mrb[0].mxu0
    %1399 = vmatprep.mubr.bf16.mxu0 0
    %1400 = vmatmul.mubr.bf16.gmra.mrb[0].mxu0 %v964
    %v1401 = vpop.f32.mrb[0].mxu0
    %v1402 = vadd.f32 %v296, %v1401
    %v1403 = vpop.f32.mrb[0].mxu0
    %v1404 = vpop.f32.mrb[0].mxu0
    %v1405 = vadd.f32 %v296, %v1404
    %v1406 = vpop.f32.mrb[0].mxu0
    %1407 = vmatprep.mubr.bf16.mxu0 0
    %1408 = vmatmul.mubr.bf16.gmra.mrb[0].mxu0 %v967
    %v1409 = vpop.f32.mrb[0].mxu0
    %v1410 = vadd.f32 %v296, %v1409
    %v1411 = vpop.f32.mrb[0].mxu0
    %v1412 = vpop.f32.mrb[0].mxu0
    %v1413 = vadd.f32 %v296, %v1412
    %v1414 = vpop.f32.mrb[0].mxu0
    %1415 = vmatprep.mubr.bf16.mxu0 0
    %1416 = vmatmul.mubr.bf16.gmra.mrb[0].mxu0 %v970
    %v1417 = vpop.f32.mrb[0].mxu0
    %v1418 = vadd.f32 %v296, %v1417
    %v1419 = vpop.f32.mrb[0].mxu0
    %v1420 = vpop.f32.mrb[0].mxu0
    %v1421 = vadd.f32 %v296, %v1420
    %v1422 = vpop.f32.mrb[0].mxu0
    %1423 = vmatprep.mubr.bf16.mxu0 0
    %1424 = vmatmul.mubr.bf16.gmra.mrb[0].mxu0 %v973
    %v1425 = vpop.f32.mrb[0].mxu0
    %v1426 = vadd.f32 %v296, %v1425
    %v1427 = vpop.f32.mrb[0].mxu0
    %v1428 = vpop.f32.mrb[0].mxu0
    %v1429 = vadd.f32 %v296, %v1428
    %v1430 = vpop.f32.mrb[0].mxu0
    %1431 = vmatprep.mubr.bf16.mxu0 0
    %1432 = vmatmul.mubr.bf16.gmra.mrb[0].mxu0 %v976
    %v1433 = vpop.f32.mrb[0].mxu0
    %v1434 = vadd.f32 %v296, %v1433
    %v1435 = vpop.f32.mrb[0].mxu0
    %v1436 = vpop.f32.mrb[0].mxu0
    %v1437 = vadd.f32 %v296, %v1436
    %v1438 = vpop.f32.mrb[0].mxu0
    %1439 = vmatprep.mubr.bf16.mxu0 0
    %1440 = vmatmul.mubr.bf16.gmra.mrb[0].mxu0 %v979
    %v1441 = vpop.f32.mrb[0].mxu0
    %v1442 = vadd.f32 %v296, %v1441
    %v1443 = vpop.f32.mrb[0].mxu0
    %v1444 = vpop.f32.mrb[0].mxu0
    %v1445 = vadd.f32 %v296, %v1444
    %v1446 = vpop.f32.mrb[0].mxu0
    %1447 = vmatprep.mubr.bf16.mxu0 0
    %1448 = vmatmul.mubr.bf16.gmra.mrb[0].mxu0 %v982
    %v1449 = vpop.f32.mrb[0].mxu0
    %v1450 = vadd.f32 %v296, %v1449
    %v1451 = vpop.f32.mrb[0].mxu0
    %v1452 = vpop.f32.mrb[0].mxu0
    %v1453 = vadd.f32 %v296, %v1452
    %v1454 = vpop.f32.mrb[0].mxu0
    %1455 = vmatprep.mubr.bf16.mxu0 0
    %1456 = vmatmul.mubr.bf16.gmra.mrb[0].mxu0 %v985
    %v1457 = vpop.f32.mrb[0].mxu0
    %v1458 = vadd.f32 %v296, %v1457
    %v1459 = vpop.f32.mrb[0].mxu0
    %v1460 = vpop.f32.mrb[0].mxu0
    %v1461 = vadd.f32 %v296, %v1460
    %v1462 = vpop.f32.mrb[0].mxu0
    %1463 = vmatprep.mubr.bf16.mxu0 0
    %1464 = vmatmul.mubr.bf16.gmra.mrb[0].mxu0 %v988
    %v1465 = vpop.f32.mrb[0].mxu0
    %v1466 = vadd.f32 %v296, %v1465
    %v1467 = vpop.f32.mrb[0].mxu0
    %v1468 = vpop.f32.mrb[0].mxu0
    %v1469 = vadd.f32 %v296, %v1468
    %v1470 = vpop.f32.mrb[0].mxu0
    %1471 = vmatprep.mubr.bf16.mxu0 0
    %1472 = vmatmul.mubr.bf16.gmra.mrb[0].mxu0 %v991
    %v1473 = vpop.f32.mrb[0].mxu0
    %v1474 = vadd.f32 %v296, %v1473
    %v1475 = vpop.f32.mrb[0].mxu0
    %v1476 = vpop.f32.mrb[0].mxu0
    %v1477 = vadd.f32 %v296, %v1476
    %v1478 = vpop.f32.mrb[0].mxu0
    %1479 = vmatprep.mubr.bf16.mxu0 0
    %1480 = vmatmul.mubr.bf16.gmra.mrb[0].mxu0 %v994
    %v1481 = vpop.f32.mrb[0].mxu0
    %v1482 = vadd.f32 %v296, %v1481
    %v1483 = vpop.f32.mrb[0].mxu0
    %v1484 = vpop.f32.mrb[0].mxu0
    %v1485 = vadd.f32 %v296, %v1484
    %v1486 = vpop.f32.mrb[0].mxu0
    %1487 = vmatprep.mubr.bf16.mxu0 0
    %1488 = vmatmul.mubr.bf16.gmra.mrb[0].mxu0 %v997
    %v1489 = vpop.f32.mrb[0].mxu0
    %v1490 = vadd.f32 %v296, %v1489
    %v1491 = vpop.f32.mrb[0].mxu0
    %v1492 = vpop.f32.mrb[0].mxu0
    %v1493 = vadd.f32 %v296, %v1492
    %v1494 = vpop.f32.mrb[0].mxu0
    %1495 = vmatprep.mubr.bf16.mxu0 0
    %1496 = vmatmul.mubr.bf16.gmra.mrb[0].mxu0 %v1000
    %v1497 = vpop.f32.mrb[0].mxu0
    %v1498 = vadd.f32 %v296, %v1497
    %v1499 = vpop.f32.mrb[0].mxu0
    %v1500 = vpop.f32.mrb[0].mxu0
    %v1501 = vadd.f32 %v296, %v1500
    %v1502 = vpop.f32.mrb[0].mxu0
    %1503 = vmatprep.mubr.bf16.mxu0 0
    %1504 = vmatmul.mubr.bf16.gmra.mrb[0].mxu0 %v1003
    %v1505 = vpop.f32.mrb[0].mxu0
    %v1506 = vadd.f32 %v296, %v1505
    %v1507 = vpop.f32.mrb[0].mxu0
    %v1508 = vpop.f32.mrb[0].mxu0
    %v1509 = vadd.f32 %v296, %v1508
    %v1510 = vpop.f32.mrb[0].mxu0
    %1511 = vmatprep.mubr.bf16.mxu0 0
    %1512 = vmatmul.mubr.bf16.gmra.mrb[0].mxu0 %v1006
    %v1513 = vpop.f32.mrb[0].mxu0
    %v1514 = vadd.f32 %v296, %v1513
    %v1515 = vpop.f32.mrb[0].mxu0
    %v1516 = vpop.f32.mrb[0].mxu0
    %v1517 = vadd.f32 %v296, %v1516
    %v1518 = vpop.f32.mrb[0].mxu0
    %1519 = vmatprep.mubr.bf16.mxu0 0
    %1520 = vmatmul.mubr.bf16.gmra.mrb[0].mxu0 %v1009
    %v1521 = vpop.f32.mrb[0].mxu0
    %v1522 = vadd.f32 %v296, %v1521
    %v1523 = vpop.f32.mrb[0].mxu0
    %v1524 = vpop.f32.mrb[0].mxu0
    %v1525 = vadd.f32 %v296, %v1524
    %v1526 = vpop.f32.mrb[0].mxu0
    %1527 = vmatprep.mubr.bf16.mxu0 0
    %1528 = vmatmul.mubr.bf16.gmra.mrb[0].mxu0 %v1012
    %v1529 = vpop.f32.mrb[0].mxu0
    %v1530 = vadd.f32 %v296, %v1529
    %v1531 = vpop.f32.mrb[0].mxu0
    %v1532 = vpop.f32.mrb[0].mxu0
    %v1533 = vadd.f32 %v296, %v1532
    %v1534 = vpop.f32.mrb[0].mxu0
    %1535 = vmatprep.mubr.bf16.mxu0 0
    %1536 = vmatmul.mubr.bf16.gmra.mrb[0].mxu0 %v1015
    %v1537 = vpop.f32.mrb[0].mxu0
    %v1538 = vadd.f32 %v296, %v1537
    %v1539 = vpop.f32.mrb[0].mxu0
    %v1540 = vpop.f32.mrb[0].mxu0
    %v1541 = vadd.f32 %v296, %v1540
    %v1542 = vpop.f32.mrb[0].mxu0
    %1543 = vmatprep.mubr.bf16.mxu0 0
    %1544 = vmatmul.mubr.bf16.gmra.mrb[0].mxu0 %v1018
    %v1545 = vpop.f32.mrb[0].mxu0
    %v1546 = vadd.f32 %v296, %v1545
    %v1547 = vpop.f32.mrb[0].mxu0
    %v1548 = vpop.f32.mrb[0].mxu0
    %v1549 = vadd.f32 %v296, %v1548
    %v1550 = vpop.f32.mrb[0].mxu0
    %1551 = vmatprep.mubr.bf16.mxu0 0
    %1552 = vmatmul.mubr.bf16.gmra.mrb[0].mxu0 %v1021
    %v1553 = vpop.f32.mrb[0].mxu0
    %v1554 = vadd.f32 %v296, %v1553
    %v1555 = vpop.f32.mrb[0].mxu0
    %v1556 = vpop.f32.mrb[0].mxu0
    %v1557 = vadd.f32 %v296, %v1556
    %v1558 = vpop.f32.mrb[0].mxu0
    %1559 = vmatprep.mubr.bf16.mxu0 0
    %1560 = vmatmul.mubr.bf16.gmra.mrb[0].mxu0 %v1024
    %v1561 = vpop.f32.mrb[0].mxu0
    %v1562 = vadd.f32 %v296, %v1561
    %v1563 = vpop.f32.mrb[0].mxu0
    %v1564 = vpop.f32.mrb[0].mxu0
    %v1565 = vadd.f32 %v296, %v1564
    %v1566 = vpop.f32.mrb[0].mxu0
    %1567 = vmatprep.mubr.bf16.mxu0 0
    %1568 = vmatmul.mubr.bf16.gmra.mrb[0].mxu0 %v1027
    %v1569 = vpop.f32.mrb[0].mxu0
    %v1570 = vadd.f32 %v296, %v1569
    %v1571 = vpop.f32.mrb[0].mxu0
    %v1572 = vpop.f32.mrb[0].mxu0
    %v1573 = vadd.f32 %v296, %v1572
    %v1574 = vpop.f32.mrb[0].mxu0
    %1575 = vmatprep.mubr.bf16.mxu0 0
    %1576 = vmatmul.mubr.bf16.gmra.mrb[0].mxu0 %v1030
    %v1577 = vpop.f32.mrb[0].mxu0
    %v1578 = vadd.f32 %v296, %v1577
    %v1579 = vpop.f32.mrb[0].mxu0
    %v1580 = vpop.f32.mrb[0].mxu0
    %v1581 = vadd.f32 %v296, %v1580
    %v1582 = vpop.f32.mrb[0].mxu0
    %1583 = vmatprep.mubr.bf16.mxu0 0
    %1584 = vmatmul.mubr.bf16.gmra.mrb[0].mxu0 %v1033
    %v1585 = vpop.f32.mrb[0].mxu0
    %v1586 = vadd.f32 %v296, %v1585
    %v1587 = vpop.f32.mrb[0].mxu0
    %v1588 = vpop.f32.mrb[0].mxu0
    %v1589 = vadd.f32 %v296, %v1588
    %v1590 = vpop.f32.mrb[0].mxu0
    %1591 = vmatprep.mubr.bf16.mxu0 0
    %1592 = vmatmul.mubr.bf16.gmra.mrb[0].mxu0 %v1036
    %v1593 = vpop.f32.mrb[0].mxu0
    %v1594 = vadd.f32 %v296, %v1593
    %v1595 = vpop.f32.mrb[0].mxu0
    %v1596 = vpop.f32.mrb[0].mxu0
    %v1597 = vadd.f32 %v296, %v1596
    %v1598 = vpop.f32.mrb[0].mxu0
    %1599 = vmatprep.mubr.bf16.mxu0 0
    %1600 = vmatmul.mubr.bf16.gmra.mrb[0].mxu0 %v1039
    %v1601 = vpop.f32.mrb[0].mxu0
    %v1602 = vadd.f32 %v296, %v1601
    %v1603 = vpop.f32.mrb[0].mxu0
    %v1604 = vpop.f32.mrb[0].mxu0
    %v1605 = vadd.f32 %v296, %v1604
    %v1606 = vpop.f32.mrb[0].mxu0
    %1607 = vmatprep.mubr.bf16.mxu0 0
    %1608 = vmatmul.mubr.bf16.gmra.mrb[0].mxu0 %v1042
    %v1609 = vpop.f32.mrb[0].mxu0
    %v1610 = vadd.f32 %v296, %v1609
    %v1611 = vpop.f32.mrb[0].mxu0
    %v1612 = vpop.f32.mrb[0].mxu0
    %v1613 = vadd.f32 %v296, %v1612
    %v1614 = vpop.f32.mrb[0].mxu0
    %1615 = vmatprep.mubr.bf16.mxu0 0
    %1616 = vmatmul.mubr.bf16.gmra.mrb[0].mxu0 %v1045
    %v1617 = vpop.f32.mrb[0].mxu0
    %v1618 = vadd.f32 %v296, %v1617
    %v1619 = vpop.f32.mrb[0].mxu0
    %v1620 = vpop.f32.mrb[0].mxu0
    %v1621 = vadd.f32 %v296, %v1620
    %v1622 = vpop.f32.mrb[0].mxu0
    %1623 = vmatprep.mubr.bf16.mxu0 0
    %1624 = vmatmul.mubr.bf16.gmra.mrb[0].mxu0 %v1048
    %v1625 = vpop.f32.mrb[0].mxu0
    %v1626 = vadd.f32 %v296, %v1625
    %v1627 = vpop.f32.mrb[0].mxu0
    %v1628 = vpop.f32.mrb[0].mxu0
    %v1629 = vadd.f32 %v296, %v1628
    %v1630 = vpop.f32.mrb[0].mxu0
    %1631 = vmatprep.mubr.bf16.mxu0 0
    %1632 = vmatmul.mubr.bf16.gmra.mrb[0].mxu0 %v1051
    %v1633 = vpop.f32.mrb[0].mxu0
    %v1634 = vadd.f32 %v296, %v1633
    %v1635 = vpop.f32.mrb[0].mxu0
    %v1636 = vpop.f32.mrb[0].mxu0
    %v1637 = vadd.f32 %v296, %v1636
    %v1638 = vpop.f32.mrb[0].mxu0
    %1639 = vmatprep.mubr.bf16.mxu0 0
    %1640 = vmatmul.mubr.bf16.gmra.mrb[0].mxu0 %v1054
    %v1641 = vpop.f32.mrb[0].mxu0
    %v1642 = vadd.f32 %v296, %v1641
    %v1643 = vpop.f32.mrb[0].mxu0
    %v1644 = vpop.f32.mrb[0].mxu0
    %v1645 = vadd.f32 %v296, %v1644
    %v1646 = vpop.f32.mrb[0].mxu0
    %1647 = vmatprep.mubr.bf16.mxu0 0
    %1648 = vmatmul.mubr.bf16.gmra.mrb[0].mxu0 %v1057
    %v1649 = vpop.f32.mrb[0].mxu0
    %v1650 = vadd.f32 %v296, %v1649
    %v1651 = vpop.f32.mrb[0].mxu0
    %v1652 = vpop.f32.mrb[0].mxu0
    %v1653 = vadd.f32 %v296, %v1652
    %v1654 = vpop.f32.mrb[0].mxu0
    %1655 = vmatprep.mubr.bf16.mxu0 0
    %1656 = vmatmul.mubr.bf16.gmra.mrb[0].mxu0 %v1060
    %v1657 = vpop.f32.mrb[0].mxu0
    %v1658 = vadd.f32 %v296, %v1657
    %v1659 = vpop.f32.mrb[0].mxu0
    %v1660 = vpop.f32.mrb[0].mxu0
    %v1661 = vadd.f32 %v296, %v1660
    %v1662 = vpop.f32.mrb[0].mxu0
    %1663 = vmatprep.mubr.bf16.mxu0 0
    %1664 = vmatmul.mubr.bf16.gmra.mrb[0].mxu0 %v1063
    %v1665 = vpop.f32.mrb[0].mxu0
    %v1666 = vadd.f32 %v296, %v1665
    %v1667 = vpop.f32.mrb[0].mxu0
    %v1668 = vpop.f32.mrb[0].mxu0
    %v1669 = vadd.f32 %v296, %v1668
    %v1670 = vpop.f32.mrb[0].mxu0
    %1671 = vmatprep.mubr.bf16.mxu0 0
    %1672 = vmatmul.mubr.bf16.gmra.mrb[0].mxu0 %v1066
    %v1673 = vpop.f32.mrb[0].mxu0
    %v1674 = vadd.f32 %v296, %v1673
    %v1675 = vpop.f32.mrb[0].mxu0
    %v1676 = vpop.f32.mrb[0].mxu0
    %v1677 = vadd.f32 %v296, %v1676
    %v1678 = vpop.f32.mrb[0].mxu0
    %1679 = vmatprep.mubr.bf16.mxu0 0
    %1680 = vmatmul.mubr.bf16.gmra.mrb[0].mxu0 %v1069
    %v1681 = vpop.f32.mrb[0].mxu0
    %v1682 = vadd.f32 %v296, %v1681
    %v1683 = vpop.f32.mrb[0].mxu0
    %v1684 = vpop.f32.mrb[0].mxu0
    %v1685 = vadd.f32 %v296, %v1684
    %v1686 = vpop.f32.mrb[0].mxu0
    %1687 = vmatprep.mubr.bf16.mxu0 0
    %1688 = vmatmul.mubr.bf16.gmra.mrb[0].mxu0 %v1072
    %v1689 = vpop.f32.mrb[0].mxu0
    %v1690 = vadd.f32 %v296, %v1689
    %v1691 = vpop.f32.mrb[0].mxu0
    %v1692 = vpop.f32.mrb[0].mxu0
    %v1693 = vadd.f32 %v296, %v1692
    %v1694 = vpop.f32.mrb[0].mxu0
    %1695 = vmatprep.mubr.bf16.mxu0 0
    %1696 = vmatmul.mubr.bf16.gmra.mrb[0].mxu0 %v1075
    %v1697 = vpop.f32.mrb[0].mxu0
    %v1698 = vadd.f32 %v296, %v1697
    %v1699 = vpop.f32.mrb[0].mxu0
    %v1700 = vpop.f32.mrb[0].mxu0
    %v1701 = vadd.f32 %v296, %v1700
    %v1702 = vpop.f32.mrb[0].mxu0
    %1703 = vmatprep.mubr.bf16.mxu0 0
    %1704 = vmatmul.mubr.bf16.gmra.mrb[0].mxu0 %v1078
    %v1705 = vpop.f32.mrb[0].mxu0
    %v1706 = vadd.f32 %v296, %v1705
    %v1707 = vpop.f32.mrb[0].mxu0
    %v1708 = vpop.f32.mrb[0].mxu0
    %v1709 = vadd.f32 %v296, %v1708
    %v1710 = vpop.f32.mrb[0].mxu0
    %1711 = vmatprep.mubr.bf16.mxu0 0
    %1712 = vmatmul.mubr.bf16.gmra.mrb[0].mxu0 %v1081
    %v1713 = vpop.f32.mrb[0].mxu0
    %v1714 = vadd.f32 %v296, %v1713
    %v1715 = vpop.f32.mrb[0].mxu0
    %v1716 = vpop.f32.mrb[0].mxu0
    %v1717 = vadd.f32 %v296, %v1716
    %v1718 = vpop.f32.mrb[0].mxu0
    %1719 = vmatprep.mubr.bf16.mxu0 0
    %1720 = vmatmul.mubr.bf16.gmra.mrb[0].mxu0 %v1084
    %v1721 = vpop.f32.mrb[0].mxu0
    %v1722 = vadd.f32 %v296, %v1721
    %v1723 = vpop.f32.mrb[0].mxu0
    %v1724 = vpop.f32.mrb[0].mxu0
    %v1725 = vadd.f32 %v296, %v1724
    %v1726 = vpop.f32.mrb[0].mxu0
    %1727 = vmatprep.mubr.bf16.mxu0 0
    %1728 = vmatmul.mubr.bf16.gmra.mrb[0].mxu0 %v1087
    %v1729 = vpop.f32.mrb[0].mxu0
    %v1730 = vadd.f32 %v296, %v1729
    %v1731 = vpop.f32.mrb[0].mxu0
    %v1732 = vpop.f32.mrb[0].mxu0
    %v1733 = vadd.f32 %v296, %v1732
    %v1734 = vpop.f32.mrb[0].mxu0
    %1735 = vmatprep.mubr.bf16.mxu0 0
    %1736 = vmatmul.mubr.bf16.gmra.mrb[0].mxu0 %v1090
    %v1737 = vpop.f32.mrb[0].mxu0
    %v1738 = vadd.f32 %v296, %v1737
    %v1739 = vpop.f32.mrb[0].mxu0
    %v1740 = vpop.f32.mrb[0].mxu0
    %v1741 = vadd.f32 %v296, %v1740
    %v1742 = vpop.f32.mrb[0].mxu0
    %1743 = vmatprep.mubr.bf16.mxu0 0
    %1744 = vmatmul.mubr.bf16.gmra.mrb[0].mxu0 %v1093
    %v1745 = vpop.f32.mrb[0].mxu0
    %v1746 = vadd.f32 %v296, %v1745
    %v1747 = vpop.f32.mrb[0].mxu0
    %v1748 = vpop.f32.mrb[0].mxu0
    %v1749 = vadd.f32 %v296, %v1748
    %v1750 = vpop.f32.mrb[0].mxu0
    %1751 = vmatprep.mubr.bf16.mxu0 0
    %1752 = vmatmul.mubr.bf16.gmra.mrb[0].mxu0 %v1096
    %v1753 = vpop.f32.mrb[0].mxu0
    %v1754 = vadd.f32 %v296, %v1753
    %v1755 = vpop.f32.mrb[0].mxu0
    %v1756 = vpop.f32.mrb[0].mxu0
    %v1757 = vadd.f32 %v296, %v1756
    %v1758 = vpop.f32.mrb[0].mxu0
    %1759 = vmatprep.mubr.bf16.mxu0 0
    %1760 = vmatmul.mubr.bf16.gmra.mrb[0].mxu0 %v1099
    %v1761 = vpop.f32.mrb[0].mxu0
    %v1762 = vadd.f32 %v296, %v1761
    %v1763 = vpop.f32.mrb[0].mxu0
    %v1764 = vpop.f32.mrb[0].mxu0
    %v1765 = vadd.f32 %v296, %v1764
    %v1766 = vpop.f32.mrb[0].mxu0
    %1767 = vmatprep.mubr.bf16.mxu0 0
    %1768 = vmatmul.mubr.bf16.gmra.mrb[0].mxu0 %v1102
    %v1769 = vpop.f32.mrb[0].mxu0
    %v1770 = vadd.f32 %v296, %v1769
    %v1771 = vpop.f32.mrb[0].mxu0
    %v1772 = vpop.f32.mrb[0].mxu0
    %v1773 = vadd.f32 %v296, %v1772
    %v1774 = vpop.f32.mrb[0].mxu0
    %1775 = vmatprep.mubr.bf16.mxu0 0
    %1776 = vmatmul.mubr.bf16.gmra.mrb[0].mxu0 %v1105
    %v1777 = vpop.f32.mrb[0].mxu0
    %v1778 = vadd.f32 %v296, %v1777
    %v1779 = vpop.f32.mrb[0].mxu0
    %v1780 = vpop.f32.mrb[0].mxu0
    %v1781 = vadd.f32 %v296, %v1780
    %v1782 = vpop.f32.mrb[0].mxu0
    %1783 = vmatprep.mubr.bf16.mxu0 0
    %1784 = vmatmul.mubr.bf16.gmra.mrb[0].mxu0 %v1108
    %v1785 = vpop.f32.mrb[0].mxu0
    %v1786 = vadd.f32 %v296, %v1785
    %v1787 = vpop.f32.mrb[0].mxu0
    %v1788 = vpop.f32.mrb[0].mxu0
    %v1789 = vadd.f32 %v296, %v1788
    %v1790 = vpop.f32.mrb[0].mxu0
    %1791 = vmatprep.mubr.bf16.mxu0 0
    %1792 = vmatmul.mubr.bf16.gmra.mrb[0].mxu0 %v1111
    %v1793 = vpop.f32.mrb[0].mxu0
    %v1794 = vadd.f32 %v296, %v1793
    %v1795 = vpop.f32.mrb[0].mxu0
    %v1796 = vpop.f32.mrb[0].mxu0
    %v1797 = vadd.f32 %v296, %v1796
    %v1798 = vpop.f32.mrb[0].mxu0
    %1799 = vmatprep.mubr.bf16.mxu0 0
    %1800 = vmatmul.mubr.bf16.gmra.mrb[0].mxu0 %v1114
    %v1801 = vpop.f32.mrb[0].mxu0
    %v1802 = vadd.f32 %v296, %v1801
    %v1803 = vpop.f32.mrb[0].mxu0
    %v1804 = vpop.f32.mrb[0].mxu0
    %v1805 = vadd.f32 %v296, %v1804
    %v1806 = vpop.f32.mrb[0].mxu0
    %1807 = vmatprep.mubr.bf16.mxu0 0
    %1808 = vmatmul.mubr.bf16.gmra.mrb[0].mxu0 %v1117
    %v1809 = vpop.f32.mrb[0].mxu0
    %v1810 = vadd.f32 %v296, %v1809
    %v1811 = vpop.f32.mrb[0].mxu0
    %v1812 = vpop.f32.mrb[0].mxu0
    %v1813 = vadd.f32 %v296, %v1812
    %v1814 = vpop.f32.mrb[0].mxu0
    %1815 = vmatprep.mubr.bf16.mxu0 0
    %1816 = vmatmul.mubr.bf16.gmra.mrb[0].mxu0 %v1120
    %v1817 = vpop.f32.mrb[0].mxu0
    %v1818 = vadd.f32 %v296, %v1817
    %v1819 = vpop.f32.mrb[0].mxu0
    %v1820 = vpop.f32.mrb[0].mxu0
    %v1821 = vadd.f32 %v296, %v1820
    %v1822 = vpop.f32.mrb[0].mxu0
    %1823 = vmatprep.mubr.bf16.mxu0 0
    %1824 = vmatmul.mubr.bf16.gmra.mrb[0].mxu0 %v1123
    %v1825 = vpop.f32.mrb[0].mxu0
    %v1826 = vadd.f32 %v296, %v1825
    %v1827 = vpop.f32.mrb[0].mxu0
    %v1828 = vpop.f32.mrb[0].mxu0
    %v1829 = vadd.f32 %v296, %v1828
    %v1830 = vpop.f32.mrb[0].mxu0
    %1831 = vmatprep.mubr.bf16.mxu0 0
    %1832 = vmatmul.mubr.bf16.gmra.mrb[0].mxu0 %v1126
    %v1833 = vpop.f32.mrb[0].mxu0
    %v1834 = vadd.f32 %v296, %v1833
    %v1835 = vpop.f32.mrb[0].mxu0
    %v1836 = vpop.f32.mrb[0].mxu0
    %v1837 = vadd.f32 %v296, %v1836
    %v1838 = vpop.f32.mrb[0].mxu0
    %1839 = vmatprep.mubr.bf16.mxu0 0
    %1840 = vmatmul.mubr.bf16.gmra.mrb[0].mxu0 %v1129
    %v1841 = vpop.f32.mrb[0].mxu0
    %v1842 = vadd.f32 %v296, %v1841
    %v1843 = vpop.f32.mrb[0].mxu0
    %v1844 = vpop.f32.mrb[0].mxu0
    %v1845 = vadd.f32 %v296, %v1844
    %v1846 = vpop.f32.mrb[0].mxu0
    %1847 = vmatprep.mubr.bf16.mxu0 0
    %1848 = vmatmul.mubr.bf16.gmra.mrb[0].mxu0 %v1132
    %v1849 = vpop.f32.mrb[0].mxu0
    %v1850 = vadd.f32 %v296, %v1849
    %v1851 = vpop.f32.mrb[0].mxu0
    %v1852 = vpop.f32.mrb[0].mxu0
    %v1853 = vadd.f32 %v296, %v1852
    %v1854 = vpop.f32.mrb[0].mxu0
    %1855 = vmatprep.mubr.bf16.mxu0 0
    %1856 = vmatmul.mubr.bf16.gmra.mrb[0].mxu0 %v1135
    %v1857 = vpop.f32.mrb[0].mxu0
    %v1858 = vadd.f32 %v296, %v1857
    %v1859 = vpop.f32.mrb[0].mxu0
    %v1860 = vpop.f32.mrb[0].mxu0
    %v1861 = vadd.f32 %v296, %v1860
    %v1862 = vpop.f32.mrb[0].mxu0
    %1863 = vmatprep.mubr.bf16.mxu0 0
    %1864 = vmatmul.mubr.bf16.gmra.mrb[0].mxu0 %v1138
    %v1865 = vpop.f32.mrb[0].mxu0
    %v1866 = vadd.f32 %v296, %v1865
    %v1867 = vpop.f32.mrb[0].mxu0
    %v1868 = vpop.f32.mrb[0].mxu0
    %v1869 = vadd.f32 %v296, %v1868
    %v1870 = vpop.f32.mrb[0].mxu0
    %1871 = vmatprep.mubr.bf16.mxu0 0
    %1872 = vmatmul.mubr.bf16.gmra.mrb[0].mxu0 %v1141
    %v1873 = vpop.f32.mrb[0].mxu0
    %v1874 = vadd.f32 %v296, %v1873
    %v1875 = vpop.f32.mrb[0].mxu0
    %v1876 = vpop.f32.mrb[0].mxu0
    %v1877 = vadd.f32 %v296, %v1876
    %v1878 = vpop.f32.mrb[0].mxu0
    %1879 = vmatprep.mubr.bf16.mxu0 0
    %1880 = vmatmul.mubr.bf16.gmra.mrb[0].mxu0 %v1144
    %v1881 = vpop.f32.mrb[0].mxu0
    %v1882 = vadd.f32 %v296, %v1881
    %v1883 = vpop.f32.mrb[0].mxu0
    %v1884 = vpop.f32.mrb[0].mxu0
    %v1885 = vadd.f32 %v296, %v1884
    %v1886 = vpop.f32.mrb[0].mxu0
    %1887 = vmatprep.mubr.bf16.mxu0 0
    %1888 = vmatmul.mubr.bf16.gmra.mrb[0].mxu0 %v1147
    %v1889 = vpop.f32.mrb[0].mxu0
    %v1890 = vadd.f32 %v296, %v1889
    %v1891 = vpop.f32.mrb[0].mxu0
    %v1892 = vpop.f32.mrb[0].mxu0
    %v1893 = vadd.f32 %v296, %v1892
    %v1894 = vpop.f32.mrb[0].mxu0
    %1895 = vmatprep.mubr.bf16.mxu0 0
    %1896 = vmatmul.mubr.bf16.gmra.mrb[0].mxu0 %v1150
    %v1897 = vpop.f32.mrb[0].mxu0
    %v1898 = vadd.f32 %v296, %v1897
    %v1899 = vpop.f32.mrb[0].mxu0
    %v1900 = vpop.f32.mrb[0].mxu0
    %v1901 = vadd.f32 %v296, %v1900
    %v1902 = vpop.f32.mrb[0].mxu0
    %1903 = vmatprep.mubr.bf16.mxu0 0
    %1904 = vmatmul.mubr.bf16.gmra.mrb[0].mxu0 %v1153
    %v1905 = vpop.f32.mrb[0].mxu0
    %v1906 = vadd.f32 %v296, %v1905
    %v1907 = vpop.f32.mrb[0].mxu0
    %v1908 = vpop.f32.mrb[0].mxu0
    %v1909 = vadd.f32 %v296, %v1908
    %v1910 = vpop.f32.mrb[0].mxu0
    %1911 = vmatprep.mubr.bf16.mxu0 0
    %1912 = vmatmul.mubr.bf16.gmra.mrb[0].mxu0 %v1156
    %v1913 = vpop.f32.mrb[0].mxu0
    %v1914 = vadd.f32 %v296, %v1913
    %v1915 = vpop.f32.mrb[0].mxu0
    %v1916 = vpop.f32.mrb[0].mxu0
    %v1917 = vadd.f32 %v296, %v1916
    %v1918 = vpop.f32.mrb[0].mxu0
    %1919 = vmatprep.mubr.bf16.mxu0 0
    %1920 = vmatmul.mubr.bf16.gmra.mrb[0].mxu0 %v1159
    %v1921 = vpop.f32.mrb[0].mxu0
    %v1922 = vadd.f32 %v296, %v1921
    %v1923 = vpop.f32.mrb[0].mxu0
    %v1924 = vpop.f32.mrb[0].mxu0
    %v1925 = vadd.f32 %v296, %v1924
    %v1926 = vpop.f32.mrb[0].mxu0
    %1927 = vmatprep.mubr.bf16.mxu0 0
    %1928 = vmatmul.mubr.bf16.gmra.mrb[0].mxu0 %v1162
    %v1929 = vpop.f32.mrb[0].mxu0
    %v1930 = vadd.f32 %v296, %v1929
    %v1931 = vpop.f32.mrb[0].mxu0
    %v1932 = vpop.f32.mrb[0].mxu0
    %v1933 = vadd.f32 %v296, %v1932
    %v1934 = vpop.f32.mrb[0].mxu0
    %1935 = vmatprep.mubr.bf16.mxu0 0
    %1936 = vmatmul.mubr.bf16.gmra.mrb[0].mxu0 %v1165
    %v1937 = vpop.f32.mrb[0].mxu0
    %v1938 = vadd.f32 %v296, %v1937
    %v1939 = vpop.f32.mrb[0].mxu0
    %v1940 = vpop.f32.mrb[0].mxu0
    %v1941 = vadd.f32 %v296, %v1940
    %v1942 = vpop.f32.mrb[0].mxu0
    %1943 = vmatprep.mubr.bf16.mxu0 0
    %1944 = vmatmul.mubr.bf16.gmra.mrb[0].mxu0 %v1168
    %v1945 = vpop.f32.mrb[0].mxu0
    %v1946 = vadd.f32 %v296, %v1945
    %v1947 = vpop.f32.mrb[0].mxu0
    %v1948 = vpop.f32.mrb[0].mxu0
    %v1949 = vadd.f32 %v296, %v1948
    %v1950 = vpop.f32.mrb[0].mxu0
    %1951 = vmatprep.mubr.bf16.mxu0 0
    %1952 = vmatmul.mubr.bf16.gmra.mrb[0].mxu0 %v1171
    %v1953 = vpop.f32.mrb[0].mxu0
    %v1954 = vadd.f32 %v296, %v1953
    %v1955 = vpop.f32.mrb[0].mxu0
    %v1956 = vpop.f32.mrb[0].mxu0
    %v1957 = vadd.f32 %v296, %v1956
    %v1958 = vpop.f32.mrb[0].mxu0
    %1959 = vmatprep.mubr.bf16.mxu0 0
    %1960 = vmatmul.mubr.bf16.gmra.mrb[0].mxu0 %v1174
    %v1961 = vpop.f32.mrb[0].mxu0
    %v1962 = vadd.f32 %v296, %v1961
    %v1963 = vpop.f32.mrb[0].mxu0
    %v1964 = vpop.f32.mrb[0].mxu0
    %v1965 = vadd.f32 %v296, %v1964
    %v1966 = vpop.f32.mrb[0].mxu0
    %1967 = vmatprep.mubr.bf16.mxu0 0
    %1968 = vmatmul.mubr.bf16.gmra.mrb[0].mxu0 %v1177
    %v1969 = vpop.f32.mrb[0].mxu0
    %v1970 = vadd.f32 %v296, %v1969
    %v1971 = vpop.f32.mrb[0].mxu0
    %v1972 = vpop.f32.mrb[0].mxu0
    %v1973 = vadd.f32 %v296, %v1972
    %v1974 = vpop.f32.mrb[0].mxu0
    %1975 = vmatprep.mubr.bf16.mxu0 0
    %1976 = vmatmul.mubr.bf16.gmra.mrb[0].mxu0 %v1180
    %v1977 = vpop.f32.mrb[0].mxu0
    %v1978 = vadd.f32 %v296, %v1977
    %v1979 = vpop.f32.mrb[0].mxu0
    %v1980 = vpop.f32.mrb[0].mxu0
    %v1981 = vadd.f32 %v296, %v1980
    %v1982 = vpop.f32.mrb[0].mxu0
    %1983 = vmatprep.mubr.bf16.mxu0 0
    %1984 = vmatmul.mubr.bf16.gmra.mrb[0].mxu0 %v1183
    %v1985 = vpop.f32.mrb[0].mxu0
    %v1986 = vadd.f32 %v296, %v1985
    %v1987 = vpop.f32.mrb[0].mxu0
    %v1988 = vpop.f32.mrb[0].mxu0
    %v1989 = vadd.f32 %v296, %v1988
    %v1990 = vpop.f32.mrb[0].mxu0
    %1991 = vmatprep.mubr.bf16.mxu0 0
    %1992 = vmatmul.mubr.bf16.gmra.mrb[0].mxu0 %v1186
    %v1993 = vpop.f32.mrb[0].mxu0
    %v1994 = vadd.f32 %v296, %v1993
    %v1995 = vpop.f32.mrb[0].mxu0
    %v1996 = vpop.f32.mrb[0].mxu0
    %v1997 = vadd.f32 %v296, %v1996
    %v1998 = vpop.f32.mrb[0].mxu0
    %1999 = vmatprep.mubr.bf16.mxu0 0
    %2000 = vmatmul.mubr.bf16.gmra.mrb[0].mxu0 %v1189
    %v2001 = vpop.f32.mrb[0].mxu0
    %v2002 = vadd.f32 %v296, %v2001
    %v2003 = vpop.f32.mrb[0].mxu0
    %v2004 = vpop.f32.mrb[0].mxu0
    %v2005 = vadd.f32 %v296, %v2004
    %v2006 = vpop.f32.mrb[0].mxu0
    %2007 = vmatprep.mubr.bf16.mxu0 0
    %2008 = vmatmul.mubr.bf16.gmra.mrb[0].mxu0 %v1192
    %v2009 = vpop.f32.mrb[0].mxu0
    %v2010 = vadd.f32 %v296, %v2009
    %v2011 = vpop.f32.mrb[0].mxu0
    %v2012 = vpop.f32.mrb[0].mxu0
    %v2013 = vadd.f32 %v296, %v2012
    %v2014 = vpop.f32.mrb[0].mxu0
    %2015 = vmatprep.mubr.bf16.mxu0 0
    %2016 = vmatmul.mubr.bf16.gmra.mrb[0].mxu0 %v1195
    %v2017 = vpop.f32.mrb[0].mxu0
    %v2018 = vadd.f32 %v296, %v2017
    %v2019 = vpop.f32.mrb[0].mxu0
    %v2020 = vpop.f32.mrb[0].mxu0
    %v2021 = vadd.f32 %v296, %v2020
    %v2022 = vpop.f32.mrb[0].mxu0
    %2023 = vmatprep.mubr.bf16.mxu0 0
    %2024 = vmatmul.mubr.bf16.gmra.mrb[0].mxu0 %v1198
    %v2025 = vpop.f32.mrb[0].mxu0
    %v2026 = vadd.f32 %v296, %v2025
    %v2027 = vpop.f32.mrb[0].mxu0
    %v2028 = vpop.f32.mrb[0].mxu0
    %v2029 = vadd.f32 %v296, %v2028
    %v2030 = vpop.f32.mrb[0].mxu0
    %2031 = vmatprep.mubr.bf16.mxu0 0
    %2032 = vmatmul.mubr.bf16.gmra.mrb[0].mxu0 %v1201
    %v2033 = vpop.f32.mrb[0].mxu0
    %v2034 = vadd.f32 %v296, %v2033
    %v2035 = vpop.f32.mrb[0].mxu0
    %v2036 = vpop.f32.mrb[0].mxu0
    %v2037 = vadd.f32 %v296, %v2036
    %v2038 = vpop.f32.mrb[0].mxu0
    %2039 = vmatprep.mubr.bf16.mxu0 0
    %2040 = vmatmul.mubr.bf16.gmra.mrb[0].mxu0 %v1204
    %v2041 = vpop.f32.mrb[0].mxu0
    %v2042 = vadd.f32 %v296, %v2041
    %v2043 = vpop.f32.mrb[0].mxu0
    %v2044 = vpop.f32.mrb[0].mxu0
    %v2045 = vadd.f32 %v296, %v2044
    %v2046 = vpop.f32.mrb[0].mxu0
    %2047 = vmatprep.mubr.bf16.mxu0 0
    %2048 = vmatmul.mubr.bf16.gmra.mrb[0].mxu0 %v1207
    %v2049 = vpop.f32.mrb[0].mxu0
    %v2050 = vadd.f32 %v296, %v2049
    %v2051 = vpop.f32.mrb[0].mxu0
    %v2052 = vpop.f32.mrb[0].mxu0
    %v2053 = vadd.f32 %v296, %v2052
    %v2054 = vpop.f32.mrb[0].mxu0
    %2055 = vmatprep.mubr.bf16.mxu0 0
    %2056 = vmatmul.mubr.bf16.gmra.mrb[0].mxu0 %v1210
    %v2057 = vpop.f32.mrb[0].mxu0
    %v2058 = vadd.f32 %v296, %v2057
    %v2059 = vpop.f32.mrb[0].mxu0
    %v2060 = vpop.f32.mrb[0].mxu0
    %v2061 = vadd.f32 %v296, %v2060
    %v2062 = vpop.f32.mrb[0].mxu0
    %2063 = vmatprep.mubr.bf16.mxu0 0
    %2064 = vmatmul.mubr.bf16.gmra.mrb[0].mxu0 %v1213
    %v2065 = vpop.f32.mrb[0].mxu0
    %v2066 = vadd.f32 %v296, %v2065
    %v2067 = vpop.f32.mrb[0].mxu0
    %v2068 = vpop.f32.mrb[0].mxu0
    %v2069 = vadd.f32 %v296, %v2068
    %v2070 = vpop.f32.mrb[0].mxu0
    %2071 = vmatprep.mubr.bf16.mxu0 0
    %2072 = vmatmul.mubr.bf16.gmra.mrb[0].mxu0 %v1216
    %v2073 = vpop.f32.mrb[0].mxu0
    %v2074 = vadd.f32 %v296, %v2073
    %v2075 = vpop.f32.mrb[0].mxu0
    %v2076 = vpop.f32.mrb[0].mxu0
    %v2077 = vadd.f32 %v296, %v2076
    %v2078 = vpop.f32.mrb[0].mxu0
    %2079 = vmatprep.mubr.bf16.mxu0 0
    %2080 = vmatmul.mubr.bf16.gmra.mrb[0].mxu0 %v1219
    %v2081 = vpop.f32.mrb[0].mxu0
    %v2082 = vadd.f32 %v296, %v2081
    %v2083 = vpop.f32.mrb[0].mxu0
    %v2084 = vpop.f32.mrb[0].mxu0
    %v2085 = vadd.f32 %v296, %v2084
    %v2086 = vpop.f32.mrb[0].mxu0
    %2087 = vmatprep.mubr.bf16.mxu0 0
    %2088 = vmatmul.mubr.bf16.gmra.mrb[0].mxu0 %v1222
    %v2089 = vpop.f32.mrb[0].mxu0
    %v2090 = vadd.f32 %v296, %v2089
    %v2091 = vpop.f32.mrb[0].mxu0
    %v2092 = vpop.f32.mrb[0].mxu0
    %v2093 = vadd.f32 %v296, %v2092
    %v2094 = vpop.f32.mrb[0].mxu0
    %2095 = vmatprep.mubr.bf16.mxu0 0
    %2096 = vmatmul.mubr.bf16.gmra.mrb[0].mxu0 %v1225
    %v2097 = vpop.f32.mrb[0].mxu0
    %v2098 = vadd.f32 %v296, %v2097
    %v2099 = vpop.f32.mrb[0].mxu0
    %v2100 = vpop.f32.mrb[0].mxu0
    %v2101 = vadd.f32 %v296, %v2100
    %v2102 = vpop.f32.mrb[0].mxu0
    %2103 = vmatprep.mubr.bf16.mxu0 0
    %2104 = vmatmul.mubr.bf16.gmra.mrb[0].mxu0 %v1228
    %v2105 = vpop.f32.mrb[0].mxu0
    %v2106 = vadd.f32 %v296, %v2105
    %v2107 = vpop.f32.mrb[0].mxu0
    %v2108 = vpop.f32.mrb[0].mxu0
    %v2109 = vadd.f32 %v296, %v2108
    %v2110 = vpop.f32.mrb[0].mxu0
    %2111 = vmatprep.mubr.bf16.mxu0 0
    %2112 = vmatmul.mubr.bf16.gmra.mrb[0].mxu0 %v1231
    %v2113 = vpop.f32.mrb[0].mxu0
    %v2114 = vadd.f32 %v296, %v2113
    %v2115 = vpop.f32.mrb[0].mxu0
    %v2116 = vpop.f32.mrb[0].mxu0
    %v2117 = vadd.f32 %v296, %v2116
    %v2118 = vpop.f32.mrb[0].mxu0
    %2119 = vmatprep.mubr.bf16.mxu0 0
    %2120 = vmatmul.mubr.bf16.gmra.mrb[0].mxu0 %v1234
    %v2121 = vpop.f32.mrb[0].mxu0
    %v2122 = vadd.f32 %v296, %v2121
    %v2123 = vpop.f32.mrb[0].mxu0
    %v2124 = vpop.f32.mrb[0].mxu0
    %v2125 = vadd.f32 %v296, %v2124
    %v2126 = vpop.f32.mrb[0].mxu0
    %2127 = vmatprep.mubr.bf16.mxu0 0
    %2128 = vmatmul.mubr.bf16.gmra.mrb[0].mxu0 %v1237
    %v2129 = vpop.f32.mrb[0].mxu0
    %v2130 = vadd.f32 %v296, %v2129
    %v2131 = vpop.f32.mrb[0].mxu0
    %v2132 = vpop.f32.mrb[0].mxu0
    %v2133 = vadd.f32 %v296, %v2132
    %v2134 = vpop.f32.mrb[0].mxu0
    %2135 = vmatprep.mubr.bf16.mxu0 0
    %2136 = vmatmul.mubr.bf16.gmra.mrb[0].mxu0 %v1240
    %v2137 = vpop.f32.mrb[0].mxu0
    %v2138 = vadd.f32 %v296, %v2137
    %v2139 = vpop.f32.mrb[0].mxu0
    %v2140 = vpop.f32.mrb[0].mxu0
    %v2141 = vadd.f32 %v296, %v2140
    %v2142 = vpop.f32.mrb[0].mxu0
    %2143 = vmatprep.mubr.bf16.mxu0 0
    %2144 = vmatmul.mubr.bf16.gmra.mrb[0].mxu0 %v1243
    %v2145 = vpop.f32.mrb[0].mxu0
    %v2146 = vadd.f32 %v296, %v2145
    %v2147 = vpop.f32.mrb[0].mxu0
    %v2148 = vpop.f32.mrb[0].mxu0
    %v2149 = vadd.f32 %v296, %v2148
    %v2150 = vpop.f32.mrb[0].mxu0
    %2151 = vmatprep.mubr.bf16.mxu0 0
    %2152 = vmatmul.mubr.bf16.gmra.mrb[0].mxu0 %v1246
    %v2153 = vpop.f32.mrb[0].mxu0
    %v2154 = vadd.f32 %v296, %v2153
    %v2155 = vpop.f32.mrb[0].mxu0
    %v2156 = vpop.f32.mrb[0].mxu0
    %v2157 = vadd.f32 %v296, %v2156
    %v2158 = vpop.f32.mrb[0].mxu0
    %2159 = vmatprep.mubr.bf16.mxu0 0
    %2160 = vmatmul.mubr.bf16.gmra.mrb[0].mxu0 %v1249
    %v2161 = vpop.f32.mrb[0].mxu0
    %v2162 = vadd.f32 %v296, %v2161
    %v2163 = vpop.f32.mrb[0].mxu0
    %v2164 = vpop.f32.mrb[0].mxu0
    %v2165 = vadd.f32 %v296, %v2164
    %v2166 = vpop.f32.mrb[0].mxu0
    %2167 = vmatprep.mubr.bf16.mxu0 0
    %2168 = vmatmul.mubr.bf16.gmra.mrb[0].mxu0 %v1252
    %v2169 = vpop.f32.mrb[0].mxu0
    %v2170 = vadd.f32 %v296, %v2169
    %v2171 = vpop.f32.mrb[0].mxu0
    %v2172 = vpop.f32.mrb[0].mxu0
    %v2173 = vadd.f32 %v296, %v2172
    %v2174 = vpop.f32.mrb[0].mxu0
    %2175 = vmatprep.mubr.bf16.mxu0 0
    %2176 = vmatmul.mubr.bf16.gmra.mrb[0].mxu0 %v1255
    %v2177 = vpop.f32.mrb[0].mxu0
    %v2178 = vadd.f32 %v296, %v2177
    %v2179 = vpop.f32.mrb[0].mxu0
    %v2180 = vpop.f32.mrb[0].mxu0
    %v2181 = vadd.f32 %v296, %v2180
    %v2182 = vpop.f32.mrb[0].mxu0
    %2183 = vmatprep.mubr.bf16.mxu0 0
    %2184 = vmatmul.mubr.bf16.gmra.mrb[0].mxu0 %v1258
    %v2185 = vpop.f32.mrb[0].mxu0
    %v2186 = vadd.f32 %v296, %v2185
    %v2187 = vpop.f32.mrb[0].mxu0
    %v2188 = vpop.f32.mrb[0].mxu0
    %v2189 = vadd.f32 %v296, %v2188
    %v2190 = vpop.f32.mrb[0].mxu0
    %2191 = vmatprep.mubr.bf16.mxu0 0
    %2192 = vmatmul.mubr.bf16.gmra.mrb[0].mxu0 %v1261
    %v2193 = vpop.f32.mrb[0].mxu0
    %v2194 = vadd.f32 %v296, %v2193
    %v2195 = vpop.f32.mrb[0].mxu0
    %v2196 = vpop.f32.mrb[0].mxu0
    %v2197 = vadd.f32 %v296, %v2196
    %v2198 = vpop.f32.mrb[0].mxu0
    %2199 = vmatprep.mubr.bf16.mxu0 0
    %2200 = vmatmul.mubr.bf16.gmra.mrb[0].mxu0 %v1264
    %v2201 = vpop.f32.mrb[0].mxu0
    %v2202 = vadd.f32 %v296, %v2201
    %v2203 = vpop.f32.mrb[0].mxu0
    %v2204 = vpop.f32.mrb[0].mxu0
    %v2205 = vadd.f32 %v296, %v2204
    %v2206 = vpop.f32.mrb[0].mxu0
    %2207 = vmatprep.mubr.bf16.mxu0 0
    %2208 = vmatmul.mubr.bf16.gmra.mrb[0].mxu0 %v1267
    %v2209 = vpop.f32.mrb[0].mxu0
    %v2210 = vadd.f32 %v296, %v2209
    %v2211 = vpop.f32.mrb[0].mxu0
    %v2212 = vpop.f32.mrb[0].mxu0
    %v2213 = vadd.f32 %v296, %v2212
    %v2214 = vpop.f32.mrb[0].mxu0
    %2215 = vmatprep.mubr.bf16.mxu0 0
    %2216 = vmatmul.mubr.bf16.gmra.mrb[0].mxu0 %v1270
    %v2217 = vpop.f32.mrb[0].mxu0
    %v2218 = vadd.f32 %v296, %v2217
    %v2219 = vpop.f32.mrb[0].mxu0
    %v2220 = vpop.f32.mrb[0].mxu0
    %v2221 = vadd.f32 %v296, %v2220
    %v2222 = vpop.f32.mrb[0].mxu0
    %2223 = vmatprep.mubr.bf16.mxu0 0
    %2224 = vmatmul.mubr.bf16.gmra.mrb[0].mxu0 %v1273
    %v2225 = vpop.f32.mrb[0].mxu0
    %v2226 = vadd.f32 %v296, %v2225
    %v2227 = vpop.f32.mrb[0].mxu0
    %v2228 = vpop.f32.mrb[0].mxu0
    %v2229 = vadd.f32 %v296, %v2228
    %v2230 = vpop.f32.mrb[0].mxu0
    %2231 = vmatprep.mubr.bf16.mxu0 0
    %2232 = vmatmul.mubr.bf16.gmra.mrb[0].mxu0 %v1276
    %v2233 = vpop.f32.mrb[0].mxu0
    %v2234 = vadd.f32 %v296, %v2233
    %v2235 = vpop.f32.mrb[0].mxu0
    %v2236 = vpop.f32.mrb[0].mxu0
    %v2237 = vadd.f32 %v296, %v2236
    %v2238 = vpop.f32.mrb[0].mxu0
    %2239 = vmatprep.mubr.bf16.mxu0 0
    %2240 = vmatmul.mubr.bf16.gmra.mrb[0].mxu0 %v1279
    %v2241 = vpop.f32.mrb[0].mxu0
    %v2242 = vadd.f32 %v296, %v2241
    %v2243 = vpop.f32.mrb[0].mxu0
    %v2244 = vpop.f32.mrb[0].mxu0
    %v2245 = vadd.f32 %v296, %v2244
    %v2246 = vpop.f32.mrb[0].mxu0
    %2247 = vmatprep.mubr.bf16.mxu0 0
    %2248 = vmatmul.mubr.bf16.gmra.mrb[0].mxu0 %v1282
    %v2249 = vpop.f32.mrb[0].mxu0
    %v2250 = vadd.f32 %v296, %v2249
    %v2251 = vpop.f32.mrb[0].mxu0
    %v2252 = vpop.f32.mrb[0].mxu0
    %v2253 = vadd.f32 %v296, %v2252
    %v2254 = vpop.f32.mrb[0].mxu0
    %2255 = vmatprep.mubr.bf16.mxu0 0
    %2256 = vmatmul.mubr.bf16.gmra.mrb[0].mxu0 %v1285
    %v2257 = vpop.f32.mrb[0].mxu0
    %v2258 = vadd.f32 %v296, %v2257
    %v2259 = vpop.f32.mrb[0].mxu0
    %v2260 = vpop.f32.mrb[0].mxu0
    %v2261 = vadd.f32 %v296, %v2260
    %v2262 = vpop.f32.mrb[0].mxu0
    %2263 = vmatprep.mubr.bf16.mxu0 0
    %2264 = vmatmul.mubr.bf16.gmra.mrb[0].mxu0 %v1288
    %v2265 = vpop.f32.mrb[0].mxu0
    %v2266 = vadd.f32 %v296, %v2265
    %v2267 = vpop.f32.mrb[0].mxu0
    %v2268 = vpop.f32.mrb[0].mxu0
    %v2269 = vadd.f32 %v296, %v2268
    %v2270 = vpop.f32.mrb[0].mxu0
    %2271 = vmatprep.mubr.bf16.mxu0 0
    %2272 = vmatmul.mubr.bf16.gmra.mrb[0].mxu0 %v1291
    %v2273 = vpop.f32.mrb[0].mxu0
    %v2274 = vadd.f32 %v296, %v2273
    %v2275 = vpop.f32.mrb[0].mxu0
    %v2276 = vpop.f32.mrb[0].mxu0
    %v2277 = vadd.f32 %v296, %v2276
    %v2278 = vpop.f32.mrb[0].mxu0
    %2279 = vmatprep.mubr.bf16.mxu0 0
    %2280 = vmatmul.mubr.bf16.gmra.mrb[0].mxu0 %v1294
    %v2281 = vpop.f32.mrb[0].mxu0
    %v2282 = vadd.f32 %v296, %v2281
    %v2283 = vpop.f32.mrb[0].mxu0
    %v2284 = vpop.f32.mrb[0].mxu0
    %v2285 = vadd.f32 %v296, %v2284
    %v2286 = vpop.f32.mrb[0].mxu0
    %2287 = vmatprep.mubr.bf16.mxu0 0
    %2288 = vmatmul.mubr.bf16.gmra.mrb[0].mxu0 %v1297
    %v2289 = vpop.f32.mrb[0].mxu0
    %v2290 = vadd.f32 %v296, %v2289
    %v2291 = vpop.f32.mrb[0].mxu0
    %v2292 = vpop.f32.mrb[0].mxu0
    %v2293 = vadd.f32 %v296, %v2292
    %v2294 = vpop.f32.mrb[0].mxu0
    %2295 = vmatprep.mubr.bf16.mxu0 0
    %2296 = vmatmul.mubr.bf16.gmra.mrb[0].mxu0 %v1300
    %v2297 = vpop.f32.mrb[0].mxu0
    %v2298 = vadd.f32 %v296, %v2297
    %v2299 = vpop.f32.mrb[0].mxu0
    %v2300 = vpop.f32.mrb[0].mxu0
    %v2301 = vadd.f32 %v296, %v2300
    %v2302 = vpop.f32.mrb[0].mxu0
    %2303 = vmatprep.mubr.bf16.mxu0 0
    %2304 = vmatmul.mubr.bf16.gmra.mrb[0].mxu0 %v1303
    %v2305 = vpop.f32.mrb[0].mxu0
    %v2306 = vadd.f32 %v296, %v2305
    %v2307 = vpop.f32.mrb[0].mxu0
    %v2308 = vpop.f32.mrb[0].mxu0
    %v2309 = vadd.f32 %v296, %v2308
    %v2310 = vpop.f32.mrb[0].mxu0
    %2311 = vmatprep.mubr.bf16.mxu0 0
    %2312 = vmatmul.mubr.bf16.gmra.mrb[0].mxu0 %v1306
    %v2313 = vpop.f32.mrb[0].mxu0
    %v2314 = vadd.f32 %v296, %v2313
    %v2315 = vpop.f32.mrb[0].mxu0
    %v2316 = vpop.f32.mrb[0].mxu0
    %v2317 = vadd.f32 %v296, %v2316
    %v2318 = vpop.f32.mrb[0].mxu0
    %2319 = vmatprep.mubr.bf16.mxu0 0
    %2320 = vmatmul.mubr.bf16.gmra.mrb[0].mxu0 %v1309
    %v2321 = vpop.f32.mrb[0].mxu0
    %v2322 = vadd.f32 %v296, %v2321
    %v2323 = vpop.f32.mrb[0].mxu0
    %v2324 = vpop.f32.mrb[0].mxu0
    %v2325 = vadd.f32 %v296, %v2324
    %v2326 = vpop.f32.mrb[0].mxu0
    %2327 = vmatprep.mubr.bf16.mxu0 0
    %2328 = vmatmul.mubr.bf16.gmra.mrb[0].mxu0 %v1312
    %v2329 = vpop.f32.mrb[0].mxu0
    %v2330 = vadd.f32 %v296, %v2329
    %v2331 = vpop.f32.mrb[0].mxu0
    %v2332 = vpop.f32.mrb[0].mxu0
    %v2333 = vadd.f32 %v296, %v2332
    %v2334 = vpop.f32.mrb[0].mxu0
    %2335 = vmatprep.mubr.bf16.mxu0 0
    %2336 = vmatmul.mubr.bf16.gmra.mrb[0].mxu0 %v1315
    %v2337 = vpop.f32.mrb[0].mxu0
    %v2338 = vadd.f32 %v296, %v2337
    %v2339 = vpop.f32.mrb[0].mxu0
    %v2340 = vpop.f32.mrb[0].mxu0
    %v2341 = vadd.f32 %v296, %v2340
    %v2342 = vpop.f32.mrb[0].mxu0
    %2343 = vmatprep.mubr.bf16.mxu0 0
    %2344 = vmatmul.mubr.bf16.gmra.mrb[0].mxu0 %v1318
    %v2345 = vpop.f32.mrb[0].mxu0
    %v2346 = vadd.f32 %v296, %v2345
    %v2347 = vpop.f32.mrb[0].mxu0
    %v2348 = vpop.f32.mrb[0].mxu0
    %v2349 = vadd.f32 %v296, %v2348
    %v2350 = vpop.f32.mrb[0].mxu0
    %2351 = vmatprep.mubr.bf16.mxu0 0
    %2352 = vmatmul.mubr.bf16.gmra.mrb[0].mxu0 %v1321
    %v2353 = vpop.f32.mrb[0].mxu0
    %v2354 = vadd.f32 %v296, %v2353
    %v2355 = vpop.f32.mrb[0].mxu0
    %v2356 = vpop.f32.mrb[0].mxu0
    %v2357 = vadd.f32 %v296, %v2356
    %v2358 = vpop.f32.mrb[0].mxu0
    %2359 = vmatprep.mubr.bf16.mxu0 0
    %2360 = vmatmul.mubr.bf16.gmra.mrb[0].mxu0 %v1324
    %v2361 = vpop.f32.mrb[0].mxu0
    %v2362 = vadd.f32 %v296, %v2361
    %v2363 = vpop.f32.mrb[0].mxu0
    %v2364 = vpop.f32.mrb[0].mxu0
    %v2365 = vadd.f32 %v296, %v2364
    %v2366 = vpop.f32.mrb[0].mxu0
    %2367 = vmatprep.mubr.bf16.mxu0 0
    %2368 = vmatmul.mubr.bf16.gmra.mrb[0].mxu0 %v1327
    %v2369 = vpop.f32.mrb[0].mxu0
    %v2370 = vadd.f32 %v296, %v2369
    %v2371 = vpop.f32.mrb[0].mxu0
    %v2372 = vpop.f32.mrb[0].mxu0
    %v2373 = vadd.f32 %v296, %v2372
    %v2374 = vpop.f32.mrb[0].mxu0
    %2375 = vmatprep.mubr.bf16.mxu0 0
    %2376 = vmatmul.mubr.bf16.gmra.mrb[0].mxu0 %v1330
    %v2377 = vpop.f32.mrb[0].mxu0
    %v2378 = vadd.f32 %v296, %v2377
    %v2379 = vpop.f32.mrb[0].mxu0
    %v2380 = vpop.f32.mrb[0].mxu0
    %v2381 = vadd.f32 %v296, %v2380
    %v2382 = vpop.f32.mrb[0].mxu0
    %2383 = vmatprep.mubr.bf16.mxu0 0
    %2384 = vmatmul.mubr.bf16.gmra.mrb[0].mxu0 %v1333
    %v2385 = vpop.f32.mrb[0].mxu0
    %v2386 = vadd.f32 %v296, %v2385
    %v2387 = vpop.f32.mrb[0].mxu0
    %v2388 = vpop.f32.mrb[0].mxu0
    %v2389 = vadd.f32 %v296, %v2388
    %v2390 = vpop.f32.mrb[0].mxu0
    %2391 = vdwg.mxu0
    %v2392 = vmax.f32 %v1370, 0.0
    %v2393 = vmax.f32 %v1373, 0.0
    %v2394 = vmax.f32 %v1378, 0.0
    %v2395 = vmax.f32 %v1381, 0.0
    %v2396 = vmax.f32 %v1386, 0.0
    %v2397 = vmax.f32 %v1389, 0.0
    %v2398 = vmax.f32 %v1394, 0.0
    %v2399 = vmax.f32 %v1397, 0.0
    %v2400 = vmax.f32 %v1402, 0.0
    %v2401 = vmax.f32 %v1405, 0.0
    %v2402 = vmax.f32 %v1410, 0.0
    %v2403 = vmax.f32 %v1413, 0.0
    %v2404 = vmax.f32 %v1418, 0.0
    %v2405 = vmax.f32 %v1421, 0.0
    %v2406 = vmax.f32 %v1426, 0.0
    %v2407 = vmax.f32 %v1429, 0.0
    %v2408 = vmax.f32 %v1434, 0.0
    %v2409 = vmax.f32 %v1437, 0.0
    %v2410 = vmax.f32 %v1442, 0.0
    %v2411 = vmax.f32 %v1445, 0.0
    %v2412 = vmax.f32 %v1450, 0.0
    %v2413 = vmax.f32 %v1453, 0.0
    %v2414 = vmax.f32 %v1458, 0.0
    %v2415 = vmax.f32 %v1461, 0.0
    %v2416 = vmax.f32 %v1466, 0.0
    %v2417 = vmax.f32 %v1469, 0.0
    %v2418 = vmax.f32 %v1474, 0.0
    %v2419 = vmax.f32 %v1477, 0.0
    %v2420 = vmax.f32 %v1482, 0.0
    %v2421 = vmax.f32 %v1485, 0.0
    %v2422 = vmax.f32 %v1490, 0.0
    %v2423 = vmax.f32 %v1493, 0.0
    %v2424 = vmax.f32 %v1498, 0.0
    %v2425 = vmax.f32 %v1501, 0.0
    %v2426 = vmax.f32 %v1506, 0.0
    %v2427 = vmax.f32 %v1509, 0.0
    %v2428 = vmax.f32 %v1514, 0.0
    %v2429 = vmax.f32 %v1517, 0.0
    %v2430 = vmax.f32 %v1522, 0.0
    %v2431 = vmax.f32 %v1525, 0.0
    %v2432 = vmax.f32 %v1530, 0.0
    %v2433 = vmax.f32 %v1533, 0.0
    %v2434 = vmax.f32 %v1538, 0.0
    %v2435 = vmax.f32 %v1541, 0.0
    %v2436 = vmax.f32 %v1546, 0.0
    %v2437 = vmax.f32 %v1549, 0.0
    %v2438 = vmax.f32 %v1554, 0.0
    %v2439 = vmax.f32 %v1557, 0.0
    %v2440 = vmax.f32 %v1562, 0.0
    %v2441 = vmax.f32 %v1565, 0.0
    %v2442 = vmax.f32 %v1570, 0.0
    %v2443 = vmax.f32 %v1573, 0.0
    %v2444 = vmax.f32 %v1578, 0.0
    %v2445 = vmax.f32 %v1581, 0.0
    %v2446 = vmax.f32 %v1586, 0.0
    %v2447 = vmax.f32 %v1589, 0.0
    %v2448 = vmax.f32 %v1594, 0.0
    %v2449 = vmax.f32 %v1597, 0.0
    %v2450 = vmax.f32 %v1602, 0.0
    %v2451 = vmax.f32 %v1605, 0.0
    %v2452 = vmax.f32 %v1610, 0.0
    %v2453 = vmax.f32 %v1613, 0.0
    %v2454 = vmax.f32 %v1618, 0.0
    %v2455 = vmax.f32 %v1621, 0.0
    %v2456 = vmax.f32 %v1626, 0.0
    %v2457 = vmax.f32 %v1629, 0.0
    %v2458 = vmax.f32 %v1634, 0.0
    %v2459 = vmax.f32 %v1637, 0.0
    %v2460 = vmax.f32 %v1642, 0.0
    %v2461 = vmax.f32 %v1645, 0.0
    %v2462 = vmax.f32 %v1650, 0.0
    %v2463 = vmax.f32 %v1653, 0.0
    %v2464 = vmax.f32 %v1658, 0.0
    %v2465 = vmax.f32 %v1661, 0.0
    %v2466 = vmax.f32 %v1666, 0.0
    %v2467 = vmax.f32 %v1669, 0.0
    %v2468 = vmax.f32 %v1674, 0.0
    %v2469 = vmax.f32 %v1677, 0.0
    %v2470 = vmax.f32 %v1682, 0.0
    %v2471 = vmax.f32 %v1685, 0.0
    %v2472 = vmax.f32 %v1690, 0.0
    %v2473 = vmax.f32 %v1693, 0.0
    %v2474 = vmax.f32 %v1698, 0.0
    %v2475 = vmax.f32 %v1701, 0.0
    %v2476 = vmax.f32 %v1706, 0.0
    %v2477 = vmax.f32 %v1709, 0.0
    %v2478 = vmax.f32 %v1714, 0.0
    %v2479 = vmax.f32 %v1717, 0.0
    %v2480 = vmax.f32 %v1722, 0.0
    %v2481 = vmax.f32 %v1725, 0.0
    %v2482 = vmax.f32 %v1730, 0.0
    %v2483 = vmax.f32 %v1733, 0.0
    %v2484 = vmax.f32 %v1738, 0.0
    %v2485 = vmax.f32 %v1741, 0.0
    %v2486 = vmax.f32 %v1746, 0.0
    %v2487 = vmax.f32 %v1749, 0.0
    %v2488 = vmax.f32 %v1754, 0.0
    %v2489 = vmax.f32 %v1757, 0.0
    %v2490 = vmax.f32 %v1762, 0.0
    %v2491 = vmax.f32 %v1765, 0.0
    %v2492 = vmax.f32 %v1770, 0.0
    %v2493 = vmax.f32 %v1773, 0.0
    %v2494 = vmax.f32 %v1778, 0.0
    %v2495 = vmax.f32 %v1781, 0.0
    %v2496 = vmax.f32 %v1786, 0.0
    %v2497 = vmax.f32 %v1789, 0.0
    %v2498 = vmax.f32 %v1794, 0.0
    %v2499 = vmax.f32 %v1797, 0.0
    %v2500 = vmax.f32 %v1802, 0.0
    %v2501 = vmax.f32 %v1805, 0.0
    %v2502 = vmax.f32 %v1810, 0.0
    %v2503 = vmax.f32 %v1813, 0.0
    %v2504 = vmax.f32 %v1818, 0.0
    %v2505 = vmax.f32 %v1821, 0.0
    %v2506 = vmax.f32 %v1826, 0.0
    %v2507 = vmax.f32 %v1829, 0.0
    %v2508 = vmax.f32 %v1834, 0.0
    %v2509 = vmax.f32 %v1837, 0.0
    %v2510 = vmax.f32 %v1842, 0.0
    %v2511 = vmax.f32 %v1845, 0.0
    %v2512 = vmax.f32 %v1850, 0.0
    %v2513 = vmax.f32 %v1853, 0.0
    %v2514 = vmax.f32 %v1858, 0.0
    %v2515 = vmax.f32 %v1861, 0.0
    %v2516 = vmax.f32 %v1866, 0.0
    %v2517 = vmax.f32 %v1869, 0.0
    %v2518 = vmax.f32 %v1874, 0.0
    %v2519 = vmax.f32 %v1877, 0.0
    %v2520 = vmax.f32 %v1882, 0.0
    %v2521 = vmax.f32 %v1885, 0.0
    %v2522 = vmax.f32 %v1890, 0.0
    %v2523 = vmax.f32 %v1893, 0.0
    %v2524 = vmax.f32 %v1898, 0.0
    %v2525 = vmax.f32 %v1901, 0.0
    %v2526 = vmax.f32 %v1906, 0.0
    %v2527 = vmax.f32 %v1909, 0.0
    %v2528 = vmax.f32 %v1914, 0.0
    %v2529 = vmax.f32 %v1917, 0.0
    %v2530 = vmax.f32 %v1922, 0.0
    %v2531 = vmax.f32 %v1925, 0.0
    %v2532 = vmax.f32 %v1930, 0.0
    %v2533 = vmax.f32 %v1933, 0.0
    %v2534 = vmax.f32 %v1938, 0.0
    %v2535 = vmax.f32 %v1941, 0.0
    %v2536 = vmax.f32 %v1946, 0.0
    %v2537 = vmax.f32 %v1949, 0.0
    %v2538 = vmax.f32 %v1954, 0.0
    %v2539 = vmax.f32 %v1957, 0.0
    %v2540 = vmax.f32 %v1962, 0.0
    %v2541 = vmax.f32 %v1965, 0.0
    %v2542 = vmax.f32 %v1970, 0.0
    %v2543 = vmax.f32 %v1973, 0.0
    %v2544 = vmax.f32 %v1978, 0.0
    %v2545 = vmax.f32 %v1981, 0.0
    %v2546 = vmax.f32 %v1986, 0.0
    %v2547 = vmax.f32 %v1989, 0.0
    %v2548 = vmax.f32 %v1994, 0.0
    %v2549 = vmax.f32 %v1997, 0.0
    %v2550 = vmax.f32 %v2002, 0.0
    %v2551 = vmax.f32 %v2005, 0.0
    %v2552 = vmax.f32 %v2010, 0.0
    %v2553 = vmax.f32 %v2013, 0.0
    %v2554 = vmax.f32 %v2018, 0.0
    %v2555 = vmax.f32 %v2021, 0.0
    %v2556 = vmax.f32 %v2026, 0.0
    %v2557 = vmax.f32 %v2029, 0.0
    %v2558 = vmax.f32 %v2034, 0.0
    %v2559 = vmax.f32 %v2037, 0.0
    %v2560 = vmax.f32 %v2042, 0.0
    %v2561 = vmax.f32 %v2045, 0.0
    %v2562 = vmax.f32 %v2050, 0.0
    %v2563 = vmax.f32 %v2053, 0.0
    %v2564 = vmax.f32 %v2058, 0.0
    %v2565 = vmax.f32 %v2061, 0.0
    %v2566 = vmax.f32 %v2066, 0.0
    %v2567 = vmax.f32 %v2069, 0.0
    %v2568 = vmax.f32 %v2074, 0.0
    %v2569 = vmax.f32 %v2077, 0.0
    %v2570 = vmax.f32 %v2082, 0.0
    %v2571 = vmax.f32 %v2085, 0.0
    %v2572 = vmax.f32 %v2090, 0.0
    %v2573 = vmax.f32 %v2093, 0.0
    %v2574 = vmax.f32 %v2098, 0.0
    %v2575 = vmax.f32 %v2101, 0.0
    %v2576 = vmax.f32 %v2106, 0.0
    %v2577 = vmax.f32 %v2109, 0.0
    %v2578 = vmax.f32 %v2114, 0.0
    %v2579 = vmax.f32 %v2117, 0.0
    %v2580 = vmax.f32 %v2122, 0.0
    %v2581 = vmax.f32 %v2125, 0.0
    %v2582 = vmax.f32 %v2130, 0.0
    %v2583 = vmax.f32 %v2133, 0.0
    %v2584 = vmax.f32 %v2138, 0.0
    %v2585 = vmax.f32 %v2141, 0.0
    %v2586 = vmax.f32 %v2146, 0.0
    %v2587 = vmax.f32 %v2149, 0.0
    %v2588 = vmax.f32 %v2154, 0.0
    %v2589 = vmax.f32 %v2157, 0.0
    %v2590 = vmax.f32 %v2162, 0.0
    %v2591 = vmax.f32 %v2165, 0.0
    %v2592 = vmax.f32 %v2170, 0.0
    %v2593 = vmax.f32 %v2173, 0.0
    %v2594 = vmax.f32 %v2178, 0.0
    %v2595 = vmax.f32 %v2181, 0.0
    %v2596 = vmax.f32 %v2186, 0.0
    %v2597 = vmax.f32 %v2189, 0.0
    %v2598 = vmax.f32 %v2194, 0.0
    %v2599 = vmax.f32 %v2197, 0.0
    %v2600 = vmax.f32 %v2202, 0.0
    %v2601 = vmax.f32 %v2205, 0.0
    %v2602 = vmax.f32 %v2210, 0.0
    %v2603 = vmax.f32 %v2213, 0.0
    %v2604 = vmax.f32 %v2218, 0.0
    %v2605 = vmax.f32 %v2221, 0.0
    %v2606 = vmax.f32 %v2226, 0.0
    %v2607 = vmax.f32 %v2229, 0.0
    %v2608 = vmax.f32 %v2234, 0.0
    %v2609 = vmax.f32 %v2237, 0.0
    %v2610 = vmax.f32 %v2242, 0.0
    %v2611 = vmax.f32 %v2245, 0.0
    %v2612 = vmax.f32 %v2250, 0.0
    %v2613 = vmax.f32 %v2253, 0.0
    %v2614 = vmax.f32 %v2258, 0.0
    %v2615 = vmax.f32 %v2261, 0.0
    %v2616 = vmax.f32 %v2266, 0.0
    %v2617 = vmax.f32 %v2269, 0.0
    %v2618 = vmax.f32 %v2274, 0.0
    %v2619 = vmax.f32 %v2277, 0.0
    %v2620 = vmax.f32 %v2282, 0.0
    %v2621 = vmax.f32 %v2285, 0.0
    %v2622 = vmax.f32 %v2290, 0.0
    %v2623 = vmax.f32 %v2293, 0.0
    %v2624 = vmax.f32 %v2298, 0.0
    %v2625 = vmax.f32 %v2301, 0.0
    %v2626 = vmax.f32 %v2306, 0.0
    %v2627 = vmax.f32 %v2309, 0.0
    %v2628 = vmax.f32 %v2314, 0.0
    %v2629 = vmax.f32 %v2317, 0.0
    %v2630 = vmax.f32 %v2322, 0.0
    %v2631 = vmax.f32 %v2325, 0.0
    %v2632 = vmax.f32 %v2330, 0.0
    %v2633 = vmax.f32 %v2333, 0.0
    %v2634 = vmax.f32 %v2338, 0.0
    %v2635 = vmax.f32 %v2341, 0.0
    %v2636 = vmax.f32 %v2346, 0.0
    %v2637 = vmax.f32 %v2349, 0.0
    %v2638 = vmax.f32 %v2354, 0.0
    %v2639 = vmax.f32 %v2357, 0.0
    %v2640 = vmax.f32 %v2362, 0.0
    %v2641 = vmax.f32 %v2365, 0.0
    %v2642 = vmax.f32 %v2370, 0.0
    %v2643 = vmax.f32 %v2373, 0.0
    %v2644 = vmax.f32 %v2378, 0.0
    %v2645 = vmax.f32 %v2381, 0.0
    %v2646 = vmax.f32 %v2386, 0.0
    %v2647 = vmax.f32 %v2389, 0.0
    %v2648 = vld [vmem:[%s3] sm:$0xff]
    %v2649 = vld [vmem:[%s3 + $0x8] sm:$0xff]
    %v2650 = vld [vmem:[%s3 + $0x10] sm:$0xff]
    %v2651 = vld [vmem:[%s3 + $0x18] sm:$0xff]
    %v2652 = vld [vmem:[%s3 + $0x20] sm:$0xff]
    %v2653 = vld [vmem:[%s3 + $0x28] sm:$0xff]
    %v2654 = vld [vmem:[%s3 + $0x30] sm:$0xff]
    %v2655 = vld [vmem:[%s3 + $0x38] sm:$0xff]
    %v2656 = vpack.c.bf16 %v2393, %v2392
    %v2657 = vpack.c.bf16 %v2395, %v2394
    %v2658 = vpack.c.bf16 %v2397, %v2396
    %v2659 = vpack.c.bf16 %v2399, %v2398
    %v2660 = vpack.c.bf16 %v2401, %v2400
    %v2661 = vpack.c.bf16 %v2403, %v2402
    %v2662 = vpack.c.bf16 %v2405, %v2404
    %v2663 = vpack.c.bf16 %v2407, %v2406
    %v2664 = vpack.c.bf16 %v2409, %v2408
    %v2665 = vpack.c.bf16 %v2411, %v2410
    %v2666 = vpack.c.bf16 %v2413, %v2412
    %v2667 = vpack.c.bf16 %v2415, %v2414
    %v2668 = vpack.c.bf16 %v2417, %v2416
    %v2669 = vpack.c.bf16 %v2419, %v2418
    %v2670 = vpack.c.bf16 %v2421, %v2420
    %v2671 = vpack.c.bf16 %v2423, %v2422
    %v2672 = vpack.c.bf16 %v2425, %v2424
    %v2673 = vpack.c.bf16 %v2427, %v2426
    %v2674 = vpack.c.bf16 %v2429, %v2428
    %v2675 = vpack.c.bf16 %v2431, %v2430
    %v2676 = vpack.c.bf16 %v2433, %v2432
    %v2677 = vpack.c.bf16 %v2435, %v2434
    %v2678 = vpack.c.bf16 %v2437, %v2436
    %v2679 = vpack.c.bf16 %v2439, %v2438
    %v2680 = vpack.c.bf16 %v2441, %v2440
    %v2681 = vpack.c.bf16 %v2443, %v2442
    %v2682 = vpack.c.bf16 %v2445, %v2444
    %v2683 = vpack.c.bf16 %v2447, %v2446
    %v2684 = vpack.c.bf16 %v2449, %v2448
    %v2685 = vpack.c.bf16 %v2451, %v2450
    %v2686 = vpack.c.bf16 %v2453, %v2452
    %v2687 = vpack.c.bf16 %v2455, %v2454
    %v2688 = vpack.c.bf16 %v2457, %v2456
    %v2689 = vpack.c.bf16 %v2459, %v2458
    %v2690 = vpack.c.bf16 %v2461, %v2460
    %v2691 = vpack.c.bf16 %v2463, %v2462
    %v2692 = vpack.c.bf16 %v2465, %v2464
    %v2693 = vpack.c.bf16 %v2467, %v2466
    %v2694 = vpack.c.bf16 %v2469, %v2468
    %v2695 = vpack.c.bf16 %v2471, %v2470
    %v2696 = vpack.c.bf16 %v2473, %v2472
    %v2697 = vpack.c.bf16 %v2475, %v2474
    %v2698 = vpack.c.bf16 %v2477, %v2476
    %v2699 = vpack.c.bf16 %v2479, %v2478
    %v2700 = vpack.c.bf16 %v2481, %v2480
    %v2701 = vpack.c.bf16 %v2483, %v2482
    %v2702 = vpack.c.bf16 %v2485, %v2484
    %v2703 = vpack.c.bf16 %v2487, %v2486
    %v2704 = vpack.c.bf16 %v2489, %v2488
    %v2705 = vpack.c.bf16 %v2491, %v2490
    %v2706 = vpack.c.bf16 %v2493, %v2492
    %v2707 = vpack.c.bf16 %v2495, %v2494
    %v2708 = vpack.c.bf16 %v2497, %v2496
    %v2709 = vpack.c.bf16 %v2499, %v2498
    %v2710 = vpack.c.bf16 %v2501, %v2500
    %v2711 = vpack.c.bf16 %v2503, %v2502
    %v2712 = vpack.c.bf16 %v2505, %v2504
    %v2713 = vpack.c.bf16 %v2507, %v2506
    %v2714 = vpack.c.bf16 %v2509, %v2508
    %v2715 = vpack.c.bf16 %v2511, %v2510
    %v2716 = vpack.c.bf16 %v2513, %v2512
    %v2717 = vpack.c.bf16 %v2515, %v2514
    %v2718 = vpack.c.bf16 %v2517, %v2516
    %v2719 = vpack.c.bf16 %v2519, %v2518
    %v2720 = vpack.c.bf16 %v2521, %v2520
    %v2721 = vpack.c.bf16 %v2523, %v2522
    %v2722 = vpack.c.bf16 %v2525, %v2524
    %v2723 = vpack.c.bf16 %v2527, %v2526
    %v2724 = vpack.c.bf16 %v2529, %v2528
    %v2725 = vpack.c.bf16 %v2531, %v2530
    %v2726 = vpack.c.bf16 %v2533, %v2532
    %v2727 = vpack.c.bf16 %v2535, %v2534
    %v2728 = vpack.c.bf16 %v2537, %v2536
    %v2729 = vpack.c.bf16 %v2539, %v2538
    %v2730 = vpack.c.bf16 %v2541, %v2540
    %v2731 = vpack.c.bf16 %v2543, %v2542
    %v2732 = vpack.c.bf16 %v2545, %v2544
    %v2733 = vpack.c.bf16 %v2547, %v2546
    %v2734 = vpack.c.bf16 %v2549, %v2548
    %v2735 = vpack.c.bf16 %v2551, %v2550
    %v2736 = vpack.c.bf16 %v2553, %v2552
    %v2737 = vpack.c.bf16 %v2555, %v2554
    %v2738 = vpack.c.bf16 %v2557, %v2556
    %v2739 = vpack.c.bf16 %v2559, %v2558
    %v2740 = vpack.c.bf16 %v2561, %v2560
    %v2741 = vpack.c.bf16 %v2563, %v2562
    %v2742 = vpack.c.bf16 %v2565, %v2564
    %v2743 = vpack.c.bf16 %v2567, %v2566
    %v2744 = vpack.c.bf16 %v2569, %v2568
    %v2745 = vpack.c.bf16 %v2571, %v2570
    %v2746 = vpack.c.bf16 %v2573, %v2572
    %v2747 = vpack.c.bf16 %v2575, %v2574
    %v2748 = vpack.c.bf16 %v2577, %v2576
    %v2749 = vpack.c.bf16 %v2579, %v2578
    %v2750 = vpack.c.bf16 %v2581, %v2580
    %v2751 = vpack.c.bf16 %v2583, %v2582
    %v2752 = vpack.c.bf16 %v2585, %v2584
    %v2753 = vpack.c.bf16 %v2587, %v2586
    %v2754 = vpack.c.bf16 %v2589, %v2588
    %v2755 = vpack.c.bf16 %v2591, %v2590
    %v2756 = vpack.c.bf16 %v2593, %v2592
    %v2757 = vpack.c.bf16 %v2595, %v2594
    %v2758 = vpack.c.bf16 %v2597, %v2596
    %v2759 = vpack.c.bf16 %v2599, %v2598
    %v2760 = vpack.c.bf16 %v2601, %v2600
    %v2761 = vpack.c.bf16 %v2603, %v2602
    %v2762 = vpack.c.bf16 %v2605, %v2604
    %v2763 = vpack.c.bf16 %v2607, %v2606
    %v2764 = vpack.c.bf16 %v2609, %v2608
    %v2765 = vpack.c.bf16 %v2611, %v2610
    %v2766 = vpack.c.bf16 %v2613, %v2612
    %v2767 = vpack.c.bf16 %v2615, %v2614
    %v2768 = vpack.c.bf16 %v2617, %v2616
    %v2769 = vpack.c.bf16 %v2619, %v2618
    %v2770 = vpack.c.bf16 %v2621, %v2620
    %v2771 = vpack.c.bf16 %v2623, %v2622
    %v2772 = vpack.c.bf16 %v2625, %v2624
    %v2773 = vpack.c.bf16 %v2627, %v2626
    %v2774 = vpack.c.bf16 %v2629, %v2628
    %v2775 = vpack.c.bf16 %v2631, %v2630
    %v2776 = vpack.c.bf16 %v2633, %v2632
    %v2777 = vpack.c.bf16 %v2635, %v2634
    %v2778 = vpack.c.bf16 %v2637, %v2636
    %v2779 = vpack.c.bf16 %v2639, %v2638
    %v2780 = vpack.c.bf16 %v2641, %v2640
    %v2781 = vpack.c.bf16 %v2643, %v2642
    %v2782 = vpack.c.bf16 %v2645, %v2644
    %v2783 = vpack.c.bf16 %v2647, %v2646
    %v2792 = vunpack.c.l.b16 %v2648
    %v2793 = vunpack.c.h.b16 %v2648
    %v2794 = vunpack.c.l.b16 %v2649
    %v2795 = vunpack.c.h.b16 %v2649
    %v2796 = vunpack.c.l.b16 %v2650
    %v2797 = vunpack.c.h.b16 %v2650
    %v2798 = vunpack.c.l.b16 %v2651
    %v2799 = vunpack.c.h.b16 %v2651
    %v2800 = vunpack.c.l.b16 %v2652
    %v2801 = vunpack.c.h.b16 %v2652
    %v2802 = vunpack.c.l.b16 %v2653
    %v2803 = vunpack.c.h.b16 %v2653
    %v2804 = vunpack.c.l.b16 %v2654
    %v2805 = vunpack.c.h.b16 %v2654
    %v2806 = vunpack.c.l.b16 %v2655
    %v2807 = vunpack.c.h.b16 %v2655
    %v2808 = vpack.c.b16 %v2792, %v2792
    %v2809 = vpack.c.b16 %v2793, %v2793
    %v2810 = vpack.c.b16 %v2794, %v2794
    %v2811 = vpack.c.b16 %v2795, %v2795
    %v2812 = vpack.c.b16 %v2796, %v2796
    %v2813 = vpack.c.b16 %v2797, %v2797
    %v2814 = vpack.c.b16 %v2798, %v2798
    %v2815 = vpack.c.b16 %v2799, %v2799
    %v2816 = vpack.c.b16 %v2800, %v2800
    %v2817 = vpack.c.b16 %v2801, %v2801
    %v2818 = vpack.c.b16 %v2802, %v2802
    %v2819 = vpack.c.b16 %v2803, %v2803
    %v2820 = vpack.c.b16 %v2804, %v2804
    %v2821 = vpack.c.b16 %v2805, %v2805
    %v2822 = vpack.c.b16 %v2806, %v2806
    %v2823 = vpack.c.b16 %v2807, %v2807
    %2840 = vmatprep.subr.bf16.mxu0 0
    %2841 = vmatpush1.bf16.msra.mxu0 %v2656
    %2842 = vmatprep.subr.bf16.mxu0 0
    %2843 = vmatpush1.bf16.msra.mxu0 %v2657
    %2844 = vmatprep.subr.bf16.mxu0 0
    %2845 = vmatpush1.bf16.msra.mxu0 %v2658
    %2846 = vmatprep.subr.bf16.mxu0 0
    %2847 = vmatpush1.bf16.msra.mxu0 %v2659
    %2848 = vmatprep.subr.bf16.mxu0 0
    %2849 = vmatpush1.bf16.msra.mxu0 %v2660
    %2850 = vmatprep.subr.bf16.mxu0 0
    %2851 = vmatpush1.bf16.msra.mxu0 %v2661
    %2852 = vmatprep.subr.bf16.mxu0 0
    %2853 = vmatpush1.bf16.msra.mxu0 %v2662
    %2854 = vmatprep.subr.bf16.mxu0 0
    %2855 = vmatpush1.bf16.msra.mxu0 %v2663
    %2856 = vmatprep.subr.bf16.mxu0 0
    %2857 = vmatpush1.bf16.msra.mxu0 %v2664
    %2858 = vmatprep.subr.bf16.mxu0 0
    %2859 = vmatpush1.bf16.msra.mxu0 %v2665
    %2860 = vmatprep.subr.bf16.mxu0 0
    %2861 = vmatpush1.bf16.msra.mxu0 %v2666
    %2862 = vmatprep.subr.bf16.mxu0 0
    %2863 = vmatpush1.bf16.msra.mxu0 %v2667
    %2864 = vmatprep.subr.bf16.mxu0 0
    %2865 = vmatpush1.bf16.msra.mxu0 %v2668
    %2866 = vmatprep.subr.bf16.mxu0 0
    %2867 = vmatpush1.bf16.msra.mxu0 %v2669
    %2868 = vmatprep.subr.bf16.mxu0 0
    %2869 = vmatpush1.bf16.msra.mxu0 %v2670
    %2870 = vmatprep.subr.bf16.mxu0 0
    %2871 = vmatpush1.bf16.msra.mxu0 %v2671
    %2872 = vmatprep.mubr.bf16.mxu0 %v2809
    %2873 = vmatmul.mubr.bf16.gmra.mrb[0].mxu0 %v2808
    %v2874 = vpop.f32.mrb[0].mxu0
    %v2875 = vadd.f32 0.0, %v2874
    %v2876 = vpop.f32.mrb[0].mxu0
    %v2877 = vpop.f32.mrb[0].mxu0
    %v2878 = vpop.f32.mrb[0].mxu0
    %2879 = vdwg.mxu0
    %2880 = vmatprep.subr.bf16.mxu0 0
    %2881 = vmatpush1.bf16.msra.mxu0 %v2672
    %2882 = vmatprep.subr.bf16.mxu0 0
    %2883 = vmatpush1.bf16.msra.mxu0 %v2673
    %2884 = vmatprep.subr.bf16.mxu0 0
    %2885 = vmatpush1.bf16.msra.mxu0 %v2674
    %2886 = vmatprep.subr.bf16.mxu0 0
    %2887 = vmatpush1.bf16.msra.mxu0 %v2675
    %2888 = vmatprep.subr.bf16.mxu0 0
    %2889 = vmatpush1.bf16.msra.mxu0 %v2676
    %2890 = vmatprep.subr.bf16.mxu0 0
    %2891 = vmatpush1.bf16.msra.mxu0 %v2677
    %2892 = vmatprep.subr.bf16.mxu0 0
    %2893 = vmatpush1.bf16.msra.mxu0 %v2678
    %2894 = vmatprep.subr.bf16.mxu0 0
    %2895 = vmatpush1.bf16.msra.mxu0 %v2679
    %2896 = vmatprep.subr.bf16.mxu0 0
    %2897 = vmatpush1.bf16.msra.mxu0 %v2680
    %2898 = vmatprep.subr.bf16.mxu0 0
    %2899 = vmatpush1.bf16.msra.mxu0 %v2681
    %2900 = vmatprep.subr.bf16.mxu0 0
    %2901 = vmatpush1.bf16.msra.mxu0 %v2682
    %2902 = vmatprep.subr.bf16.mxu0 0
    %2903 = vmatpush1.bf16.msra.mxu0 %v2683
    %2904 = vmatprep.subr.bf16.mxu0 0
    %2905 = vmatpush1.bf16.msra.mxu0 %v2684
    %2906 = vmatprep.subr.bf16.mxu0 0
    %2907 = vmatpush1.bf16.msra.mxu0 %v2685
    %2908 = vmatprep.subr.bf16.mxu0 0
    %2909 = vmatpush1.bf16.msra.mxu0 %v2686
    %2910 = vmatprep.subr.bf16.mxu0 0
    %2911 = vmatpush1.bf16.msra.mxu0 %v2687
    %2912 = vmatprep.mubr.bf16.mxu0 %v2811
    %2913 = vmatmul.mubr.bf16.gmra.mrb[0].mxu0 %v2810
    %v2914 = vpop.f32.mrb[0].mxu0
    %v2915 = vadd.f32 %v2875, %v2914
    %v2916 = vpop.f32.mrb[0].mxu0
    %v2917 = vpop.f32.mrb[0].mxu0
    %v2918 = vpop.f32.mrb[0].mxu0
    %2919 = vdwg.mxu0
    %2920 = vmatprep.subr.bf16.mxu0 0
    %2921 = vmatpush1.bf16.msra.mxu0 %v2688
    %2922 = vmatprep.subr.bf16.mxu0 0
    %2923 = vmatpush1.bf16.msra.mxu0 %v2689
    %2924 = vmatprep.subr.bf16.mxu0 0
    %2925 = vmatpush1.bf16.msra.mxu0 %v2690
    %2926 = vmatprep.subr.bf16.mxu0 0
    %2927 = vmatpush1.bf16.msra.mxu0 %v2691
    %2928 = vmatprep.subr.bf16.mxu0 0
    %2929 = vmatpush1.bf16.msra.mxu0 %v2692
    %2930 = vmatprep.subr.bf16.mxu0 0
    %2931 = vmatpush1.bf16.msra.mxu0 %v2693
    %2932 = vmatprep.subr.bf16.mxu0 0
    %2933 = vmatpush1.bf16.msra.mxu0 %v2694
    %2934 = vmatprep.subr.bf16.mxu0 0
    %2935 = vmatpush1.bf16.msra.mxu0 %v2695
    %2936 = vmatprep.subr.bf16.mxu0 0
    %2937 = vmatpush1.bf16.msra.mxu0 %v2696
    %2938 = vmatprep.subr.bf16.mxu0 0
    %2939 = vmatpush1.bf16.msra.mxu0 %v2697
    %2940 = vmatprep.subr.bf16.mxu0 0
    %2941 = vmatpush1.bf16.msra.mxu0 %v2698
    %2942 = vmatprep.subr.bf16.mxu0 0
    %2943 = vmatpush1.bf16.msra.mxu0 %v2699
    %2944 = vmatprep.subr.bf16.mxu0 0
    %2945 = vmatpush1.bf16.msra.mxu0 %v2700
    %2946 = vmatprep.subr.bf16.mxu0 0
    %2947 = vmatpush1.bf16.msra.mxu0 %v2701
    %2948 = vmatprep.subr.bf16.mxu0 0
    %2949 = vmatpush1.bf16.msra.mxu0 %v2702
    %2950 = vmatprep.subr.bf16.mxu0 0
    %2951 = vmatpush1.bf16.msra.mxu0 %v2703
    %2952 = vmatprep.mubr.bf16.mxu0 %v2813
    %2953 = vmatmul.mubr.bf16.gmra.mrb[0].mxu0 %v2812
    %v2954 = vpop.f32.mrb[0].mxu0
    %v2955 = vadd.f32 %v2915, %v2954
    %v2956 = vpop.f32.mrb[0].mxu0
    %v2957 = vpop.f32.mrb[0].mxu0
    %v2958 = vpop.f32.mrb[0].mxu0
    %2959 = vdwg.mxu0
    %2960 = vmatprep.subr.bf16.mxu0 0
    %2961 = vmatpush1.bf16.msra.mxu0 %v2704
    %2962 = vmatprep.subr.bf16.mxu0 0
    %2963 = vmatpush1.bf16.msra.mxu0 %v2705
    %2964 = vmatprep.subr.bf16.mxu0 0
    %2965 = vmatpush1.bf16.msra.mxu0 %v2706
    %2966 = vmatprep.subr.bf16.mxu0 0
    %2967 = vmatpush1.bf16.msra.mxu0 %v2707
    %2968 = vmatprep.subr.bf16.mxu0 0
    %2969 = vmatpush1.bf16.msra.mxu0 %v2708
    %2970 = vmatprep.subr.bf16.mxu0 0
    %2971 = vmatpush1.bf16.msra.mxu0 %v2709
    %2972 = vmatprep.subr.bf16.mxu0 0
    %2973 = vmatpush1.bf16.msra.mxu0 %v2710
    %2974 = vmatprep.subr.bf16.mxu0 0
    %2975 = vmatpush1.bf16.msra.mxu0 %v2711
    %2976 = vmatprep.subr.bf16.mxu0 0
    %2977 = vmatpush1.bf16.msra.mxu0 %v2712
    %2978 = vmatprep.subr.bf16.mxu0 0
    %2979 = vmatpush1.bf16.msra.mxu0 %v2713
    %2980 = vmatprep.subr.bf16.mxu0 0
    %2981 = vmatpush1.bf16.msra.mxu0 %v2714
    %2982 = vmatprep.subr.bf16.mxu0 0
    %2983 = vmatpush1.bf16.msra.mxu0 %v2715
    %2984 = vmatprep.subr.bf16.mxu0 0
    %2985 = vmatpush1.bf16.msra.mxu0 %v2716
    %2986 = vmatprep.subr.bf16.mxu0 0
    %2987 = vmatpush1.bf16.msra.mxu0 %v2717
    %2988 = vmatprep.subr.bf16.mxu0 0
    %2989 = vmatpush1.bf16.msra.mxu0 %v2718
    %2990 = vmatprep.subr.bf16.mxu0 0
    %2991 = vmatpush1.bf16.msra.mxu0 %v2719
    %2992 = vmatprep.mubr.bf16.mxu0 %v2815
    %2993 = vmatmul.mubr.bf16.gmra.mrb[0].mxu0 %v2814
    %v2994 = vpop.f32.mrb[0].mxu0
    %v2995 = vadd.f32 %v2955, %v2994
    %v2996 = vpop.f32.mrb[0].mxu0
    %v2997 = vpop.f32.mrb[0].mxu0
    %v2998 = vpop.f32.mrb[0].mxu0
    %2999 = vdwg.mxu0
    %3000 = vmatprep.subr.bf16.mxu0 0
    %3001 = vmatpush1.bf16.msra.mxu0 %v2720
    %3002 = vmatprep.subr.bf16.mxu0 0
    %3003 = vmatpush1.bf16.msra.mxu0 %v2721
    %3004 = vmatprep.subr.bf16.mxu0 0
    %3005 = vmatpush1.bf16.msra.mxu0 %v2722
    %3006 = vmatprep.subr.bf16.mxu0 0
    %3007 = vmatpush1.bf16.msra.mxu0 %v2723
    %3008 = vmatprep.subr.bf16.mxu0 0
    %3009 = vmatpush1.bf16.msra.mxu0 %v2724
    %3010 = vmatprep.subr.bf16.mxu0 0
    %3011 = vmatpush1.bf16.msra.mxu0 %v2725
    %3012 = vmatprep.subr.bf16.mxu0 0
    %3013 = vmatpush1.bf16.msra.mxu0 %v2726
    %3014 = vmatprep.subr.bf16.mxu0 0
    %3015 = vmatpush1.bf16.msra.mxu0 %v2727
    %3016 = vmatprep.subr.bf16.mxu0 0
    %3017 = vmatpush1.bf16.msra.mxu0 %v2728
    %3018 = vmatprep.subr.bf16.mxu0 0
    %3019 = vmatpush1.bf16.msra.mxu0 %v2729
    %3020 = vmatprep.subr.bf16.mxu0 0
    %3021 = vmatpush1.bf16.msra.mxu0 %v2730
    %3022 = vmatprep.subr.bf16.mxu0 0
    %3023 = vmatpush1.bf16.msra.mxu0 %v2731
    %3024 = vmatprep.subr.bf16.mxu0 0
    %3025 = vmatpush1.bf16.msra.mxu0 %v2732
    %3026 = vmatprep.subr.bf16.mxu0 0
    %3027 = vmatpush1.bf16.msra.mxu0 %v2733
    %3028 = vmatprep.subr.bf16.mxu0 0
    %3029 = vmatpush1.bf16.msra.mxu0 %v2734
    %3030 = vmatprep.subr.bf16.mxu0 0
    %3031 = vmatpush1.bf16.msra.mxu0 %v2735
    %3032 = vmatprep.mubr.bf16.mxu0 %v2817
    %3033 = vmatmul.mubr.bf16.gmra.mrb[0].mxu0 %v2816
    %v3034 = vpop.f32.mrb[0].mxu0
    %v3035 = vadd.f32 %v2995, %v3034
    %v3036 = vpop.f32.mrb[0].mxu0
    %v3037 = vpop.f32.mrb[0].mxu0
    %v3038 = vpop.f32.mrb[0].mxu0
    %3039 = vdwg.mxu0
    %3040 = vmatprep.subr.bf16.mxu0 0
    %3041 = vmatpush1.bf16.msra.mxu0 %v2736
    %3042 = vmatprep.subr.bf16.mxu0 0
    %3043 = vmatpush1.bf16.msra.mxu0 %v2737
    %3044 = vmatprep.subr.bf16.mxu0 0
    %3045 = vmatpush1.bf16.msra.mxu0 %v2738
    %3046 = vmatprep.subr.bf16.mxu0 0
    %3047 = vmatpush1.bf16.msra.mxu0 %v2739
    %3048 = vmatprep.subr.bf16.mxu0 0
    %3049 = vmatpush1.bf16.msra.mxu0 %v2740
    %3050 = vmatprep.subr.bf16.mxu0 0
    %3051 = vmatpush1.bf16.msra.mxu0 %v2741
    %3052 = vmatprep.subr.bf16.mxu0 0
    %3053 = vmatpush1.bf16.msra.mxu0 %v2742
    %3054 = vmatprep.subr.bf16.mxu0 0
    %3055 = vmatpush1.bf16.msra.mxu0 %v2743
    %3056 = vmatprep.subr.bf16.mxu0 0
    %3057 = vmatpush1.bf16.msra.mxu0 %v2744
    %3058 = vmatprep.subr.bf16.mxu0 0
    %3059 = vmatpush1.bf16.msra.mxu0 %v2745
    %3060 = vmatprep.subr.bf16.mxu0 0
    %3061 = vmatpush1.bf16.msra.mxu0 %v2746
    %3062 = vmatprep.subr.bf16.mxu0 0
    %3063 = vmatpush1.bf16.msra.mxu0 %v2747
    %3064 = vmatprep.subr.bf16.mxu0 0
    %3065 = vmatpush1.bf16.msra.mxu0 %v2748
    %3066 = vmatprep.subr.bf16.mxu0 0
    %3067 = vmatpush1.bf16.msra.mxu0 %v2749
    %3068 = vmatprep.subr.bf16.mxu0 0
    %3069 = vmatpush1.bf16.msra.mxu0 %v2750
    %3070 = vmatprep.subr.bf16.mxu0 0
    %3071 = vmatpush1.bf16.msra.mxu0 %v2751
    %3072 = vmatprep.mubr.bf16.mxu0 %v2819
    %3073 = vmatmul.mubr.bf16.gmra.mrb[0].mxu0 %v2818
    %v3074 = vpop.f32.mrb[0].mxu0
    %v3075 = vadd.f32 %v3035, %v3074
    %v3076 = vpop.f32.mrb[0].mxu0
    %v3077 = vpop.f32.mrb[0].mxu0
    %v3078 = vpop.f32.mrb[0].mxu0
    %3079 = vdwg.mxu0
    %3080 = vmatprep.subr.bf16.mxu0 0
    %3081 = vmatpush1.bf16.msra.mxu0 %v2752
    %3082 = vmatprep.subr.bf16.mxu0 0
    %3083 = vmatpush1.bf16.msra.mxu0 %v2753
    %3084 = vmatprep.subr.bf16.mxu0 0
    %3085 = vmatpush1.bf16.msra.mxu0 %v2754
    %3086 = vmatprep.subr.bf16.mxu0 0
    %3087 = vmatpush1.bf16.msra.mxu0 %v2755
    %3088 = vmatprep.subr.bf16.mxu0 0
    %3089 = vmatpush1.bf16.msra.mxu0 %v2756
    %3090 = vmatprep.subr.bf16.mxu0 0
    %3091 = vmatpush1.bf16.msra.mxu0 %v2757
    %3092 = vmatprep.subr.bf16.mxu0 0
    %3093 = vmatpush1.bf16.msra.mxu0 %v2758
    %3094 = vmatprep.subr.bf16.mxu0 0
    %3095 = vmatpush1.bf16.msra.mxu0 %v2759
    %3096 = vmatprep.subr.bf16.mxu0 0
    %3097 = vmatpush1.bf16.msra.mxu0 %v2760
    %3098 = vmatprep.subr.bf16.mxu0 0
    %3099 = vmatpush1.bf16.msra.mxu0 %v2761
    %3100 = vmatprep.subr.bf16.mxu0 0
    %3101 = vmatpush1.bf16.msra.mxu0 %v2762
    %3102 = vmatprep.subr.bf16.mxu0 0
    %3103 = vmatpush1.bf16.msra.mxu0 %v2763
    %3104 = vmatprep.subr.bf16.mxu0 0
    %3105 = vmatpush1.bf16.msra.mxu0 %v2764
    %3106 = vmatprep.subr.bf16.mxu0 0
    %3107 = vmatpush1.bf16.msra.mxu0 %v2765
    %3108 = vmatprep.subr.bf16.mxu0 0
    %3109 = vmatpush1.bf16.msra.mxu0 %v2766
    %3110 = vmatprep.subr.bf16.mxu0 0
    %3111 = vmatpush1.bf16.msra.mxu0 %v2767
    %3112 = vmatprep.mubr.bf16.mxu0 %v2821
    %3113 = vmatmul.mubr.bf16.gmra.mrb[0].mxu0 %v2820
    %v3114 = vpop.f32.mrb[0].mxu0
    %v3115 = vadd.f32 %v3075, %v3114
    %v3116 = vpop.f32.mrb[0].mxu0
    %v3117 = vpop.f32.mrb[0].mxu0
    %v3118 = vpop.f32.mrb[0].mxu0
    %3119 = vdwg.mxu0
    %3120 = vmatprep.subr.bf16.mxu0 0
    %3121 = vmatpush1.bf16.msra.mxu0 %v2768
    %3122 = vmatprep.subr.bf16.mxu0 0
    %3123 = vmatpush1.bf16.msra.mxu0 %v2769
    %3124 = vmatprep.subr.bf16.mxu0 0
    %3125 = vmatpush1.bf16.msra.mxu0 %v2770
    %3126 = vmatprep.subr.bf16.mxu0 0
    %3127 = vmatpush1.bf16.msra.mxu0 %v2771
    %3128 = vmatprep.subr.bf16.mxu0 0
    %3129 = vmatpush1.bf16.msra.mxu0 %v2772
    %3130 = vmatprep.subr.bf16.mxu0 0
    %3131 = vmatpush1.bf16.msra.mxu0 %v2773
    %3132 = vmatprep.subr.bf16.mxu0 0
    %3133 = vmatpush1.bf16.msra.mxu0 %v2774
    %3134 = vmatprep.subr.bf16.mxu0 0
    %3135 = vmatpush1.bf16.msra.mxu0 %v2775
    %3136 = vmatprep.subr.bf16.mxu0 0
    %3137 = vmatpush1.bf16.msra.mxu0 %v2776
    %3138 = vmatprep.subr.bf16.mxu0 0
    %3139 = vmatpush1.bf16.msra.mxu0 %v2777
    %3140 = vmatprep.subr.bf16.mxu0 0
    %3141 = vmatpush1.bf16.msra.mxu0 %v2778
    %3142 = vmatprep.subr.bf16.mxu0 0
    %3143 = vmatpush1.bf16.msra.mxu0 %v2779
    %3144 = vmatprep.subr.bf16.mxu0 0
    %3145 = vmatpush1.bf16.msra.mxu0 %v2780
    %3146 = vmatprep.subr.bf16.mxu0 0
    %3147 = vmatpush1.bf16.msra.mxu0 %v2781
    %3148 = vmatprep.subr.bf16.mxu0 0
    %3149 = vmatpush1.bf16.msra.mxu0 %v2782
    %3150 = vmatprep.subr.bf16.mxu0 0
    %3151 = vmatpush1.bf16.msra.mxu0 %v2783
    %3152 = vmatprep.mubr.bf16.mxu0 %v2823
    %3153 = vmatmul.mubr.bf16.gmra.mrb[0].mxu0 %v2822
    %v3154 = vpop.f32.mrb[0].mxu0
    %v3155 = vadd.f32 %v3115, %v3154
    %v3156 = vpop.f32.mrb[0].mxu0
    %v3157 = vpop.f32.mrb[0].mxu0
    %v3158 = vpop.f32.mrb[0].mxu0
    %3159 = vdwg.mxu0
    %v3160 = vpack.c.bf16 %v3155, %v3155
    %v3161 = vld [vmem:[%s4] sm:$0xff]
    %v3162 = vld [vmem:[%s4 + $0x8] sm:$0xff]
    %v3163 = vld [vmem:[%s4 + $0x10] sm:$0xff]
    %v3164 = vld [vmem:[%s4 + $0x18] sm:$0xff]
    %v3165 = vld [vmem:[%s4 + $0x20] sm:$0xff]
    %v3166 = vld [vmem:[%s4 + $0x28] sm:$0xff]
    %v3167 = vld [vmem:[%s4 + $0x30] sm:$0xff]
    %v3168 = vld [vmem:[%s4 + $0x38] sm:$0xff]
    %v3169 = vld [vmem:[%s4 + $0x40] sm:$0xff]
    %v3170 = vld [vmem:[%s4 + $0x48] sm:$0xff]
    %v3171 = vld [vmem:[%s4 + $0x50] sm:$0xff]
    %v3172 = vld [vmem:[%s4 + $0x58] sm:$0xff]
    %v3173 = vld [vmem:[%s4 + $0x60] sm:$0xff]
    %v3174 = vld [vmem:[%s4 + $0x68] sm:$0xff]
    %v3175 = vld [vmem:[%s4 + $0x70] sm:$0xff]
    %v3176 = vld [vmem:[%s4 + $0x78] sm:$0xff]
    %v3177 = vld [vmem:[%s4 + $0x80] sm:$0xff]
    %v3178 = vld [vmem:[%s4 + $0x88] sm:$0xff]
    %v3179 = vld [vmem:[%s4 + $0x90] sm:$0xff]
    %v3180 = vld [vmem:[%s4 + $0x98] sm:$0xff]
    %v3181 = vld [vmem:[%s4 + $0xa0] sm:$0xff]
    %v3182 = vld [vmem:[%s4 + $0xa8] sm:$0xff]
    %v3183 = vld [vmem:[%s4 + $0xb0] sm:$0xff]
    %v3184 = vld [vmem:[%s4 + $0xb8] sm:$0xff]
    %v3185 = vld [vmem:[%s5] sm:$0xff]
    %v3186 = vld [vmem:[%s5 + $0x8] sm:$0xf]
    %v3189 = vlaneseq
    %v3190 = vshrl.u32 %v3189, 7
    %v3191 = vsub.s32 0, %v3190
    %v3192 = vrot.slane %v3185, %v3191
    %v3193 = vlaneseq
    %v3194 = vshrl.u32 %v3193, 7
    %v3195 = vsub.s32 1, %v3194
    %v3196 = vrot.slane %v3185, %v3195
    %v3197 = vlaneseq
    %v3198 = vshrl.u32 %v3197, 7
    %v3199 = vsub.s32 2, %v3198
    %v3200 = vrot.slane %v3185, %v3199
    %v3201 = vlaneseq
    %v3202 = vshrl.u32 %v3201, 7
    %v3203 = vsub.s32 3, %v3202
    %v3204 = vrot.slane %v3185, %v3203
    %v3205 = vlaneseq
    %v3206 = vshrl.u32 %v3205, 7
    %v3207 = vsub.s32 4, %v3206
    %v3208 = vrot.slane %v3185, %v3207
    %v3209 = vlaneseq
    %v3210 = vshrl.u32 %v3209, 7
    %v3211 = vsub.s32 5, %v3210
    %v3212 = vrot.slane %v3185, %v3211
    %v3213 = vlaneseq
    %v3214 = vshrl.u32 %v3213, 7
    %v3215 = vsub.s32 6, %v3214
    %v3216 = vrot.slane %v3185, %v3215
    %v3217 = vlaneseq
    %v3218 = vshrl.u32 %v3217, 7
    %v3219 = vsub.s32 7, %v3218
    %v3220 = vrot.slane %v3185, %v3219
    %v3221 = vlaneseq
    %v3222 = vshrl.u32 %v3221, 7
    %v3223 = vsub.s32 0, %v3222
    %v3224 = vrot.slane %v3186, %v3223
    %v3225 = vlaneseq
    %v3226 = vshrl.u32 %v3225, 7
    %v3227 = vsub.s32 1, %v3226
    %v3228 = vrot.slane %v3186, %v3227
    %v3229 = vlaneseq
    %v3230 = vshrl.u32 %v3229, 7
    %v3231 = vsub.s32 2, %v3230
    %v3232 = vrot.slane %v3186, %v3231
    %v3233 = vlaneseq
    %v3234 = vshrl.u32 %v3233, 7
    %v3235 = vsub.s32 3, %v3234
    %v3236 = vrot.slane %v3186, %v3235
    %v3273 = vunpack.c.l.b16 %v3161
    %v3274 = vunpack.c.h.b16 %v3161
    %v3275 = vunpack.c.l.b16 %v3162
    %v3276 = vunpack.c.h.b16 %v3162
    %v3277 = vunpack.c.l.b16 %v3163
    %v3278 = vunpack.c.h.b16 %v3163
    %v3279 = vunpack.c.l.b16 %v3164
    %v3280 = vunpack.c.h.b16 %v3164
    %v3281 = vunpack.c.l.b16 %v3165
    %v3282 = vunpack.c.h.b16 %v3165
    %v3283 = vunpack.c.l.b16 %v3166
    %v3284 = vunpack.c.h.b16 %v3166
    %v3285 = vunpack.c.l.b16 %v3167
    %v3286 = vunpack.c.h.b16 %v3167
    %v3287 = vunpack.c.l.b16 %v3168
    %v3288 = vunpack.c.h.b16 %v3168
    %v3289 = vunpack.c.l.b16 %v3169
    %v3290 = vunpack.c.h.b16 %v3169
    %v3291 = vunpack.c.l.b16 %v3170
    %v3292 = vunpack.c.h.b16 %v3170
    %v3293 = vunpack.c.l.b16 %v3171
    %v3294 = vunpack.c.h.b16 %v3171
    %v3295 = vunpack.c.l.b16 %v3172
    %v3296 = vunpack.c.h.b16 %v3172
    %v3297 = vunpack.c.l.b16 %v3173
    %v3298 = vunpack.c.h.b16 %v3173
    %v3299 = vunpack.c.l.b16 %v3174
    %v3300 = vunpack.c.h.b16 %v3174
    %v3301 = vunpack.c.l.b16 %v3175
    %v3302 = vunpack.c.h.b16 %v3175
    %v3303 = vunpack.c.l.b16 %v3176
    %v3304 = vunpack.c.h.b16 %v3176
    %v3305 = vunpack.c.l.b16 %v3177
    %v3306 = vunpack.c.h.b16 %v3177
    %v3307 = vunpack.c.l.b16 %v3178
    %v3308 = vunpack.c.h.b16 %v3178
    %v3309 = vunpack.c.l.b16 %v3179
    %v3310 = vunpack.c.h.b16 %v3179
    %v3311 = vunpack.c.l.b16 %v3180
    %v3312 = vunpack.c.h.b16 %v3180
    %v3313 = vunpack.c.l.b16 %v3181
    %v3314 = vunpack.c.h.b16 %v3181
    %v3315 = vunpack.c.l.b16 %v3182
    %v3316 = vunpack.c.h.b16 %v3182
    %v3317 = vunpack.c.l.b16 %v3183
    %v3318 = vunpack.c.h.b16 %v3183
    %v3319 = vunpack.c.l.b16 %v3184
    %v3320 = vunpack.c.h.b16 %v3184
    %v3321 = vpack.c.b16 %v3285, %v3273
    %v3322 = vpack.c.b16 %v3286, %v3274
    %v3323 = vpack.c.b16 %v3287, %v3275
    %v3324 = vpack.c.b16 %v3288, %v3276
    %v3325 = vpack.c.b16 %v3289, %v3277
    %v3326 = vpack.c.b16 %v3290, %v3278
    %v3327 = vpack.c.b16 %v3291, %v3279
    %v3328 = vpack.c.b16 %v3292, %v3280
    %v3329 = vpack.c.b16 %v3293, %v3281
    %v3330 = vpack.c.b16 %v3294, %v3282
    %v3331 = vpack.c.b16 %v3295, %v3283
    %v3332 = vpack.c.b16 %v3296, %v3284
    %v3333 = vpack.c.b16 %v3309, %v3297
    %v3334 = vpack.c.b16 %v3310, %v3298
    %v3335 = vpack.c.b16 %v3311, %v3299
    %v3336 = vpack.c.b16 %v3312, %v3300
    %v3337 = vpack.c.b16 %v3313, %v3301
    %v3338 = vpack.c.b16 %v3314, %v3302
    %v3339 = vpack.c.b16 %v3315, %v3303
    %v3340 = vpack.c.b16 %v3316, %v3304
    %v3341 = vpack.c.b16 %v3317, %v3305
    %v3342 = vpack.c.b16 %v3318, %v3306
    %v3343 = vpack.c.b16 %v3319, %v3307
    %v3344 = vpack.c.b16 %v3320, %v3308
    %v3370 = vsel %vm950, %v3160, 0
    %3372 = vmatprep.subr.bf16.mxu0 %v3322
    %3373 = vmatpush1.bf16.msra.mxu0 %v3321
    %3374 = vmatprep.subr.bf16.mxu0 %v3334
    %3375 = vmatpush1.bf16.msra.mxu0 %v3333
    %3376 = vmatprep.subr.bf16.mxu0 0
    %3377 = vmatpush1.bf16.msra.mxu0 0
    %3378 = vmatprep.subr.bf16.mxu0 0
    %3379 = vmatpush1.bf16.msra.mxu0 0
    %3380 = vmatprep.subr.bf16.mxu0 0
    %3381 = vmatpush1.bf16.msra.mxu0 0
    %3382 = vmatprep.subr.bf16.mxu0 0
    %3383 = vmatpush1.bf16.msra.mxu0 0
    %3384 = vmatprep.subr.bf16.mxu0 0
    %3385 = vmatpush1.bf16.msra.mxu0 0
    %3386 = vmatprep.subr.bf16.mxu0 0
    %3387 = vmatpush1.bf16.msra.mxu0 0
    %3388 = vmatprep.subr.bf16.mxu0 0
    %3389 = vmatpush1.bf16.msra.mxu0 0
    %3390 = vmatprep.subr.bf16.mxu0 0
    %3391 = vmatpush1.bf16.msra.mxu0 0
    %3392 = vmatprep.subr.bf16.mxu0 0
    %3393 = vmatpush1.bf16.msra.mxu0 0
    %3394 = vmatprep.subr.bf16.mxu0 0
    %3395 = vmatpush1.bf16.msra.mxu0 0
    %3396 = vmatprep.subr.bf16.mxu0 0
    %3397 = vmatpush1.bf16.msra.mxu0 0
    %3398 = vmatprep.subr.bf16.mxu0 0
    %3399 = vmatpush1.bf16.msra.mxu0 0
    %3400 = vmatprep.subr.bf16.mxu0 0
    %3401 = vmatpush1.bf16.msra.mxu0 0
    %3402 = vmatprep.subr.bf16.mxu0 0
    %3403 = vmatpush1.bf16.msra.mxu0 0
    %3404 = vmatprep.mubr.bf16.mxu0 0
    %3405 = vmatmul.mubr.bf16.gmra.mrb[0].mxu0 %v3370
    %v3406 = vpop.f32.mrb[0].mxu0
    %v3407 = vadd.f32 %v3192, %v3406
    %v3408 = vpop.f32.mrb[0].mxu0
    %v3409 = vadd.f32 %v3196, %v3408
    %v3410 = vpop.f32.mrb[0].mxu0
    %v3411 = vpop.f32.mrb[0].mxu0
    %3412 = vdwg.mxu0
    %3413 = vmatprep.subr.bf16.mxu0 %v3324
    %3414 = vmatpush1.bf16.msra.mxu0 %v3323
    %3415 = vmatprep.subr.bf16.mxu0 %v3336
    %3416 = vmatpush1.bf16.msra.mxu0 %v3335
    %3417 = vmatprep.subr.bf16.mxu0 0
    %3418 = vmatpush1.bf16.msra.mxu0 0
    %3419 = vmatprep.subr.bf16.mxu0 0
    %3420 = vmatpush1.bf16.msra.mxu0 0
    %3421 = vmatprep.subr.bf16.mxu0 0
    %3422 = vmatpush1.bf16.msra.mxu0 0
    %3423 = vmatprep.subr.bf16.mxu0 0
    %3424 = vmatpush1.bf16.msra.mxu0 0
    %3425 = vmatprep.subr.bf16.mxu0 0
    %3426 = vmatpush1.bf16.msra.mxu0 0
    %3427 = vmatprep.subr.bf16.mxu0 0
    %3428 = vmatpush1.bf16.msra.mxu0 0
    %3429 = vmatprep.subr.bf16.mxu0 0
    %3430 = vmatpush1.bf16.msra.mxu0 0
    %3431 = vmatprep.subr.bf16.mxu0 0
    %3432 = vmatpush1.bf16.msra.mxu0 0
    %3433 = vmatprep.subr.bf16.mxu0 0
    %3434 = vmatpush1.bf16.msra.mxu0 0
    %3435 = vmatprep.subr.bf16.mxu0 0
    %3436 = vmatpush1.bf16.msra.mxu0 0
    %3437 = vmatprep.subr.bf16.mxu0 0
    %3438 = vmatpush1.bf16.msra.mxu0 0
    %3439 = vmatprep.subr.bf16.mxu0 0
    %3440 = vmatpush1.bf16.msra.mxu0 0
    %3441 = vmatprep.subr.bf16.mxu0 0
    %3442 = vmatpush1.bf16.msra.mxu0 0
    %3443 = vmatprep.subr.bf16.mxu0 0
    %3444 = vmatpush1.bf16.msra.mxu0 0
    %3445 = vmatprep.mubr.bf16.mxu0 0
    %3446 = vmatmul.mubr.bf16.gmra.mrb[0].mxu0 %v3370
    %v3447 = vpop.f32.mrb[0].mxu0
    %v3448 = vadd.f32 %v3200, %v3447
    %v3449 = vpop.f32.mrb[0].mxu0
    %v3450 = vadd.f32 %v3204, %v3449
    %v3451 = vpop.f32.mrb[0].mxu0
    %v3452 = vpop.f32.mrb[0].mxu0
    %3453 = vdwg.mxu0
    %3454 = vmatprep.subr.bf16.mxu0 %v3326
    %3455 = vmatpush1.bf16.msra.mxu0 %v3325
    %3456 = vmatprep.subr.bf16.mxu0 %v3338
    %3457 = vmatpush1.bf16.msra.mxu0 %v3337
    %3458 = vmatprep.subr.bf16.mxu0 0
    %3459 = vmatpush1.bf16.msra.mxu0 0
    %3460 = vmatprep.subr.bf16.mxu0 0
    %3461 = vmatpush1.bf16.msra.mxu0 0
    %3462 = vmatprep.subr.bf16.mxu0 0
    %3463 = vmatpush1.bf16.msra.mxu0 0
    %3464 = vmatprep.subr.bf16.mxu0 0
    %3465 = vmatpush1.bf16.msra.mxu0 0
    %3466 = vmatprep.subr.bf16.mxu0 0
    %3467 = vmatpush1.bf16.msra.mxu0 0
    %3468 = vmatprep.subr.bf16.mxu0 0
    %3469 = vmatpush1.bf16.msra.mxu0 0
    %3470 = vmatprep.subr.bf16.mxu0 0
    %3471 = vmatpush1.bf16.msra.mxu0 0
    %3472 = vmatprep.subr.bf16.mxu0 0
    %3473 = vmatpush1.bf16.msra.mxu0 0
    %3474 = vmatprep.subr.bf16.mxu0 0
    %3475 = vmatpush1.bf16.msra.mxu0 0
    %3476 = vmatprep.subr.bf16.mxu0 0
    %3477 = vmatpush1.bf16.msra.mxu0 0
    %3478 = vmatprep.subr.bf16.mxu0 0
    %3479 = vmatpush1.bf16.msra.mxu0 0
    %3480 = vmatprep.subr.bf16.mxu0 0
    %3481 = vmatpush1.bf16.msra.mxu0 0
    %3482 = vmatprep.subr.bf16.mxu0 0
    %3483 = vmatpush1.bf16.msra.mxu0 0
    %3484 = vmatprep.subr.bf16.mxu0 0
    %3485 = vmatpush1.bf16.msra.mxu0 0
    %3486 = vmatprep.mubr.bf16.mxu0 0
    %3487 = vmatmul.mubr.bf16.gmra.mrb[0].mxu0 %v3370
    %v3488 = vpop.f32.mrb[0].mxu0
    %v3489 = vadd.f32 %v3208, %v3488
    %v3490 = vpop.f32.mrb[0].mxu0
    %v3491 = vadd.f32 %v3212, %v3490
    %v3492 = vpop.f32.mrb[0].mxu0
    %v3493 = vpop.f32.mrb[0].mxu0
    %3494 = vdwg.mxu0
    %3495 = vmatprep.subr.bf16.mxu0 %v3328
    %3496 = vmatpush1.bf16.msra.mxu0 %v3327
    %3497 = vmatprep.subr.bf16.mxu0 %v3340
    %3498 = vmatpush1.bf16.msra.mxu0 %v3339
    %3499 = vmatprep.subr.bf16.mxu0 0
    %3500 = vmatpush1.bf16.msra.mxu0 0
    %3501 = vmatprep.subr.bf16.mxu0 0
    %3502 = vmatpush1.bf16.msra.mxu0 0
    %3503 = vmatprep.subr.bf16.mxu0 0
    %3504 = vmatpush1.bf16.msra.mxu0 0
    %3505 = vmatprep.subr.bf16.mxu0 0
    %3506 = vmatpush1.bf16.msra.mxu0 0
    %3507 = vmatprep.subr.bf16.mxu0 0
    %3508 = vmatpush1.bf16.msra.mxu0 0
    %3509 = vmatprep.subr.bf16.mxu0 0
    %3510 = vmatpush1.bf16.msra.mxu0 0
    %3511 = vmatprep.subr.bf16.mxu0 0
    %3512 = vmatpush1.bf16.msra.mxu0 0
    %3513 = vmatprep.subr.bf16.mxu0 0
    %3514 = vmatpush1.bf16.msra.mxu0 0
    %3515 = vmatprep.subr.bf16.mxu0 0
    %3516 = vmatpush1.bf16.msra.mxu0 0
    %3517 = vmatprep.subr.bf16.mxu0 0
    %3518 = vmatpush1.bf16.msra.mxu0 0
    %3519 = vmatprep.subr.bf16.mxu0 0
    %3520 = vmatpush1.bf16.msra.mxu0 0
    %3521 = vmatprep.subr.bf16.mxu0 0
    %3522 = vmatpush1.bf16.msra.mxu0 0
    %3523 = vmatprep.subr.bf16.mxu0 0
    %3524 = vmatpush1.bf16.msra.mxu0 0
    %3525 = vmatprep.subr.bf16.mxu0 0
    %3526 = vmatpush1.bf16.msra.mxu0 0
    %3527 = vmatprep.mubr.bf16.mxu0 0
    %3528 = vmatmul.mubr.bf16.gmra.mrb[0].mxu0 %v3370
    %v3529 = vpop.f32.mrb[0].mxu0
    %v3530 = vadd.f32 %v3216, %v3529
    %v3531 = vpop.f32.mrb[0].mxu0
    %v3532 = vadd.f32 %v3220, %v3531
    %v3533 = vpop.f32.mrb[0].mxu0
    %v3534 = vpop.f32.mrb[0].mxu0
    %3535 = vdwg.mxu0
    %3536 = vmatprep.subr.bf16.mxu0 %v3330
    %3537 = vmatpush1.bf16.msra.mxu0 %v3329
    %3538 = vmatprep.subr.bf16.mxu0 %v3342
    %3539 = vmatpush1.bf16.msra.mxu0 %v3341
    %3540 = vmatprep.subr.bf16.mxu0 0
    %3541 = vmatpush1.bf16.msra.mxu0 0
    %3542 = vmatprep.subr.bf16.mxu0 0
    %3543 = vmatpush1.bf16.msra.mxu0 0
    %3544 = vmatprep.subr.bf16.mxu0 0
    %3545 = vmatpush1.bf16.msra.mxu0 0
    %3546 = vmatprep.subr.bf16.mxu0 0
    %3547 = vmatpush1.bf16.msra.mxu0 0
    %3548 = vmatprep.subr.bf16.mxu0 0
    %3549 = vmatpush1.bf16.msra.mxu0 0
    %3550 = vmatprep.subr.bf16.mxu0 0
    %3551 = vmatpush1.bf16.msra.mxu0 0
    %3552 = vmatprep.subr.bf16.mxu0 0
    %3553 = vmatpush1.bf16.msra.mxu0 0
    %3554 = vmatprep.subr.bf16.mxu0 0
    %3555 = vmatpush1.bf16.msra.mxu0 0
    %3556 = vmatprep.subr.bf16.mxu0 0
    %3557 = vmatpush1.bf16.msra.mxu0 0
    %3558 = vmatprep.subr.bf16.mxu0 0
    %3559 = vmatpush1.bf16.msra.mxu0 0
    %3560 = vmatprep.subr.bf16.mxu0 0
    %3561 = vmatpush1.bf16.msra.mxu0 0
    %3562 = vmatprep.subr.bf16.mxu0 0
    %3563 = vmatpush1.bf16.msra.mxu0 0
    %3564 = vmatprep.subr.bf16.mxu0 0
    %3565 = vmatpush1.bf16.msra.mxu0 0
    %3566 = vmatprep.subr.bf16.mxu0 0
    %3567 = vmatpush1.bf16.msra.mxu0 0
    %3568 = vmatprep.mubr.bf16.mxu0 0
    %3569 = vmatmul.mubr.bf16.gmra.mrb[0].mxu0 %v3370
    %v3570 = vpop.f32.mrb[0].mxu0
    %v3571 = vadd.f32 %v3224, %v3570
    %v3572 = vpop.f32.mrb[0].mxu0
    %v3573 = vadd.f32 %v3228, %v3572
    %v3574 = vpop.f32.mrb[0].mxu0
    %v3575 = vpop.f32.mrb[0].mxu0
    %3576 = vdwg.mxu0
    %3577 = vmatprep.subr.bf16.mxu0 %v3332
    %3578 = vmatpush1.bf16.msra.mxu0 %v3331
    %3579 = vmatprep.subr.bf16.mxu0 %v3344
    %3580 = vmatpush1.bf16.msra.mxu0 %v3343
    %3581 = vmatprep.subr.bf16.mxu0 0
    %3582 = vmatpush1.bf16.msra.mxu0 0
    %3583 = vmatprep.subr.bf16.mxu0 0
    %3584 = vmatpush1.bf16.msra.mxu0 0
    %3585 = vmatprep.subr.bf16.mxu0 0
    %3586 = vmatpush1.bf16.msra.mxu0 0
    %3587 = vmatprep.subr.bf16.mxu0 0
    %3588 = vmatpush1.bf16.msra.mxu0 0
    %3589 = vmatprep.subr.bf16.mxu0 0
    %3590 = vmatpush1.bf16.msra.mxu0 0
    %3591 = vmatprep.subr.bf16.mxu0 0
    %3592 = vmatpush1.bf16.msra.mxu0 0
    %3593 = vmatprep.subr.bf16.mxu0 0
    %3594 = vmatpush1.bf16.msra.mxu0 0
    %3595 = vmatprep.subr.bf16.mxu0 0
    %3596 = vmatpush1.bf16.msra.mxu0 0
    %3597 = vmatprep.subr.bf16.mxu0 0
    %3598 = vmatpush1.bf16.msra.mxu0 0
    %3599 = vmatprep.subr.bf16.mxu0 0
    %3600 = vmatpush1.bf16.msra.mxu0 0
    %3601 = vmatprep.subr.bf16.mxu0 0
    %3602 = vmatpush1.bf16.msra.mxu0 0
    %3603 = vmatprep.subr.bf16.mxu0 0
    %3604 = vmatpush1.bf16.msra.mxu0 0
    %3605 = vmatprep.subr.bf16.mxu0 0
    %3606 = vmatpush1.bf16.msra.mxu0 0
    %3607 = vmatprep.subr.bf16.mxu0 0
    %3608 = vmatpush1.bf16.msra.mxu0 0
    %3609 = vmatprep.mubr.bf16.mxu0 0
    %3610 = vmatmul.mubr.bf16.gmra.mrb[0].mxu0 %v3370
    %v3611 = vpop.f32.mrb[0].mxu0
    %v3612 = vadd.f32 %v3232, %v3611
    %v3613 = vpop.f32.mrb[0].mxu0
    %v3614 = vadd.f32 %v3236, %v3613
    %v3615 = vpop.f32.mrb[0].mxu0
    %v3616 = vpop.f32.mrb[0].mxu0
    %3617 = vdwg.mxu0
    %v3618 = vmax.f32 %v3407, 0.0
    %v3619 = vmax.f32 %v3409, 0.0
    %v3620 = vmax.f32 %v3448, 0.0
    %v3621 = vmax.f32 %v3450, 0.0
    %v3622 = vmax.f32 %v3489, 0.0
    %v3623 = vmax.f32 %v3491, 0.0
    %v3624 = vmax.f32 %v3530, 0.0
    %v3625 = vmax.f32 %v3532, 0.0
    %v3626 = vtanh.pop %v3571
    %v3627 = vtanh.pop %v3573
    %v3628 = vxor.u32 %v3612, 2147483648
    %v3629 = vxor.u32 %v3614, 2147483648
    %v3630 = vmul.f32 %v3628, 1.442695
    %v3631 = vpow.pop %v3630
    %v3632 = vmul.f32 %v3629, 1.442695
    %v3633 = vpow.pop %v3632
    %v3634 = vadd.f32 %v3631, 1.0
    %v3635 = vadd.f32 %v3633, 1.0
    %v3636 = vrcp.pop %v3634
    %v3637 = vmul.f32 1.0, %v3636
    %v3638 = vrcp.pop %v3635
    %v3639 = vmul.f32 1.0, %v3638
    %v3640 = vmul.f32 %v3626, %v3637
    %v3641 = vmul.f32 %v3627, %v3639
    %v3642 = vpack.c.bf16 %v3618, %v3618
    %v3643 = vpack.c.bf16 %v3619, %v3619
    %v3644 = vpack.c.bf16 %v3620, %v3620
    %v3645 = vpack.c.bf16 %v3621, %v3621
    %v3646 = vpack.c.bf16 %v3622, %v3622
    %v3647 = vpack.c.bf16 %v3623, %v3623
    %v3648 = vpack.c.bf16 %v3624, %v3624
    %v3649 = vpack.c.bf16 %v3625, %v3625
    %v3650 = vpack.c.bf16 %v3640, %v3640
    %v3651 = vpack.c.bf16 %v3641, %v3641
    %v3652 = vld [vmem:[%s6] sm:$0xf]
    %v3653 = vld [vmem:[%s6 + $0x4] sm:$0xf]
    %v3654 = vld [vmem:[%s6 + $0x8] sm:$0xf]
    %v3655 = vld [vmem:[%s6 + $0xc] sm:$0xf]
    %v3656 = vld [vmem:[%s6 + $0x10] sm:$0xf]
    %v3657 = vld [vmem:[%s6 + $0x14] sm:$0xf]
    %v3658 = vld [vmem:[%s6 + $0x18] sm:$0xf]
    %v3659 = vld [vmem:[%s6 + $0x1c] sm:$0xf]
    %v3660 = vld [vmem:[%s6 + $0x20] sm:$0xf]
    %v3661 = vld [vmem:[%s6 + $0x24] sm:$0xf]
    %v3662 = vld [vmem:[%s6 + $0x28] sm:$0xf]
    %v3663 = vld [vmem:[%s6 + $0x2c] sm:$0xf]
    %v3664 = vld [vmem:[%s6 + $0x30] sm:$0xf]
    %v3665 = vld [vmem:[%s6 + $0x34] sm:$0xf]
    %v3666 = vld [vmem:[%s6 + $0x38] sm:$0xf]
    %v3667 = vld [vmem:[%s6 + $0x3c] sm:$0xf]
    %v3668 = vld [vmem:[%s6 + $0x40] sm:$0xf]
    %v3669 = vld [vmem:[%s6 + $0x44] sm:$0xf]
    %v3670 = vld [vmem:[%s6 + $0x48] sm:$0xf]
    %v3671 = vld [vmem:[%s6 + $0x4c] sm:$0xf]
    %v3672 = vld [vmem:[%s6 + $0x50] sm:$0xf]
    %v3673 = vld [vmem:[%s6 + $0x54] sm:$0xf]
    %v3674 = vld [vmem:[%s6 + $0x58] sm:$0xf]
    %v3675 = vld [vmem:[%s6 + $0x5c] sm:$0xf]
    %v3676 = vld [vmem:[%s6 + $0x60] sm:$0xf]
    %v3677 = vld [vmem:[%s6 + $0x64] sm:$0xf]
    %v3678 = vld [vmem:[%s6 + $0x68] sm:$0xf]
    %v3679 = vld [vmem:[%s6 + $0x6c] sm:$0xf]
    %v3680 = vld [vmem:[%s6 + $0x70] sm:$0xf]
    %v3681 = vld [vmem:[%s6 + $0x74] sm:$0xf]
    %v3682 = vld [vmem:[%s6 + $0x78] sm:$0xf]
    %v3683 = vld [vmem:[%s6 + $0x7c] sm:$0xf]
    %v3684 = vld [vmem:[%s6 + $0x80] sm:$0xf]
    %v3685 = vld [vmem:[%s6 + $0x84] sm:$0xf]
    %v3686 = vld [vmem:[%s6 + $0x88] sm:$0xf]
    %v3687 = vld [vmem:[%s6 + $0x8c] sm:$0xf]
    %v3688 = vld [vmem:[%s6 + $0x90] sm:$0xf]
    %v3689 = vld [vmem:[%s6 + $0x94] sm:$0xf]
    %v3690 = vld [vmem:[%s6 + $0x98] sm:$0xf]
    %v3691 = vld [vmem:[%s6 + $0x9c] sm:$0xf]
    %v3692 = vld [vmem:[%s6 + $0xa0] sm:$0xf]
    %v3693 = vld [vmem:[%s6 + $0xa4] sm:$0xf]
    %v3694 = vld [vmem:[%s6 + $0xa8] sm:$0xf]
    %v3695 = vld [vmem:[%s6 + $0xac] sm:$0xf]
    %v3696 = vld [vmem:[%s6 + $0xb0] sm:$0xf]
    %v3697 = vld [vmem:[%s6 + $0xb4] sm:$0xf]
    %v3698 = vld [vmem:[%s6 + $0xb8] sm:$0xf]
    %v3699 = vld [vmem:[%s6 + $0xbc] sm:$0xf]
    %v3700 = vld [vmem:[%s6 + $0xc0] sm:$0xf]
    %v3701 = vld [vmem:[%s6 + $0xc4] sm:$0xf]
    %v3702 = vld [vmem:[%s6 + $0xc8] sm:$0xf]
    %v3703 = vld [vmem:[%s6 + $0xcc] sm:$0xf]
    %v3704 = vld [vmem:[%s6 + $0xd0] sm:$0xf]
    %v3705 = vld [vmem:[%s6 + $0xd4] sm:$0xf]
    %v3706 = vld [vmem:[%s6 + $0xd8] sm:$0xf]
    %v3707 = vld [vmem:[%s6 + $0xdc] sm:$0xf]
    %v3708 = vld [vmem:[%s6 + $0xe0] sm:$0xf]
    %v3709 = vld [vmem:[%s6 + $0xe4] sm:$0xf]
    %v3710 = vld [vmem:[%s6 + $0xe8] sm:$0xf]
    %v3711 = vld [vmem:[%s6 + $0xec] sm:$0xf]
    %v3712 = vld [vmem:[%s6 + $0xf0] sm:$0xf]
    %v3713 = vld [vmem:[%s6 + $0xf4] sm:$0xf]
    %v3714 = vld [vmem:[%s6 + $0xf8] sm:$0xf]
    %v3715 = vld [vmem:[%s6 + $0xfc] sm:$0xf]
    %v3716 = vld [vmem:[%s6 + $0x100] sm:$0xf]
    %v3717 = vld [vmem:[%s6 + $0x104] sm:$0xf]
    %v3718 = vld [vmem:[%s6 + $0x108] sm:$0xf]
    %v3719 = vld [vmem:[%s6 + $0x10c] sm:$0xf]
    %v3720 = vld [vmem:[%s6 + $0x110] sm:$0xf]
    %v3721 = vld [vmem:[%s6 + $0x114] sm:$0xf]
    %v3722 = vld [vmem:[%s6 + $0x118] sm:$0xf]
    %v3723 = vld [vmem:[%s6 + $0x11c] sm:$0xf]
    %v3724 = vld [vmem:[%s6 + $0x120] sm:$0xf]
    %v3725 = vld [vmem:[%s6 + $0x124] sm:$0xf]
    %v3726 = vld [vmem:[%s6 + $0x128] sm:$0xf]
    %v3727 = vld [vmem:[%s6 + $0x12c] sm:$0xf]
    %v3728 = vld [vmem:[%s6 + $0x130] sm:$0xf]
    %v3729 = vld [vmem:[%s6 + $0x134] sm:$0xf]
    %v3730 = vld [vmem:[%s6 + $0x138] sm:$0xf]
    %v3731 = vld [vmem:[%s6 + $0x13c] sm:$0xf]
    %v3732 = vld [vmem:[%s6 + $0x140] sm:$0xf]
    %v3733 = vld [vmem:[%s6 + $0x144] sm:$0xf]
    %v3734 = vld [vmem:[%s6 + $0x148] sm:$0xf]
    %v3735 = vld [vmem:[%s6 + $0x14c] sm:$0xf]
    %v3736 = vld [vmem:[%s6 + $0x150] sm:$0xf]
    %v3737 = vld [vmem:[%s6 + $0x154] sm:$0xf]
    %v3738 = vld [vmem:[%s6 + $0x158] sm:$0xf]
    %v3739 = vld [vmem:[%s6 + $0x15c] sm:$0xf]
    %v3740 = vld [vmem:[%s6 + $0x160] sm:$0xf]
    %v3741 = vld [vmem:[%s6 + $0x164] sm:$0xf]
    %v3742 = vld [vmem:[%s6 + $0x168] sm:$0xf]
    %v3743 = vld [vmem:[%s6 + $0x16c] sm:$0xf]
    %v3744 = vld [vmem:[%s6 + $0x170] sm:$0xf]
    %v3745 = vld [vmem:[%s6 + $0x174] sm:$0xf]
    %v3746 = vld [vmem:[%s6 + $0x178] sm:$0xf]
    %v3747 = vld [vmem:[%s6 + $0x17c] sm:$0xf]
    %v3748 = vld [vmem:[%s6 + $0x180] sm:$0xf]
    %v3749 = vld [vmem:[%s6 + $0x184] sm:$0xf]
    %v3750 = vld [vmem:[%s6 + $0x188] sm:$0xf]
    %v3751 = vld [vmem:[%s6 + $0x18c] sm:$0xf]
    %v3752 = vld [vmem:[%s6 + $0x190] sm:$0xf]
    %v3753 = vld [vmem:[%s6 + $0x194] sm:$0xf]
    %v3754 = vld [vmem:[%s6 + $0x198] sm:$0xf]
    %v3755 = vld [vmem:[%s6 + $0x19c] sm:$0xf]
    %v3756 = vld [vmem:[%s6 + $0x1a0] sm:$0xf]
    %v3757 = vld [vmem:[%s6 + $0x1a4] sm:$0xf]
    %v3758 = vld [vmem:[%s6 + $0x1a8] sm:$0xf]
    %v3759 = vld [vmem:[%s6 + $0x1ac] sm:$0xf]
    %v3760 = vld [vmem:[%s6 + $0x1b0] sm:$0xf]
    %v3761 = vld [vmem:[%s6 + $0x1b4] sm:$0xf]
    %v3762 = vld [vmem:[%s6 + $0x1b8] sm:$0xf]
    %v3763 = vld [vmem:[%s6 + $0x1bc] sm:$0xf]
    %v3764 = vld [vmem:[%s6 + $0x1c0] sm:$0xf]
    %v3765 = vld [vmem:[%s6 + $0x1c4] sm:$0xf]
    %v3766 = vld [vmem:[%s6 + $0x1c8] sm:$0xf]
    %v3767 = vld [vmem:[%s6 + $0x1cc] sm:$0xf]
    %v3768 = vld [vmem:[%s6 + $0x1d0] sm:$0xf]
    %v3769 = vld [vmem:[%s6 + $0x1d4] sm:$0xf]
    %v3770 = vld [vmem:[%s6 + $0x1d8] sm:$0xf]
    %v3771 = vld [vmem:[%s6 + $0x1dc] sm:$0xf]
    %v3772 = vld [vmem:[%s6 + $0x1e0] sm:$0xf]
    %v3773 = vld [vmem:[%s6 + $0x1e4] sm:$0xf]
    %v3774 = vld [vmem:[%s6 + $0x1e8] sm:$0xf]
    %v3775 = vld [vmem:[%s6 + $0x1ec] sm:$0xf]
    %v3776 = vld [vmem:[%s6 + $0x1f0] sm:$0xf]
    %v3777 = vld [vmem:[%s6 + $0x1f4] sm:$0xf]
    %v3778 = vld [vmem:[%s6 + $0x1f8] sm:$0xf]
    %v3779 = vld [vmem:[%s6 + $0x1fc] sm:$0xf]
    %v3780 = vld [vmem:[%s6 + $0x200] sm:$0xf]
    %v3781 = vld [vmem:[%s6 + $0x204] sm:$0xf]
    %v3782 = vld [vmem:[%s6 + $0x208] sm:$0xf]
    %v3783 = vld [vmem:[%s6 + $0x20c] sm:$0xf]
    %v3784 = vld [vmem:[%s6 + $0x210] sm:$0xf]
    %v3785 = vld [vmem:[%s6 + $0x214] sm:$0xf]
    %v3786 = vld [vmem:[%s6 + $0x218] sm:$0xf]
    %v3787 = vld [vmem:[%s6 + $0x21c] sm:$0xf]
    %v3788 = vld [vmem:[%s6 + $0x220] sm:$0xf]
    %v3789 = vld [vmem:[%s6 + $0x224] sm:$0xf]
    %v3790 = vld [vmem:[%s6 + $0x228] sm:$0xf]
    %v3791 = vld [vmem:[%s6 + $0x22c] sm:$0xf]
    %v3792 = vld [vmem:[%s6 + $0x230] sm:$0xf]
    %v3793 = vld [vmem:[%s6 + $0x234] sm:$0xf]
    %v3794 = vld [vmem:[%s6 + $0x238] sm:$0xf]
    %v3795 = vld [vmem:[%s6 + $0x23c] sm:$0xf]
    %v3796 = vld [vmem:[%s6 + $0x240] sm:$0xf]
    %v3797 = vld [vmem:[%s6 + $0x244] sm:$0xf]
    %v3798 = vld [vmem:[%s6 + $0x248] sm:$0xf]
    %v3799 = vld [vmem:[%s6 + $0x24c] sm:$0xf]
    %v3800 = vld [vmem:[%s6 + $0x250] sm:$0xf]
    %v3801 = vld [vmem:[%s6 + $0x254] sm:$0xf]
    %v3802 = vld [vmem:[%s6 + $0x258] sm:$0xf]
    %v3803 = vld [vmem:[%s6 + $0x25c] sm:$0xf]
    %v3804 = vld [vmem:[%s6 + $0x260] sm:$0xf]
    %v3805 = vld [vmem:[%s6 + $0x264] sm:$0xf]
    %v3806 = vld [vmem:[%s6 + $0x268] sm:$0xf]
    %v3807 = vld [vmem:[%s6 + $0x26c] sm:$0xf]
    %v3808 = vld [vmem:[%s6 + $0x270] sm:$0xf]
    %v3809 = vld [vmem:[%s6 + $0x274] sm:$0xf]
    %v3810 = vld [vmem:[%s6 + $0x278] sm:$0xf]
    %v3811 = vld [vmem:[%s6 + $0x27c] sm:$0xf]
    %v3812 = vld [vmem:[%s7] sm:$0x1]
    %v3814 = vlaneseq
    %v3815 = vshrl.u32 %v3814, 7
    %v3816 = vsub.s32 0, %v3815
    %v3817 = vrot.slane %v3812, %v3816
    %v3979 = vunpack.c.l.b16 %v3652
    %v3980 = vunpack.c.l.b16 %v3653
    %v3981 = vunpack.c.l.b16 %v3654
    %v3982 = vunpack.c.l.b16 %v3655
    %v3983 = vunpack.c.l.b16 %v3656
    %v3984 = vunpack.c.l.b16 %v3657
    %v3985 = vunpack.c.l.b16 %v3658
    %v3986 = vunpack.c.l.b16 %v3659
    %v3987 = vunpack.c.l.b16 %v3660
    %v3988 = vunpack.c.l.b16 %v3661
    %v3989 = vunpack.c.l.b16 %v3662
    %v3990 = vunpack.c.l.b16 %v3663
    %v3991 = vunpack.c.l.b16 %v3664
    %v3992 = vunpack.c.l.b16 %v3665
    %v3993 = vunpack.c.l.b16 %v3666
    %v3994 = vunpack.c.l.b16 %v3667
    %v3995 = vunpack.c.l.b16 %v3668
    %v3996 = vunpack.c.l.b16 %v3669
    %v3997 = vunpack.c.l.b16 %v3670
    %v3998 = vunpack.c.l.b16 %v3671
    %v3999 = vunpack.c.l.b16 %v3672
    %v4000 = vunpack.c.l.b16 %v3673
    %v4001 = vunpack.c.l.b16 %v3674
    %v4002 = vunpack.c.l.b16 %v3675
    %v4003 = vunpack.c.l.b16 %v3676
    %v4004 = vunpack.c.l.b16 %v3677
    %v4005 = vunpack.c.l.b16 %v3678
    %v4006 = vunpack.c.l.b16 %v3679
    %v4007 = vunpack.c.l.b16 %v3680
    %v4008 = vunpack.c.l.b16 %v3681
    %v4009 = vunpack.c.l.b16 %v3682
    %v4010 = vunpack.c.l.b16 %v3683
    %v4011 = vunpack.c.l.b16 %v3684
    %v4012 = vunpack.c.l.b16 %v3685
    %v4013 = vunpack.c.l.b16 %v3686
    %v4014 = vunpack.c.l.b16 %v3687
    %v4015 = vunpack.c.l.b16 %v3688
    %v4016 = vunpack.c.l.b16 %v3689
    %v4017 = vunpack.c.l.b16 %v3690
    %v4018 = vunpack.c.l.b16 %v3691
    %v4019 = vunpack.c.l.b16 %v3692
    %v4020 = vunpack.c.l.b16 %v3693
    %v4021 = vunpack.c.l.b16 %v3694
    %v4022 = vunpack.c.l.b16 %v3695
    %v4023 = vunpack.c.l.b16 %v3696
    %v4024 = vunpack.c.l.b16 %v3697
    %v4025 = vunpack.c.l.b16 %v3698
    %v4026 = vunpack.c.l.b16 %v3699
    %v4027 = vunpack.c.l.b16 %v3700
    %v4028 = vunpack.c.l.b16 %v3701
    %v4029 = vunpack.c.l.b16 %v3702
    %v4030 = vunpack.c.l.b16 %v3703
    %v4031 = vunpack.c.l.b16 %v3704
    %v4032 = vunpack.c.l.b16 %v3705
    %v4033 = vunpack.c.l.b16 %v3706
    %v4034 = vunpack.c.l.b16 %v3707
    %v4035 = vunpack.c.l.b16 %v3708
    %v4036 = vunpack.c.l.b16 %v3709
    %v4037 = vunpack.c.l.b16 %v3710
    %v4038 = vunpack.c.l.b16 %v3711
    %v4039 = vunpack.c.l.b16 %v3712
    %v4040 = vunpack.c.l.b16 %v3713
    %v4041 = vunpack.c.l.b16 %v3714
    %v4042 = vunpack.c.l.b16 %v3715
    %v4043 = vunpack.c.l.b16 %v3716
    %v4044 = vunpack.c.l.b16 %v3717
    %v4045 = vunpack.c.l.b16 %v3718
    %v4046 = vunpack.c.l.b16 %v3719
    %v4047 = vunpack.c.l.b16 %v3720
    %v4048 = vunpack.c.l.b16 %v3721
    %v4049 = vunpack.c.l.b16 %v3722
    %v4050 = vunpack.c.l.b16 %v3723
    %v4051 = vunpack.c.l.b16 %v3724
    %v4052 = vunpack.c.l.b16 %v3725
    %v4053 = vunpack.c.l.b16 %v3726
    %v4054 = vunpack.c.l.b16 %v3727
    %v4055 = vunpack.c.l.b16 %v3728
    %v4056 = vunpack.c.l.b16 %v3729
    %v4057 = vunpack.c.l.b16 %v3730
    %v4058 = vunpack.c.l.b16 %v3731
    %v4059 = vunpack.c.l.b16 %v3732
    %v4060 = vunpack.c.l.b16 %v3733
    %v4061 = vunpack.c.l.b16 %v3734
    %v4062 = vunpack.c.l.b16 %v3735
    %v4063 = vunpack.c.l.b16 %v3736
    %v4064 = vunpack.c.l.b16 %v3737
    %v4065 = vunpack.c.l.b16 %v3738
    %v4066 = vunpack.c.l.b16 %v3739
    %v4067 = vunpack.c.l.b16 %v3740
    %v4068 = vunpack.c.l.b16 %v3741
    %v4069 = vunpack.c.l.b16 %v3742
    %v4070 = vunpack.c.l.b16 %v3743
    %v4071 = vunpack.c.l.b16 %v3744
    %v4072 = vunpack.c.l.b16 %v3745
    %v4073 = vunpack.c.l.b16 %v3746
    %v4074 = vunpack.c.l.b16 %v3747
    %v4075 = vunpack.c.l.b16 %v3748
    %v4076 = vunpack.c.l.b16 %v3749
    %v4077 = vunpack.c.l.b16 %v3750
    %v4078 = vunpack.c.l.b16 %v3751
    %v4079 = vunpack.c.l.b16 %v3752
    %v4080 = vunpack.c.l.b16 %v3753
    %v4081 = vunpack.c.l.b16 %v3754
    %v4082 = vunpack.c.l.b16 %v3755
    %v4083 = vunpack.c.l.b16 %v3756
    %v4084 = vunpack.c.l.b16 %v3757
    %v4085 = vunpack.c.l.b16 %v3758
    %v4086 = vunpack.c.l.b16 %v3759
    %v4087 = vunpack.c.l.b16 %v3760
    %v4088 = vunpack.c.l.b16 %v3761
    %v4089 = vunpack.c.l.b16 %v3762
    %v4090 = vunpack.c.l.b16 %v3763
    %v4091 = vunpack.c.l.b16 %v3764
    %v4092 = vunpack.c.l.b16 %v3765
    %v4093 = vunpack.c.l.b16 %v3766
    %v4094 = vunpack.c.l.b16 %v3767
    %v4095 = vunpack.c.l.b16 %v3768
    %v4096 = vunpack.c.l.b16 %v3769
    %v4097 = vunpack.c.l.b16 %v3770
    %v4098 = vunpack.c.l.b16 %v3771
    %v4099 = vunpack.c.l.b16 %v3772
    %v4100 = vunpack.c.l.b16 %v3773
    %v4101 = vunpack.c.l.b16 %v3774
    %v4102 = vunpack.c.l.b16 %v3775
    %v4103 = vunpack.c.l.b16 %v3776
    %v4104 = vunpack.c.l.b16 %v3777
    %v4105 = vunpack.c.l.b16 %v3778
    %v4106 = vunpack.c.l.b16 %v3779
    %v4107 = vunpack.c.l.b16 %v3780
    %v4108 = vunpack.c.l.b16 %v3781
    %v4109 = vunpack.c.l.b16 %v3782
    %v4110 = vunpack.c.l.b16 %v3783
    %v4111 = vunpack.c.l.b16 %v3784
    %v4112 = vunpack.c.l.b16 %v3785
    %v4113 = vunpack.c.l.b16 %v3786
    %v4114 = vunpack.c.l.b16 %v3787
    %v4115 = vunpack.c.l.b16 %v3788
    %v4116 = vunpack.c.l.b16 %v3789
    %v4117 = vunpack.c.l.b16 %v3790
    %v4118 = vunpack.c.l.b16 %v3791
    %v4119 = vunpack.c.l.b16 %v3792
    %v4120 = vunpack.c.l.b16 %v3793
    %v4121 = vunpack.c.l.b16 %v3794
    %v4122 = vunpack.c.l.b16 %v3795
    %v4123 = vunpack.c.l.b16 %v3796
    %v4124 = vunpack.c.l.b16 %v3797
    %v4125 = vunpack.c.l.b16 %v3798
    %v4126 = vunpack.c.l.b16 %v3799
    %v4127 = vunpack.c.l.b16 %v3800
    %v4128 = vunpack.c.l.b16 %v3801
    %v4129 = vunpack.c.l.b16 %v3802
    %v4130 = vunpack.c.l.b16 %v3803
    %v4131 = vunpack.c.l.b16 %v3804
    %v4132 = vunpack.c.l.b16 %v3805
    %v4133 = vunpack.c.l.b16 %v3806
    %v4134 = vunpack.c.l.b16 %v3807
    %v4135 = vunpack.c.l.b16 %v3808
    %v4136 = vunpack.c.l.b16 %v3809
    %v4137 = vunpack.c.l.b16 %v3810
    %v4138 = vunpack.c.l.b16 %v3811
    %v4139 = vpack.c.b16 %v3980, %v3979
    %v4140 = vpack.c.b16 %v3982, %v3981
    %v4141 = vpack.c.b16 %v3984, %v3983
    %v4142 = vpack.c.b16 %v3986, %v3985
    %v4143 = vpack.c.b16 %v3988, %v3987
    %v4144 = vpack.c.b16 %v3990, %v3989
    %v4145 = vpack.c.b16 %v3992, %v3991
    %v4146 = vpack.c.b16 %v3994, %v3993
    %v4147 = vpack.c.b16 %v3996, %v3995
    %v4148 = vpack.c.b16 %v3998, %v3997
    %v4149 = vpack.c.b16 %v4000, %v3999
    %v4150 = vpack.c.b16 %v4002, %v4001
    %v4151 = vpack.c.b16 %v4004, %v4003
    %v4152 = vpack.c.b16 %v4006, %v4005
    %v4153 = vpack.c.b16 %v4008, %v4007
    %v4154 = vpack.c.b16 %v4010, %v4009
    %v4155 = vpack.c.b16 %v4012, %v4011
    %v4156 = vpack.c.b16 %v4014, %v4013
    %v4157 = vpack.c.b16 %v4016, %v4015
    %v4158 = vpack.c.b16 %v4018, %v4017
    %v4159 = vpack.c.b16 %v4020, %v4019
    %v4160 = vpack.c.b16 %v4022, %v4021
    %v4161 = vpack.c.b16 %v4024, %v4023
    %v4162 = vpack.c.b16 %v4026, %v4025
    %v4163 = vpack.c.b16 %v4028, %v4027
    %v4164 = vpack.c.b16 %v4030, %v4029
    %v4165 = vpack.c.b16 %v4032, %v4031
    %v4166 = vpack.c.b16 %v4034, %v4033
    %v4167 = vpack.c.b16 %v4036, %v4035
    %v4168 = vpack.c.b16 %v4038, %v4037
    %v4169 = vpack.c.b16 %v4040, %v4039
    %v4170 = vpack.c.b16 %v4042, %v4041
    %v4171 = vpack.c.b16 %v4044, %v4043
    %v4172 = vpack.c.b16 %v4046, %v4045
    %v4173 = vpack.c.b16 %v4048, %v4047
    %v4174 = vpack.c.b16 %v4050, %v4049
    %v4175 = vpack.c.b16 %v4052, %v4051
    %v4176 = vpack.c.b16 %v4054, %v4053
    %v4177 = vpack.c.b16 %v4056, %v4055
    %v4178 = vpack.c.b16 %v4058, %v4057
    %v4179 = vpack.c.b16 %v4060, %v4059
    %v4180 = vpack.c.b16 %v4062, %v4061
    %v4181 = vpack.c.b16 %v4064, %v4063
    %v4182 = vpack.c.b16 %v4066, %v4065
    %v4183 = vpack.c.b16 %v4068, %v4067
    %v4184 = vpack.c.b16 %v4070, %v4069
    %v4185 = vpack.c.b16 %v4072, %v4071
    %v4186 = vpack.c.b16 %v4074, %v4073
    %v4187 = vpack.c.b16 %v4076, %v4075
    %v4188 = vpack.c.b16 %v4078, %v4077
    %v4189 = vpack.c.b16 %v4080, %v4079
    %v4190 = vpack.c.b16 %v4082, %v4081
    %v4191 = vpack.c.b16 %v4084, %v4083
    %v4192 = vpack.c.b16 %v4086, %v4085
    %v4193 = vpack.c.b16 %v4088, %v4087
    %v4194 = vpack.c.b16 %v4090, %v4089
    %v4195 = vpack.c.b16 %v4092, %v4091
    %v4196 = vpack.c.b16 %v4094, %v4093
    %v4197 = vpack.c.b16 %v4096, %v4095
    %v4198 = vpack.c.b16 %v4098, %v4097
    %v4199 = vpack.c.b16 %v4100, %v4099
    %v4200 = vpack.c.b16 %v4102, %v4101
    %v4201 = vpack.c.b16 %v4104, %v4103
    %v4202 = vpack.c.b16 %v4106, %v4105
    %v4203 = vpack.c.b16 %v4108, %v4107
    %v4204 = vpack.c.b16 %v4110, %v4109
    %v4205 = vpack.c.b16 %v4112, %v4111
    %v4206 = vpack.c.b16 %v4114, %v4113
    %v4207 = vpack.c.b16 %v4116, %v4115
    %v4208 = vpack.c.b16 %v4118, %v4117
    %v4209 = vpack.c.b16 %v4120, %v4119
    %v4210 = vpack.c.b16 %v4122, %v4121
    %v4211 = vpack.c.b16 %v4124, %v4123
    %v4212 = vpack.c.b16 %v4126, %v4125
    %v4213 = vpack.c.b16 %v4128, %v4127
    %v4214 = vpack.c.b16 %v4130, %v4129
    %v4215 = vpack.c.b16 %v4132, %v4131
    %v4216 = vpack.c.b16 %v4134, %v4133
    %v4217 = vpack.c.b16 %v4136, %v4135
    %v4218 = vpack.c.b16 %v4138, %v4137
    %4299 = vmatprep.subr.bf16.mxu0 0
    %4300 = vmatpush1.bf16.msra.mxu0 %v4139
    %4301 = vmatprep.subr.bf16.mxu0 0
    %4302 = vmatpush1.bf16.msra.mxu0 %v4140
    %4303 = vmatprep.subr.bf16.mxu0 0
    %4304 = vmatpush1.bf16.msra.mxu0 %v4141
    %4305 = vmatprep.subr.bf16.mxu0 0
    %4306 = vmatpush1.bf16.msra.mxu0 %v4142
    %4307 = vmatprep.subr.bf16.mxu0 0
    %4308 = vmatpush1.bf16.msra.mxu0 %v4143
    %4309 = vmatprep.subr.bf16.mxu0 0
    %4310 = vmatpush1.bf16.msra.mxu0 %v4144
    %4311 = vmatprep.subr.bf16.mxu0 0
    %4312 = vmatpush1.bf16.msra.mxu0 %v4145
    %4313 = vmatprep.subr.bf16.mxu0 0
    %4314 = vmatpush1.bf16.msra.mxu0 %v4146
    %4315 = vmatprep.subr.bf16.mxu0 0
    %4316 = vmatpush1.bf16.msra.mxu0 %v4147
    %4317 = vmatprep.subr.bf16.mxu0 0
    %4318 = vmatpush1.bf16.msra.mxu0 %v4148
    %4319 = vmatprep.subr.bf16.mxu0 0
    %4320 = vmatpush1.bf16.msra.mxu0 %v4149
    %4321 = vmatprep.subr.bf16.mxu0 0
    %4322 = vmatpush1.bf16.msra.mxu0 %v4150
    %4323 = vmatprep.subr.bf16.mxu0 0
    %4324 = vmatpush1.bf16.msra.mxu0 %v4151
    %4325 = vmatprep.subr.bf16.mxu0 0
    %4326 = vmatpush1.bf16.msra.mxu0 %v4152
    %4327 = vmatprep.subr.bf16.mxu0 0
    %4328 = vmatpush1.bf16.msra.mxu0 %v4153
    %4329 = vmatprep.subr.bf16.mxu0 0
    %4330 = vmatpush1.bf16.msra.mxu0 %v4154
    %4331 = vmatprep.mubr.bf16.mxu0 %v3643
    %4332 = vmatmul.mubr.bf16.gmra.mrb[0].mxu0 %v3642
    %v4333 = vpop.f32.mrb[0].mxu0
    %v4334 = vadd.f32 %v3817, %v4333
    %v4335 = vpop.f32.mrb[0].mxu0
    %v4336 = vpop.f32.mrb[0].mxu0
    %v4337 = vpop.f32.mrb[0].mxu0
    %4338 = vdwg.mxu0
    %4339 = vmatprep.subr.bf16.mxu0 0
    %4340 = vmatpush1.bf16.msra.mxu0 %v4155
    %4341 = vmatprep.subr.bf16.mxu0 0
    %4342 = vmatpush1.bf16.msra.mxu0 %v4156
    %4343 = vmatprep.subr.bf16.mxu0 0
    %4344 = vmatpush1.bf16.msra.mxu0 %v4157
    %4345 = vmatprep.subr.bf16.mxu0 0
    %4346 = vmatpush1.bf16.msra.mxu0 %v4158
    %4347 = vmatprep.subr.bf16.mxu0 0
    %4348 = vmatpush1.bf16.msra.mxu0 %v4159
    %4349 = vmatprep.subr.bf16.mxu0 0
    %4350 = vmatpush1.bf16.msra.mxu0 %v4160
    %4351 = vmatprep.subr.bf16.mxu0 0
    %4352 = vmatpush1.bf16.msra.mxu0 %v4161
    %4353 = vmatprep.subr.bf16.mxu0 0
    %4354 = vmatpush1.bf16.msra.mxu0 %v4162
    %4355 = vmatprep.subr.bf16.mxu0 0
    %4356 = vmatpush1.bf16.msra.mxu0 %v4163
    %4357 = vmatprep.subr.bf16.mxu0 0
    %4358 = vmatpush1.bf16.msra.mxu0 %v4164
    %4359 = vmatprep.subr.bf16.mxu0 0
    %4360 = vmatpush1.bf16.msra.mxu0 %v4165
    %4361 = vmatprep.subr.bf16.mxu0 0
    %4362 = vmatpush1.bf16.msra.mxu0 %v4166
    %4363 = vmatprep.subr.bf16.mxu0 0
    %4364 = vmatpush1.bf16.msra.mxu0 %v4167
    %4365 = vmatprep.subr.bf16.mxu0 0
    %4366 = vmatpush1.bf16.msra.mxu0 %v4168
    %4367 = vmatprep.subr.bf16.mxu0 0
    %4368 = vmatpush1.bf16.msra.mxu0 %v4169
    %4369 = vmatprep.subr.bf16.mxu0 0
    %4370 = vmatpush1.bf16.msra.mxu0 %v4170
    %4371 = vmatprep.mubr.bf16.mxu0 %v3645
    %4372 = vmatmul.mubr.bf16.gmra.mrb[0].mxu0 %v3644
    %v4373 = vpop.f32.mrb[0].mxu0
    %v4374 = vadd.f32 %v4334, %v4373
    %v4375 = vpop.f32.mrb[0].mxu0
    %v4376 = vpop.f32.mrb[0].mxu0
    %v4377 = vpop.f32.mrb[0].mxu0
    %4378 = vdwg.mxu0
    %4379 = vmatprep.subr.bf16.mxu0 0
    %4380 = vmatpush1.bf16.msra.mxu0 %v4171
    %4381 = vmatprep.subr.bf16.mxu0 0
    %4382 = vmatpush1.bf16.msra.mxu0 %v4172
    %4383 = vmatprep.subr.bf16.mxu0 0
    %4384 = vmatpush1.bf16.msra.mxu0 %v4173
    %4385 = vmatprep.subr.bf16.mxu0 0
    %4386 = vmatpush1.bf16.msra.mxu0 %v4174
    %4387 = vmatprep.subr.bf16.mxu0 0
    %4388 = vmatpush1.bf16.msra.mxu0 %v4175
    %4389 = vmatprep.subr.bf16.mxu0 0
    %4390 = vmatpush1.bf16.msra.mxu0 %v4176
    %4391 = vmatprep.subr.bf16.mxu0 0
    %4392 = vmatpush1.bf16.msra.mxu0 %v4177
    %4393 = vmatprep.subr.bf16.mxu0 0
    %4394 = vmatpush1.bf16.msra.mxu0 %v4178
    %4395 = vmatprep.subr.bf16.mxu0 0
    %4396 = vmatpush1.bf16.msra.mxu0 %v4179
    %4397 = vmatprep.subr.bf16.mxu0 0
    %4398 = vmatpush1.bf16.msra.mxu0 %v4180
    %4399 = vmatprep.subr.bf16.mxu0 0
    %4400 = vmatpush1.bf16.msra.mxu0 %v4181
    %4401 = vmatprep.subr.bf16.mxu0 0
    %4402 = vmatpush1.bf16.msra.mxu0 %v4182
    %4403 = vmatprep.subr.bf16.mxu0 0
    %4404 = vmatpush1.bf16.msra.mxu0 %v4183
    %4405 = vmatprep.subr.bf16.mxu0 0
    %4406 = vmatpush1.bf16.msra.mxu0 %v4184
    %4407 = vmatprep.subr.bf16.mxu0 0
    %4408 = vmatpush1.bf16.msra.mxu0 %v4185
    %4409 = vmatprep.subr.bf16.mxu0 0
    %4410 = vmatpush1.bf16.msra.mxu0 %v4186
    %4411 = vmatprep.mubr.bf16.mxu0 %v3647
    %4412 = vmatmul.mubr.bf16.gmra.mrb[0].mxu0 %v3646
    %v4413 = vpop.f32.mrb[0].mxu0
    %v4414 = vadd.f32 %v4374, %v4413
    %v4415 = vpop.f32.mrb[0].mxu0
    %v4416 = vpop.f32.mrb[0].mxu0
    %v4417 = vpop.f32.mrb[0].mxu0
    %4418 = vdwg.mxu0
    %4419 = vmatprep.subr.bf16.mxu0 0
    %4420 = vmatpush1.bf16.msra.mxu0 %v4187
    %4421 = vmatprep.subr.bf16.mxu0 0
    %4422 = vmatpush1.bf16.msra.mxu0 %v4188
    %4423 = vmatprep.subr.bf16.mxu0 0
    %4424 = vmatpush1.bf16.msra.mxu0 %v4189
    %4425 = vmatprep.subr.bf16.mxu0 0
    %4426 = vmatpush1.bf16.msra.mxu0 %v4190
    %4427 = vmatprep.subr.bf16.mxu0 0
    %4428 = vmatpush1.bf16.msra.mxu0 %v4191
    %4429 = vmatprep.subr.bf16.mxu0 0
    %4430 = vmatpush1.bf16.msra.mxu0 %v4192
    %4431 = vmatprep.subr.bf16.mxu0 0
    %4432 = vmatpush1.bf16.msra.mxu0 %v4193
    %4433 = vmatprep.subr.bf16.mxu0 0
    %4434 = vmatpush1.bf16.msra.mxu0 %v4194
    %4435 = vmatprep.subr.bf16.mxu0 0
    %4436 = vmatpush1.bf16.msra.mxu0 %v4195
    %4437 = vmatprep.subr.bf16.mxu0 0
    %4438 = vmatpush1.bf16.msra.mxu0 %v4196
    %4439 = vmatprep.subr.bf16.mxu0 0
    %4440 = vmatpush1.bf16.msra.mxu0 %v4197
    %4441 = vmatprep.subr.bf16.mxu0 0
    %4442 = vmatpush1.bf16.msra.mxu0 %v4198
    %4443 = vmatprep.subr.bf16.mxu0 0
    %4444 = vmatpush1.bf16.msra.mxu0 %v4199
    %4445 = vmatprep.subr.bf16.mxu0 0
    %4446 = vmatpush1.bf16.msra.mxu0 %v4200
    %4447 = vmatprep.subr.bf16.mxu0 0
    %4448 = vmatpush1.bf16.msra.mxu0 %v4201
    %4449 = vmatprep.subr.bf16.mxu0 0
    %4450 = vmatpush1.bf16.msra.mxu0 %v4202
    %4451 = vmatprep.mubr.bf16.mxu0 %v3649
    %4452 = vmatmul.mubr.bf16.gmra.mrb[0].mxu0 %v3648
    %v4453 = vpop.f32.mrb[0].mxu0
    %v4454 = vadd.f32 %v4414, %v4453
    %v4455 = vpop.f32.mrb[0].mxu0
    %v4456 = vpop.f32.mrb[0].mxu0
    %v4457 = vpop.f32.mrb[0].mxu0
    %4458 = vdwg.mxu0
    %4459 = vmatprep.subr.bf16.mxu0 0
    %4460 = vmatpush1.bf16.msra.mxu0 %v4203
    %4461 = vmatprep.subr.bf16.mxu0 0
    %4462 = vmatpush1.bf16.msra.mxu0 %v4204
    %4463 = vmatprep.subr.bf16.mxu0 0
    %4464 = vmatpush1.bf16.msra.mxu0 %v4205
    %4465 = vmatprep.subr.bf16.mxu0 0
    %4466 = vmatpush1.bf16.msra.mxu0 %v4206
    %4467 = vmatprep.subr.bf16.mxu0 0
    %4468 = vmatpush1.bf16.msra.mxu0 %v4207
    %4469 = vmatprep.subr.bf16.mxu0 0
    %4470 = vmatpush1.bf16.msra.mxu0 %v4208
    %4471 = vmatprep.subr.bf16.mxu0 0
    %4472 = vmatpush1.bf16.msra.mxu0 %v4209
    %4473 = vmatprep.subr.bf16.mxu0 0
    %4474 = vmatpush1.bf16.msra.mxu0 %v4210
    %4475 = vmatprep.subr.bf16.mxu0 0
    %4476 = vmatpush1.bf16.msra.mxu0 %v4211
    %4477 = vmatprep.subr.bf16.mxu0 0
    %4478 = vmatpush1.bf16.msra.mxu0 %v4212
    %4479 = vmatprep.subr.bf16.mxu0 0
    %4480 = vmatpush1.bf16.msra.mxu0 %v4213
    %4481 = vmatprep.subr.bf16.mxu0 0
    %4482 = vmatpush1.bf16.msra.mxu0 %v4214
    %4483 = vmatprep.subr.bf16.mxu0 0
    %4484 = vmatpush1.bf16.msra.mxu0 %v4215
    %4485 = vmatprep.subr.bf16.mxu0 0
    %4486 = vmatpush1.bf16.msra.mxu0 %v4216
    %4487 = vmatprep.subr.bf16.mxu0 0
    %4488 = vmatpush1.bf16.msra.mxu0 %v4217
    %4489 = vmatprep.subr.bf16.mxu0 0
    %4490 = vmatpush1.bf16.msra.mxu0 %v4218
    %4491 = vmatprep.mubr.bf16.mxu0 %v3651
    %4492 = vmatmul.mubr.bf16.gmra.mrb[0].mxu0 %v3650
    %v4493 = vpop.f32.mrb[0].mxu0
    %v4494 = vadd.f32 %v4454, %v4493
    %v4495 = vpop.f32.mrb[0].mxu0
    %v4496 = vpop.f32.mrb[0].mxu0
    %v4497 = vpop.f32.mrb[0].mxu0
    %4498 = vdwg.mxu0
    %v4499 = vlaneseq
    %v4500 = vand.u32 %v4499, 127
    %vm4501 = vcmp.eq.s32.totalorder %v4500, 0
    %vm4502 = vcmp.eq.s32.totalorder %v4500, 34
    %vm4503 = vmor %vm4501, %vm4502
    %vm4504 = vcmp.ge.s32.totalorder %v4500, 1
    %vm4505 = vcmp.lt.s32.totalorder %v4500, 33
    %vm4506 = vmand %vm4504, %vm4505
    %v4507 = vmul.f32 %v4494, %v4494
    %v4508 = vsel %vm4506, %v4507, 0.0
    %4509 = vadd.xlane.f32.xlu0 %v4508
    %v4510 = vpop.xlane.xlu0 %4509
    %v4511 = vmax.f32 %v4510, 1e-24
    %v4512 = vrsqrt.pop %v4511
    %v4513 = vxor.u32 %v4494, 2147483648
    %v4514 = vmul.f32 %v4513, 1.442695
    %v4515 = vpow.pop %v4514
    %v4516 = vadd.f32 %v4515, 1.0
    %v4517 = vrcp.pop %v4516
    %v4518 = vmul.f32 1.0, %v4517
    %v4519 = vmul.f32 %v4494, %v4512
    %v4520 = vsel %vm4506, %v4519, %v4494
    %v4521 = vsel %vm4503, %v4518, %v4520
    %4522 = vst [vmem:[#allocation2] sm:$0xff] %v4521
    // Predicated region
    $region34: #{tpu_custom_call.1} parent=1 // pred_check
      _
    $region35: #{tpu_custom_call.1} parent=1 // pred_check_branch
      %4524 = sbr.rel (0) target = $region37
    $region36: #{tpu_custom_call.1} parent=1 // pred_region
      %s4526 = ssub.s32 128, 128
      %4527 = vsyncadd [#allocation3], %s4526
      %s4529 = sshll.u32 [#allocation2], 4
      %s4530 = int_to_ptr.vmem [resolvable:$true] %s4529
      %4532 = dma.vmem_to_hbm [thread:$0]  %s4530, 128, %s8, [#allocation3]
    $region37: #{tpu_custom_call.1} parent=1 // pred_fallthru
      _
    // Predicated region
    $region38: #{tpu_custom_call.1} parent=1 // pred_check
      _
    $region39: #{tpu_custom_call.1} parent=1 // pred_check_branch
      %4534 = sbr.rel (0) target = $region41
    $region40: #{tpu_custom_call.1} parent=1 // pred_region
      %4535 = dma.done [#allocation3], 128
    $region41: #{tpu_custom_call.1} parent=1 // pred_fallthru
      _
    %4536 = vsyncpa [#allocation3], 1

</llo_original>
